<compile_context>
chip_gen: v5e
topology: v5e:2x2
jax: 0.10.0
libtpu: 0.0.40
codegen_flags: <defaults>
</compile_context>

<pallas_src>
import functools

import jax
import jax.numpy as jnp
from jax import lax
from jax.experimental import pallas as pl
from jax.experimental.pallas import tpu as pltpu

LOOK_BACK = 36          # module-level constant in the reference code
NUM_LAYERS = 1


# ----------------------------------------------------------------------------
# Pallas kernel: whole forward pass for one (sublane-padded) batch.
# ----------------------------------------------------------------------------
def bilstm_impute_kernel(
    x_ref,      # (T*Bp, D)   time-major, batch padded to a multiple of 8, flattened
    win_ref,    # (D, D)      linerinput.weight.T
    bin_ref,    # (1, D)      linerinput.bias
    wih_ref,    # (D, 8H)     [fwd | bwd] input->gate weights, gate order (i,f,o,g)
    bg_ref,     # (1, 8H)     folded (b_ih + b_hh) per direction, same gate order
    whhf_ref,   # (H, 4H)     fwd recurrent weights (gate order i,f,o,g)
    whhb_ref,   # (H, 4H)     bwd recurrent weights
    whead_ref,  # (2H, O+3)   [liner.weight.T | linertrans.weight.T]
    bhead_ref,  # (1, O+3)
    out_ref,    # (Bp, O)
    pre_ref,    # scratch (T*Bp, 8H): precomputed input-gate preactivations
    *,
    seq_len: int,
    batch_pad: int,
    look_back: int,
    hidden: int,
    out_features: int,
):
    T, Bp, H, O = seq_len, batch_pad, hidden, out_features
    f32 = jnp.float32

    # ---- fused prep: Linear -> ReLU -> both-direction input projections (2 matmuls) ----
    xr = jnp.maximum(
        jnp.dot(x_ref[...], win_ref[...], preferred_element_type=f32) + bin_ref[...],
        0.0,
    )
    pre_ref[...] = jnp.dot(xr, wih_ref[...], preferred_element_type=f32) + bg_ref[...]

    # hoist recurrent weight loads out of the (serial) recurrence
    whhf = whhf_ref[...]
    whhb = whhb_ref[...]

    def cell(pre_t, h, c, whh):
        # preactivations already hold x@W_ih + b_ih + b_hh; only recurrent part left
        pre = pre_t + jnp.dot(h, whh, preferred_element_type=f32)
        sg = jax.nn.sigmoid(pre[:, : 3 * H])       # [i | f | o] in one sigmoid
        g = jnp.tanh(pre[:, 3 * H:])
        i = sg[:, :H]
        f = sg[:, H:2 * H]
        o = sg[:, 2 * H:3 * H]
        c_new = f * c + i * g
        h_new = o * jnp.tanh(c_new)
        return h_new, c_new

    h0 = jnp.zeros((Bp, H), f32)

    # forward direction: steps 0 .. look_back (fully unrolled, static aligned slices)
    hf, cf = h0, h0
    for t in range(look_back + 1):
        pre_t = pre_ref[pl.ds(t * Bp, Bp), pl.ds(0, 4 * H)]
        hf, cf = cell(pre_t, hf, cf, whhf)

    # backward direction: steps T-1 .. look_back (fully unrolled)
    hb, cb = h0, h0
    for s in range(T - look_back):
        t = T - 1 - s
        pre_t = pre_ref[pl.ds(t * Bp, Bp), pl.ds(4 * H, 4 * H)]
        hb, cb = cell(pre_t, hb, cb, whhb)

    # ---- fused output heads: single (Bp, 2H) @ (2H, O+3) matmul ----
    lastout = jnp.concatenate([hf, hb], axis=1)                           # (Bp, 2H)
    head = jnp.dot(lastout, whead_ref[...], preferred_element_type=f32) + bhead_ref[...]
    out = head[:, :O]
    angle = head[:, O:O + 1]
    tx = head[:, O + 1:O + 2]
    ty = head[:, O + 2:O + 3]
    ca = jnp.cos(angle)
    sa = jnp.sin(angle)

    # Strided (::3) update done lane-wise with rolls + a %3 mask (no gathers).
    # Correct only because O % 3 == 0 (asserted in the wrapper): wraparound lanes
    # land on mod3==2 slots, which stay unchanged.
    out_next = jnp.roll(out, shift=-1, axis=1)   # value at j+1 (Y seen from an X slot)
    out_prev = jnp.roll(out, shift=1, axis=1)    # value at j-1 (X seen from a Y slot)
    x_upd = out + ca * (out - tx) - sa * (out_next - ty)   # valid where j % 3 == 0
    y_upd = out + sa * (out_prev - tx) + ca * (out - ty)   # valid where j % 3 == 1
    mod3 = lax.broadcasted_iota(jnp.int32, out.shape, 1) % 3
    out_ref[...] = jnp.where(mod3 == 0, x_upd, jnp.where(mod3 == 1, y_upd, out))


# ----------------------------------------------------------------------------
# Wrapper: parameter plumbing (gate permutation, weight fusion) + pallas_call
# ----------------------------------------------------------------------------
def model_forward(x, p, hidden_size):
    """x: (B, T, D) float32 (batch_first, same as the PyTorch module)."""
    B, T, D = x.shape
    H = hidden_size
    O = p["w_out"].shape[0]
    assert O % 3 == 0, "output_size must be a multiple of 3 (x,y,z triplets)"
    assert LOOK_BACK < T, "sequence length must exceed look_back"
    f32 = jnp.float32

    # pad batch to a multiple of 8 (f32 sublane tile): per-timestep slices of the
    # flattened (T*Bp, .) preactivation scratch stay sublane-aligned; padded rows
    # are sliced off at the end.
    Bp = ((B + 7) // 8) * 8
    xp = x.astype(f32)
    if Bp != B:
        xp = jnp.pad(xp, ((0, Bp - B), (0, 0), (0, 0)))
    x_flat = jnp.transpose(xp, (1, 0, 2)).reshape(T * Bp, D)       # (T*Bp, D)

    # gate-order permutation: PyTorch (i, f, g, o) -> (i, f, o, g) so the kernel
    # applies one sigmoid to the first 3H lanes and one tanh to the last H lanes.
    perm = jnp.concatenate([jnp.arange(0, 2 * H),
                            jnp.arange(3 * H, 4 * H),
                            jnp.arange(2 * H, 3 * H)])

    def dir_weights(w_ih, w_hh, b_ih, b_hh):
        return (w_ih[perm].T.astype(f32),            # (D, 4H)
                w_hh[perm].T.astype(f32),            # (H, 4H)
                (b_ih + b_hh)[perm].astype(f32))     # (4H,)

    wih_f, whh_f, b_f = dir_weights(p["w_ih_f"], p["w_hh_f"], p["b_ih_f"], p["b_hh_f"])
    wih_b, whh_b, b_b = dir_weights(p["w_ih_b"], p["w_hh_b"], p["b_ih_b"], p["b_hh_b"])

    wih_cat = jnp.concatenate([wih_f, wih_b], axis=1)              # (D, 8H)
    b_gate = jnp.concatenate([b_f, b_b])[None, :]                  # (1, 8H)

    w_head = jnp.concatenate([p["w_out"].T, p["w_tr"].T], axis=1).astype(f32)  # (2H, O+3)
    b_head = jnp.concatenate([p["b_out"], p["b_tr"]])[None, :].astype(f32)     # (1, O+3)

    args = (
        x_flat,
        p["w_in"].T.astype(f32), p["b_in"][None, :].astype(f32),
        wih_cat, b_gate, whh_f, whh_b, w_head, b_head,
    )

    kernel = functools.partial(
        bilstm_impute_kernel,
        seq_len=T, batch_pad=Bp, look_back=LOOK_BACK,
        hidden=H, out_features=O,
    )

    out_pad = pl.pallas_call(
        kernel,
        out_shape=jax.ShapeDtypeStruct((Bp, O), f32),
        in_specs=[pl.BlockSpec(memory_space=pltpu.MemorySpace.VMEM)] * len(args),
        out_specs=pl.BlockSpec(memory_space=pltpu.MemorySpace.VMEM),
        scratch_shapes=[pltpu.VMEM((T * Bp, 8 * H), f32)],
    )(*args)
    return out_pad[:B]


# ----------------------------------------------------------------------------
# Pure-JAX reference (mirrors the PyTorch forward) for verification.
# ----------------------------------------------------------------------------
def reference_forward(x, p, hidden_size):
    B, T, D = x.shape
    H = hidden_size
    xr = jnp.maximum(x @ p["w_in"].T + p["b_in"], 0.0)

    def cell(x_t, h, c, w_ih, w_hh, b_ih, b_hh):
        pre = x_t @ w_ih.T + b_ih + h @ w_hh.T + b_hh
        i, f, g, o = jnp.split(pre, 4, axis=1)
        i, f, o = jax.nn.sigmoid(i), jax.nn.sigmoid(f), jax.nn.sigmoid(o)
        g = jnp.tanh(g)
        c = f * c + i * g
        h = o * jnp.tanh(c)
        return h, c

    h0 = jnp.zeros((B, H), jnp.float32)

    def fwd_scan(carry, x_t):
        h, c = carry
        h, c = cell(x_t, h, c, p["w_ih_f"], p["w_hh_f"], p["b_ih_f"], p["b_hh_f"])
        return (h, c), h

    def bwd_scan(carry, x_t):
        h, c = carry
        h, c = cell(x_t, h, c, p["w_ih_b"], p["w_hh_b"], p["b_ih_b"], p["b_hh_b"])
        return (h, c), h

    xs = jnp.transpose(xr, (1, 0, 2))                       # (T, B, D)
    _, hs_f = lax.scan(fwd_scan, (h0, h0), xs)              # (T, B, H)
    _, hs_b_rev = lax.scan(bwd_scan, (h0, h0), xs[::-1])    # processed T-1..0
    hs_b = hs_b_rev[::-1]                                   # aligned to time index

    lastout = jnp.concatenate([hs_f[LOOK_BACK], hs_b[LOOK_BACK]], axis=1)  # (B, 2H)
    out = lastout @ p["w_out"].T + p["b_out"]
    trans = lastout @ p["w_tr"].T + p["b_tr"]

    angle, tx, ty = trans[:, [0]], trans[:, [1]], trans[:, [2]]
    out_X, out_Y = out[:, ::3], out[:, 1::3]
    out_Xt = out_X + jnp.cos(angle) * (out_X - tx) - jnp.sin(angle) * (out_Y - ty)
    out_Yt = out_Y + jnp.sin(angle) * (out_X - tx) + jnp.cos(angle) * (out_Y - ty)
    out = out.at[:, ::3].set(out_Xt).at[:, 1::3].set(out_Yt)
    return out


# ----------------------------------------------------------------------------
def init_params(key, input_size, hidden_size, output_size):
    H, D, O = hidden_size, input_size, output_size
    shapes = {
        "w_in": (D, D), "b_in": (D,),
        "w_ih_f": (4 * H, D), "w_hh_f": (4 * H, H), "b_ih_f": (4 * H,), "b_hh_f": (4 * H,),
        "w_ih_b": (4 * H, D), "w_hh_b": (4 * H, H), "b_ih_b": (4 * H,), "b_hh_b": (4 * H,),
        "w_out": (O, 2 * H), "b_out": (O,),
        "w_tr": (3, 2 * H), "b_tr": (3,),
    }
    params = {}
    keys = jax.random.split(key, len(shapes))
    for k, (name, shp) in zip(keys, sorted(shapes.items())):
        fan_in = shp[-1] if len(shp) > 1 else max(shp[0], 1)
        bound = 1.0 / jnp.sqrt(jnp.float32(fan_in))
        params[name] = jax.random.uniform(k, shp, jnp.float32, -bound, bound)
    return params


if __name__ == "__main__":
    # Small but consistent shapes: seq_len must exceed look_back (=36).
    B, T = 2, 40
    input_size = 12          # 4 points x 3 coords
    hidden_size = 32
    output_size = 12         # must be a multiple of 3 (x,y,z triplets)

    key = jax.random.PRNGKey(0)
    kx, kp = jax.random.split(key)
    x = jax.random.normal(kx, (B, T, input_size), jnp.float32)
    params = init_params(kp, input_size, hidden_size, output_size)

    out = model_forward(x, params, hidden_size)
    out = jax.block_until_ready(out)

    ref = jax.block_until_ready(reference_forward(x, params, hidden_size))
    assert out.shape == (B, output_size)
    assert jnp.allclose(out, ref, rtol=1e-4, atol=1e-4), (
        f"mismatch: max abs err {jnp.max(jnp.abs(out - ref))}"
    )

    print("KERNEL_OK")
</pallas_src>

<mosaic_0001>
module attributes {stable_mosaic.version = 11 : i64} {
  func.func @bilstm_impute_kernel(%arg0: memref<320x12xf32, #tpu.memory_space<vmem>>, %arg1: memref<12x12xf32, #tpu.memory_space<vmem>>, %arg2: memref<1x12xf32, #tpu.memory_space<vmem>>, %arg3: memref<12x256xf32, #tpu.memory_space<vmem>>, %arg4: memref<1x256xf32, #tpu.memory_space<vmem>>, %arg5: memref<32x128xf32, #tpu.memory_space<vmem>>, %arg6: memref<32x128xf32, #tpu.memory_space<vmem>>, %arg7: memref<64x15xf32, #tpu.memory_space<vmem>>, %arg8: memref<1x15xf32, #tpu.memory_space<vmem>>, %arg9: memref<8x12xf32, #tpu.memory_space<vmem>>, %arg10: memref<320x256xf32, #tpu.memory_space<vmem>>) attributes {dimension_semantics = [], scalar_prefetch = 0 : i64, scratch_operands = 1 : i64, tpu.core_type = #tpu.core_type<tc>} {
    %c0 = arith.constant 0 : index
    %c0_0 = arith.constant 0 : index
    %0 = vector.load %arg0[%c0, %c0_0] : memref<320x12xf32, #tpu.memory_space<vmem>>, vector<320x12xf32>
    %c0_1 = arith.constant 0 : index
    %c0_2 = arith.constant 0 : index
    %1 = vector.load %arg1[%c0_1, %c0_2] : memref<12x12xf32, #tpu.memory_space<vmem>>, vector<12x12xf32>
    %cst = arith.constant dense<0.000000e+00> : vector<320x12xf32>
    %2 = tpu.matmul %0, %1, %cst {dimension_numbers = #tpu.dot_dimension_numbers<[1], [0], [0], [1], [0, 0, 1, 1], [], []>} : vector<320x12xf32>, vector<12x12xf32>, vector<320x12xf32> -> vector<320x12xf32>
    %c0_3 = arith.constant 0 : index
    %c0_4 = arith.constant 0 : index
    %3 = vector.load %arg2[%c0_3, %c0_4] : memref<1x12xf32, #tpu.memory_space<vmem>>, vector<1x12xf32>
    %4 = vector.broadcast %3 : vector<1x12xf32> to vector<320x12xf32>
    %5 = arith.addf %2, %4 : vector<320x12xf32>
    %cst_5 = arith.constant 0.000000e+00 : f32
    %6 = vector.broadcast %cst_5 : f32 to vector<320x12xf32>
    %7 = arith.maximumf %5, %6 : vector<320x12xf32>
    %c0_6 = arith.constant 0 : index
    %c0_7 = arith.constant 0 : index
    %8 = vector.load %arg3[%c0_6, %c0_7] : memref<12x256xf32, #tpu.memory_space<vmem>>, vector<12x256xf32>
    %cst_8 = arith.constant dense<0.000000e+00> : vector<320x256xf32>
    %9 = tpu.matmul %7, %8, %cst_8 {dimension_numbers = #tpu.dot_dimension_numbers<[1], [0], [0], [1], [0, 0, 1, 1], [], []>} : vector<320x12xf32>, vector<12x256xf32>, vector<320x256xf32> -> vector<320x256xf32>
    %c0_9 = arith.constant 0 : index
    %c0_10 = arith.constant 0 : index
    %10 = vector.load %arg4[%c0_9, %c0_10] : memref<1x256xf32, #tpu.memory_space<vmem>>, vector<1x256xf32>
    %11 = vector.broadcast %10 : vector<1x256xf32> to vector<320x256xf32>
    %12 = arith.addf %9, %11 : vector<320x256xf32>
    %c0_11 = arith.constant 0 : index
    %c0_12 = arith.constant 0 : index
    %13 = vector.load %arg10[%c0_11, %c0_12] : memref<320x256xf32, #tpu.memory_space<vmem>>, vector<320x256xf32>
    tpu.vector_store %arg10[%c0_11, %c0_12], %12 {strides = array<i32>} : memref<320x256xf32, #tpu.memory_space<vmem>>, vector<320x256xf32>,
    %c0_13 = arith.constant 0 : index
    %c0_14 = arith.constant 0 : index
    %14 = vector.load %arg5[%c0_13, %c0_14] : memref<32x128xf32, #tpu.memory_space<vmem>>, vector<32x128xf32>
    %c0_15 = arith.constant 0 : index
    %c0_16 = arith.constant 0 : index
    %15 = vector.load %arg6[%c0_15, %c0_16] : memref<32x128xf32, #tpu.memory_space<vmem>>, vector<32x128xf32>
    %cst_17 = arith.constant 0.000000e+00 : f32
    %16 = vector.broadcast %cst_17 : f32 to vector<8x32xf32>
    %c0_18 = arith.constant 0 : index
    %c0_19 = arith.constant 0 : index
    %17 = vector.load %arg10[%c0_18, %c0_19] : memref<320x256xf32, #tpu.memory_space<vmem>>, vector<8x128xf32>
    %cst_20 = arith.constant dense<0.000000e+00> : vector<8x128xf32>
    %18 = tpu.matmul %16, %14, %cst_20 {dimension_numbers = #tpu.dot_dimension_numbers<[1], [0], [0], [1], [0, 0, 1, 1], [], []>} : vector<8x32xf32>, vector<32x128xf32>, vector<8x128xf32> -> vector<8x128xf32>
    %19 = arith.addf %17, %18 : vector<8x128xf32>
    %20 = vector.extract_strided_slice %19 {offsets = [0, 0], sizes = [8, 96], strides = [1, 1]} : vector<8x128xf32> to vector<8x96xf32>
    %21 = arith.negf %20 : vector<8x96xf32>
    %22 = math.exp %21 : vector<8x96xf32>
    %cst_21 = arith.constant 1.000000e+00 : f32
    %23 = vector.broadcast %cst_21 : f32 to vector<8x96xf32>
    %24 = arith.addf %23, %22 : vector<8x96xf32>
    %25 = arith.divf %23, %24 : vector<8x96xf32>
    %26 = vector.extract_strided_slice %19 {offsets = [0, 96], sizes = [8, 32], strides = [1, 1]} : vector<8x128xf32> to vector<8x32xf32>
    %27 = math.tanh %26 : vector<8x32xf32>
    %28 = vector.extract_strided_slice %25 {offsets = [0, 0], sizes = [8, 32], strides = [1, 1]} : vector<8x96xf32> to vector<8x32xf32>
    %29 = vector.extract_strided_slice %25 {offsets = [0, 32], sizes = [8, 32], strides = [1, 1]} : vector<8x96xf32> to vector<8x32xf32>
    %30 = vector.extract_strided_slice %25 {offsets = [0, 64], sizes = [8, 32], strides = [1, 1]} : vector<8x96xf32> to vector<8x32xf32>
    %31 = arith.mulf %29, %16 : vector<8x32xf32>
    %32 = arith.mulf %28, %27 : vector<8x32xf32>
    %33 = arith.addf %31, %32 : vector<8x32xf32>
    %34 = math.tanh %33 : vector<8x32xf32>
    %35 = arith.mulf %30, %34 : vector<8x32xf32>
    %c8 = arith.constant 8 : index
    %c0_22 = arith.constant 0 : index
    %36 = vector.load %arg10[%c8, %c0_22] : memref<320x256xf32, #tpu.memory_space<vmem>>, vector<8x128xf32>
    %cst_23 = arith.constant dense<0.000000e+00> : vector<8x128xf32>
    %37 = tpu.matmul %35, %14, %cst_23 {dimension_numbers = #tpu.dot_dimension_numbers<[1], [0], [0], [1], [0, 0, 1, 1], [], []>} : vector<8x32xf32>, vector<32x128xf32>, vector<8x128xf32> -> vector<8x128xf32>
    %38 = arith.addf %36, %37 : vector<8x128xf32>
    %39 = vector.extract_strided_slice %38 {offsets = [0, 0], sizes = [8, 96], strides = [1, 1]} : vector<8x128xf32> to vector<8x96xf32>
    %40 = arith.negf %39 : vector<8x96xf32>
    %41 = math.exp %40 : vector<8x96xf32>
    %cst_24 = arith.constant 1.000000e+00 : f32
    %42 = vector.broadcast %cst_24 : f32 to vector<8x96xf32>
    %43 = arith.addf %42, %41 : vector<8x96xf32>
    %44 = arith.divf %42, %43 : vector<8x96xf32>
    %45 = vector.extract_strided_slice %38 {offsets = [0, 96], sizes = [8, 32], strides = [1, 1]} : vector<8x128xf32> to vector<8x32xf32>
    %46 = math.tanh %45 : vector<8x32xf32>
    %47 = vector.extract_strided_slice %44 {offsets = [0, 0], sizes = [8, 32], strides = [1, 1]} : vector<8x96xf32> to vector<8x32xf32>
    %48 = vector.extract_strided_slice %44 {offsets = [0, 32], sizes = [8, 32], strides = [1, 1]} : vector<8x96xf32> to vector<8x32xf32>
    %49 = vector.extract_strided_slice %44 {offsets = [0, 64], sizes = [8, 32], strides = [1, 1]} : vector<8x96xf32> to vector<8x32xf32>
    %50 = arith.mulf %48, %33 : vector<8x32xf32>
    %51 = arith.mulf %47, %46 : vector<8x32xf32>
    %52 = arith.addf %50, %51 : vector<8x32xf32>
    %53 = math.tanh %52 : vector<8x32xf32>
    %54 = arith.mulf %49, %53 : vector<8x32xf32>
    %c16 = arith.constant 16 : index
    %c0_25 = arith.constant 0 : index
    %55 = vector.load %arg10[%c16, %c0_25] : memref<320x256xf32, #tpu.memory_space<vmem>>, vector<8x128xf32>
    %cst_26 = arith.constant dense<0.000000e+00> : vector<8x128xf32>
    %56 = tpu.matmul %54, %14, %cst_26 {dimension_numbers = #tpu.dot_dimension_numbers<[1], [0], [0], [1], [0, 0, 1, 1], [], []>} : vector<8x32xf32>, vector<32x128xf32>, vector<8x128xf32> -> vector<8x128xf32>
    %57 = arith.addf %55, %56 : vector<8x128xf32>
    %58 = vector.extract_strided_slice %57 {offsets = [0, 0], sizes = [8, 96], strides = [1, 1]} : vector<8x128xf32> to vector<8x96xf32>
    %59 = arith.negf %58 : vector<8x96xf32>
    %60 = math.exp %59 : vector<8x96xf32>
    %cst_27 = arith.constant 1.000000e+00 : f32
    %61 = vector.broadcast %cst_27 : f32 to vector<8x96xf32>
    %62 = arith.addf %61, %60 : vector<8x96xf32>
    %63 = arith.divf %61, %62 : vector<8x96xf32>
    %64 = vector.extract_strided_slice %57 {offsets = [0, 96], sizes = [8, 32], strides = [1, 1]} : vector<8x128xf32> to vector<8x32xf32>
    %65 = math.tanh %64 : vector<8x32xf32>
    %66 = vector.extract_strided_slice %63 {offsets = [0, 0], sizes = [8, 32], strides = [1, 1]} : vector<8x96xf32> to vector<8x32xf32>
    %67 = vector.extract_strided_slice %63 {offsets = [0, 32], sizes = [8, 32], strides = [1, 1]} : vector<8x96xf32> to vector<8x32xf32>
    %68 = vector.extract_strided_slice %63 {offsets = [0, 64], sizes = [8, 32], strides = [1, 1]} : vector<8x96xf32> to vector<8x32xf32>
    %69 = arith.mulf %67, %52 : vector<8x32xf32>
    %70 = arith.mulf %66, %65 : vector<8x32xf32>
    %71 = arith.addf %69, %70 : vector<8x32xf32>
    %72 = math.tanh %71 : vector<8x32xf32>
    %73 = arith.mulf %68, %72 : vector<8x32xf32>
    %c24 = arith.constant 24 : index
    %c0_28 = arith.constant 0 : index
    %74 = vector.load %arg10[%c24, %c0_28] : memref<320x256xf32, #tpu.memory_space<vmem>>, vector<8x128xf32>
    %cst_29 = arith.constant dense<0.000000e+00> : vector<8x128xf32>
    %75 = tpu.matmul %73, %14, %cst_29 {dimension_numbers = #tpu.dot_dimension_numbers<[1], [0], [0], [1], [0, 0, 1, 1], [], []>} : vector<8x32xf32>, vector<32x128xf32>, vector<8x128xf32> -> vector<8x128xf32>
    %76 = arith.addf %74, %75 : vector<8x128xf32>
    %77 = vector.extract_strided_slice %76 {offsets = [0, 0], sizes = [8, 96], strides = [1, 1]} : vector<8x128xf32> to vector<8x96xf32>
    %78 = arith.negf %77 : vector<8x96xf32>
    %79 = math.exp %78 : vector<8x96xf32>
    %cst_30 = arith.constant 1.000000e+00 : f32
    %80 = vector.broadcast %cst_30 : f32 to vector<8x96xf32>
    %81 = arith.addf %80, %79 : vector<8x96xf32>
    %82 = arith.divf %80, %81 : vector<8x96xf32>
    %83 = vector.extract_strided_slice %76 {offsets = [0, 96], sizes = [8, 32], strides = [1, 1]} : vector<8x128xf32> to vector<8x32xf32>
    %84 = math.tanh %83 : vector<8x32xf32>
    %85 = vector.extract_strided_slice %82 {offsets = [0, 0], sizes = [8, 32], strides = [1, 1]} : vector<8x96xf32> to vector<8x32xf32>
    %86 = vector.extract_strided_slice %82 {offsets = [0, 32], sizes = [8, 32], strides = [1, 1]} : vector<8x96xf32> to vector<8x32xf32>
    %87 = vector.extract_strided_slice %82 {offsets = [0, 64], sizes = [8, 32], strides = [1, 1]} : vector<8x96xf32> to vector<8x32xf32>
    %88 = arith.mulf %86, %71 : vector<8x32xf32>
    %89 = arith.mulf %85, %84 : vector<8x32xf32>
    %90 = arith.addf %88, %89 : vector<8x32xf32>
    %91 = math.tanh %90 : vector<8x32xf32>
    %92 = arith.mulf %87, %91 : vector<8x32xf32>
    %c32 = arith.constant 32 : index
    %c0_31 = arith.constant 0 : index
    %93 = vector.load %arg10[%c32, %c0_31] : memref<320x256xf32, #tpu.memory_space<vmem>>, vector<8x128xf32>
    %cst_32 = arith.constant dense<0.000000e+00> : vector<8x128xf32>
    %94 = tpu.matmul %92, %14, %cst_32 {dimension_numbers = #tpu.dot_dimension_numbers<[1], [0], [0], [1], [0, 0, 1, 1], [], []>} : vector<8x32xf32>, vector<32x128xf32>, vector<8x128xf32> -> vector<8x128xf32>
    %95 = arith.addf %93, %94 : vector<8x128xf32>
    %96 = vector.extract_strided_slice %95 {offsets = [0, 0], sizes = [8, 96], strides = [1, 1]} : vector<8x128xf32> to vector<8x96xf32>
    %97 = arith.negf %96 : vector<8x96xf32>
    %98 = math.exp %97 : vector<8x96xf32>
    %cst_33 = arith.constant 1.000000e+00 : f32
    %99 = vector.broadcast %cst_33 : f32 to vector<8x96xf32>
    %100 = arith.addf %99, %98 : vector<8x96xf32>
    %101 = arith.divf %99, %100 : vector<8x96xf32>
    %102 = vector.extract_strided_slice %95 {offsets = [0, 96], sizes = [8, 32], strides = [1, 1]} : vector<8x128xf32> to vector<8x32xf32>
    %103 = math.tanh %102 : vector<8x32xf32>
    %104 = vector.extract_strided_slice %101 {offsets = [0, 0], sizes = [8, 32], strides = [1, 1]} : vector<8x96xf32> to vector<8x32xf32>
    %105 = vector.extract_strided_slice %101 {offsets = [0, 32], sizes = [8, 32], strides = [1, 1]} : vector<8x96xf32> to vector<8x32xf32>
    %106 = vector.extract_strided_slice %101 {offsets = [0, 64], sizes = [8, 32], strides = [1, 1]} : vector<8x96xf32> to vector<8x32xf32>
    %107 = arith.mulf %105, %90 : vector<8x32xf32>
    %108 = arith.mulf %104, %103 : vector<8x32xf32>
    %109 = arith.addf %107, %108 : vector<8x32xf32>
    %110 = math.tanh %109 : vector<8x32xf32>
    %111 = arith.mulf %106, %110 : vector<8x32xf32>
    %c40 = arith.constant 40 : index
    %c0_34 = arith.constant 0 : index
    %112 = vector.load %arg10[%c40, %c0_34] : memref<320x256xf32, #tpu.memory_space<vmem>>, vector<8x128xf32>
    %cst_35 = arith.constant dense<0.000000e+00> : vector<8x128xf32>
    %113 = tpu.matmul %111, %14, %cst_35 {dimension_numbers = #tpu.dot_dimension_numbers<[1], [0], [0], [1], [0, 0, 1, 1], [], []>} : vector<8x32xf32>, vector<32x128xf32>, vector<8x128xf32> -> vector<8x128xf32>
    %114 = arith.addf %112, %113 : vector<8x128xf32>
    %115 = vector.extract_strided_slice %114 {offsets = [0, 0], sizes = [8, 96], strides = [1, 1]} : vector<8x128xf32> to vector<8x96xf32>
    %116 = arith.negf %115 : vector<8x96xf32>
    %117 = math.exp %116 : vector<8x96xf32>
    %cst_36 = arith.constant 1.000000e+00 : f32
    %118 = vector.broadcast %cst_36 : f32 to vector<8x96xf32>
    %119 = arith.addf %118, %117 : vector<8x96xf32>
    %120 = arith.divf %118, %119 : vector<8x96xf32>
    %121 = vector.extract_strided_slice %114 {offsets = [0, 96], sizes = [8, 32], strides = [1, 1]} : vector<8x128xf32> to vector<8x32xf32>
    %122 = math.tanh %121 : vector<8x32xf32>
    %123 = vector.extract_strided_slice %120 {offsets = [0, 0], sizes = [8, 32], strides = [1, 1]} : vector<8x96xf32> to vector<8x32xf32>
    %124 = vector.extract_strided_slice %120 {offsets = [0, 32], sizes = [8, 32], strides = [1, 1]} : vector<8x96xf32> to vector<8x32xf32>
    %125 = vector.extract_strided_slice %120 {offsets = [0, 64], sizes = [8, 32], strides = [1, 1]} : vector<8x96xf32> to vector<8x32xf32>
    %126 = arith.mulf %124, %109 : vector<8x32xf32>
    %127 = arith.mulf %123, %122 : vector<8x32xf32>
    %128 = arith.addf %126, %127 : vector<8x32xf32>
    %129 = math.tanh %128 : vector<8x32xf32>
    %130 = arith.mulf %125, %129 : vector<8x32xf32>
    %c48 = arith.constant 48 : index
    %c0_37 = arith.constant 0 : index
    %131 = vector.load %arg10[%c48, %c0_37] : memref<320x256xf32, #tpu.memory_space<vmem>>, vector<8x128xf32>
    %cst_38 = arith.constant dense<0.000000e+00> : vector<8x128xf32>
    %132 = tpu.matmul %130, %14, %cst_38 {dimension_numbers = #tpu.dot_dimension_numbers<[1], [0], [0], [1], [0, 0, 1, 1], [], []>} : vector<8x32xf32>, vector<32x128xf32>, vector<8x128xf32> -> vector<8x128xf32>
    %133 = arith.addf %131, %132 : vector<8x128xf32>
    %134 = vector.extract_strided_slice %133 {offsets = [0, 0], sizes = [8, 96], strides = [1, 1]} : vector<8x128xf32> to vector<8x96xf32>
    %135 = arith.negf %134 : vector<8x96xf32>
    %136 = math.exp %135 : vector<8x96xf32>
    %cst_39 = arith.constant 1.000000e+00 : f32
    %137 = vector.broadcast %cst_39 : f32 to vector<8x96xf32>
    %138 = arith.addf %137, %136 : vector<8x96xf32>
    %139 = arith.divf %137, %138 : vector<8x96xf32>
    %140 = vector.extract_strided_slice %133 {offsets = [0, 96], sizes = [8, 32], strides = [1, 1]} : vector<8x128xf32> to vector<8x32xf32>
    %141 = math.tanh %140 : vector<8x32xf32>
    %142 = vector.extract_strided_slice %139 {offsets = [0, 0], sizes = [8, 32], strides = [1, 1]} : vector<8x96xf32> to vector<8x32xf32>
    %143 = vector.extract_strided_slice %139 {offsets = [0, 32], sizes = [8, 32], strides = [1, 1]} : vector<8x96xf32> to vector<8x32xf32>
    %144 = vector.extract_strided_slice %139 {offsets = [0, 64], sizes = [8, 32], strides = [1, 1]} : vector<8x96xf32> to vector<8x32xf32>
    %145 = arith.mulf %143, %128 : vector<8x32xf32>
    %146 = arith.mulf %142, %141 : vector<8x32xf32>
    %147 = arith.addf %145, %146 : vector<8x32xf32>
    %148 = math.tanh %147 : vector<8x32xf32>
    %149 = arith.mulf %144, %148 : vector<8x32xf32>
    %c56 = arith.constant 56 : index
    %c0_40 = arith.constant 0 : index
    %150 = vector.load %arg10[%c56, %c0_40] : memref<320x256xf32, #tpu.memory_space<vmem>>, vector<8x128xf32>
    %cst_41 = arith.constant dense<0.000000e+00> : vector<8x128xf32>
    %151 = tpu.matmul %149, %14, %cst_41 {dimension_numbers = #tpu.dot_dimension_numbers<[1], [0], [0], [1], [0, 0, 1, 1], [], []>} : vector<8x32xf32>, vector<32x128xf32>, vector<8x128xf32> -> vector<8x128xf32>
    %152 = arith.addf %150, %151 : vector<8x128xf32>
    %153 = vector.extract_strided_slice %152 {offsets = [0, 0], sizes = [8, 96], strides = [1, 1]} : vector<8x128xf32> to vector<8x96xf32>
    %154 = arith.negf %153 : vector<8x96xf32>
    %155 = math.exp %154 : vector<8x96xf32>
    %cst_42 = arith.constant 1.000000e+00 : f32
    %156 = vector.broadcast %cst_42 : f32 to vector<8x96xf32>
    %157 = arith.addf %156, %155 : vector<8x96xf32>
    %158 = arith.divf %156, %157 : vector<8x96xf32>
    %159 = vector.extract_strided_slice %152 {offsets = [0, 96], sizes = [8, 32], strides = [1, 1]} : vector<8x128xf32> to vector<8x32xf32>
    %160 = math.tanh %159 : vector<8x32xf32>
    %161 = vector.extract_strided_slice %158 {offsets = [0, 0], sizes = [8, 32], strides = [1, 1]} : vector<8x96xf32> to vector<8x32xf32>
    %162 = vector.extract_strided_slice %158 {offsets = [0, 32], sizes = [8, 32], strides = [1, 1]} : vector<8x96xf32> to vector<8x32xf32>
    %163 = vector.extract_strided_slice %158 {offsets = [0, 64], sizes = [8, 32], strides = [1, 1]} : vector<8x96xf32> to vector<8x32xf32>
    %164 = arith.mulf %162, %147 : vector<8x32xf32>
    %165 = arith.mulf %161, %160 : vector<8x32xf32>
    %166 = arith.addf %164, %165 : vector<8x32xf32>
    %167 = math.tanh %166 : vector<8x32xf32>
    %168 = arith.mulf %163, %167 : vector<8x32xf32>
    %c64 = arith.constant 64 : index
    %c0_43 = arith.constant 0 : index
    %169 = vector.load %arg10[%c64, %c0_43] : memref<320x256xf32, #tpu.memory_space<vmem>>, vector<8x128xf32>
    %cst_44 = arith.constant dense<0.000000e+00> : vector<8x128xf32>
    %170 = tpu.matmul %168, %14, %cst_44 {dimension_numbers = #tpu.dot_dimension_numbers<[1], [0], [0], [1], [0, 0, 1, 1], [], []>} : vector<8x32xf32>, vector<32x128xf32>, vector<8x128xf32> -> vector<8x128xf32>
    %171 = arith.addf %169, %170 : vector<8x128xf32>
    %172 = vector.extract_strided_slice %171 {offsets = [0, 0], sizes = [8, 96], strides = [1, 1]} : vector<8x128xf32> to vector<8x96xf32>
    %173 = arith.negf %172 : vector<8x96xf32>
    %174 = math.exp %173 : vector<8x96xf32>
    %cst_45 = arith.constant 1.000000e+00 : f32
    %175 = vector.broadcast %cst_45 : f32 to vector<8x96xf32>
    %176 = arith.addf %175, %174 : vector<8x96xf32>
    %177 = arith.divf %175, %176 : vector<8x96xf32>
    %178 = vector.extract_strided_slice %171 {offsets = [0, 96], sizes = [8, 32], strides = [1, 1]} : vector<8x128xf32> to vector<8x32xf32>
    %179 = math.tanh %178 : vector<8x32xf32>
    %180 = vector.extract_strided_slice %177 {offsets = [0, 0], sizes = [8, 32], strides = [1, 1]} : vector<8x96xf32> to vector<8x32xf32>
    %181 = vector.extract_strided_slice %177 {offsets = [0, 32], sizes = [8, 32], strides = [1, 1]} : vector<8x96xf32> to vector<8x32xf32>
    %182 = vector.extract_strided_slice %177 {offsets = [0, 64], sizes = [8, 32], strides = [1, 1]} : vector<8x96xf32> to vector<8x32xf32>
    %183 = arith.mulf %181, %166 : vector<8x32xf32>
    %184 = arith.mulf %180, %179 : vector<8x32xf32>
    %185 = arith.addf %183, %184 : vector<8x32xf32>
    %186 = math.tanh %185 : vector<8x32xf32>
    %187 = arith.mulf %182, %186 : vector<8x32xf32>
    %c72 = arith.constant 72 : index
    %c0_46 = arith.constant 0 : index
    %188 = vector.load %arg10[%c72, %c0_46] : memref<320x256xf32, #tpu.memory_space<vmem>>, vector<8x128xf32>
    %cst_47 = arith.constant dense<0.000000e+00> : vector<8x128xf32>
    %189 = tpu.matmul %187, %14, %cst_47 {dimension_numbers = #tpu.dot_dimension_numbers<[1], [0], [0], [1], [0, 0, 1, 1], [], []>} : vector<8x32xf32>, vector<32x128xf32>, vector<8x128xf32> -> vector<8x128xf32>
    %190 = arith.addf %188, %189 : vector<8x128xf32>
    %191 = vector.extract_strided_slice %190 {offsets = [0, 0], sizes = [8, 96], strides = [1, 1]} : vector<8x128xf32> to vector<8x96xf32>
    %192 = arith.negf %191 : vector<8x96xf32>
    %193 = math.exp %192 : vector<8x96xf32>
    %cst_48 = arith.constant 1.000000e+00 : f32
    %194 = vector.broadcast %cst_48 : f32 to vector<8x96xf32>
    %195 = arith.addf %194, %193 : vector<8x96xf32>
    %196 = arith.divf %194, %195 : vector<8x96xf32>
    %197 = vector.extract_strided_slice %190 {offsets = [0, 96], sizes = [8, 32], strides = [1, 1]} : vector<8x128xf32> to vector<8x32xf32>
    %198 = math.tanh %197 : vector<8x32xf32>
    %199 = vector.extract_strided_slice %196 {offsets = [0, 0], sizes = [8, 32], strides = [1, 1]} : vector<8x96xf32> to vector<8x32xf32>
    %200 = vector.extract_strided_slice %196 {offsets = [0, 32], sizes = [8, 32], strides = [1, 1]} : vector<8x96xf32> to vector<8x32xf32>
    %201 = vector.extract_strided_slice %196 {offsets = [0, 64], sizes = [8, 32], strides = [1, 1]} : vector<8x96xf32> to vector<8x32xf32>
    %202 = arith.mulf %200, %185 : vector<8x32xf32>
    %203 = arith.mulf %199, %198 : vector<8x32xf32>
    %204 = arith.addf %202, %203 : vector<8x32xf32>
    %205 = math.tanh %204 : vector<8x32xf32>
    %206 = arith.mulf %201, %205 : vector<8x32xf32>
    %c80 = arith.constant 80 : index
    %c0_49 = arith.constant 0 : index
    %207 = vector.load %arg10[%c80, %c0_49] : memref<320x256xf32, #tpu.memory_space<vmem>>, vector<8x128xf32>
    %cst_50 = arith.constant dense<0.000000e+00> : vector<8x128xf32>
    %208 = tpu.matmul %206, %14, %cst_50 {dimension_numbers = #tpu.dot_dimension_numbers<[1], [0], [0], [1], [0, 0, 1, 1], [], []>} : vector<8x32xf32>, vector<32x128xf32>, vector<8x128xf32> -> vector<8x128xf32>
    %209 = arith.addf %207, %208 : vector<8x128xf32>
    %210 = vector.extract_strided_slice %209 {offsets = [0, 0], sizes = [8, 96], strides = [1, 1]} : vector<8x128xf32> to vector<8x96xf32>
    %211 = arith.negf %210 : vector<8x96xf32>
    %212 = math.exp %211 : vector<8x96xf32>
    %cst_51 = arith.constant 1.000000e+00 : f32
    %213 = vector.broadcast %cst_51 : f32 to vector<8x96xf32>
    %214 = arith.addf %213, %212 : vector<8x96xf32>
    %215 = arith.divf %213, %214 : vector<8x96xf32>
    %216 = vector.extract_strided_slice %209 {offsets = [0, 96], sizes = [8, 32], strides = [1, 1]} : vector<8x128xf32> to vector<8x32xf32>
    %217 = math.tanh %216 : vector<8x32xf32>
    %218 = vector.extract_strided_slice %215 {offsets = [0, 0], sizes = [8, 32], strides = [1, 1]} : vector<8x96xf32> to vector<8x32xf32>
    %219 = vector.extract_strided_slice %215 {offsets = [0, 32], sizes = [8, 32], strides = [1, 1]} : vector<8x96xf32> to vector<8x32xf32>
    %220 = vector.extract_strided_slice %215 {offsets = [0, 64], sizes = [8, 32], strides = [1, 1]} : vector<8x96xf32> to vector<8x32xf32>
    %221 = arith.mulf %219, %204 : vector<8x32xf32>
    %222 = arith.mulf %218, %217 : vector<8x32xf32>
    %223 = arith.addf %221, %222 : vector<8x32xf32>
    %224 = math.tanh %223 : vector<8x32xf32>
    %225 = arith.mulf %220, %224 : vector<8x32xf32>
    %c88 = arith.constant 88 : index
    %c0_52 = arith.constant 0 : index
    %226 = vector.load %arg10[%c88, %c0_52] : memref<320x256xf32, #tpu.memory_space<vmem>>, vector<8x128xf32>
    %cst_53 = arith.constant dense<0.000000e+00> : vector<8x128xf32>
    %227 = tpu.matmul %225, %14, %cst_53 {dimension_numbers = #tpu.dot_dimension_numbers<[1], [0], [0], [1], [0, 0, 1, 1], [], []>} : vector<8x32xf32>, vector<32x128xf32>, vector<8x128xf32> -> vector<8x128xf32>
    %228 = arith.addf %226, %227 : vector<8x128xf32>
    %229 = vector.extract_strided_slice %228 {offsets = [0, 0], sizes = [8, 96], strides = [1, 1]} : vector<8x128xf32> to vector<8x96xf32>
    %230 = arith.negf %229 : vector<8x96xf32>
    %231 = math.exp %230 : vector<8x96xf32>
    %cst_54 = arith.constant 1.000000e+00 : f32
    %232 = vector.broadcast %cst_54 : f32 to vector<8x96xf32>
    %233 = arith.addf %232, %231 : vector<8x96xf32>
    %234 = arith.divf %232, %233 : vector<8x96xf32>
    %235 = vector.extract_strided_slice %228 {offsets = [0, 96], sizes = [8, 32], strides = [1, 1]} : vector<8x128xf32> to vector<8x32xf32>
    %236 = math.tanh %235 : vector<8x32xf32>
    %237 = vector.extract_strided_slice %234 {offsets = [0, 0], sizes = [8, 32], strides = [1, 1]} : vector<8x96xf32> to vector<8x32xf32>
    %238 = vector.extract_strided_slice %234 {offsets = [0, 32], sizes = [8, 32], strides = [1, 1]} : vector<8x96xf32> to vector<8x32xf32>
    %239 = vector.extract_strided_slice %234 {offsets = [0, 64], sizes = [8, 32], strides = [1, 1]} : vector<8x96xf32> to vector<8x32xf32>
    %240 = arith.mulf %238, %223 : vector<8x32xf32>
    %241 = arith.mulf %237, %236 : vector<8x32xf32>
    %242 = arith.addf %240, %241 : vector<8x32xf32>
    %243 = math.tanh %242 : vector<8x32xf32>
    %244 = arith.mulf %239, %243 : vector<8x32xf32>
    %c96 = arith.constant 96 : index
    %c0_55 = arith.constant 0 : index
    %245 = vector.load %arg10[%c96, %c0_55] : memref<320x256xf32, #tpu.memory_space<vmem>>, vector<8x128xf32>
    %cst_56 = arith.constant dense<0.000000e+00> : vector<8x128xf32>
    %246 = tpu.matmul %244, %14, %cst_56 {dimension_numbers = #tpu.dot_dimension_numbers<[1], [0], [0], [1], [0, 0, 1, 1], [], []>} : vector<8x32xf32>, vector<32x128xf32>, vector<8x128xf32> -> vector<8x128xf32>
    %247 = arith.addf %245, %246 : vector<8x128xf32>
    %248 = vector.extract_strided_slice %247 {offsets = [0, 0], sizes = [8, 96], strides = [1, 1]} : vector<8x128xf32> to vector<8x96xf32>
    %249 = arith.negf %248 : vector<8x96xf32>
    %250 = math.exp %249 : vector<8x96xf32>
    %cst_57 = arith.constant 1.000000e+00 : f32
    %251 = vector.broadcast %cst_57 : f32 to vector<8x96xf32>
    %252 = arith.addf %251, %250 : vector<8x96xf32>
    %253 = arith.divf %251, %252 : vector<8x96xf32>
    %254 = vector.extract_strided_slice %247 {offsets = [0, 96], sizes = [8, 32], strides = [1, 1]} : vector<8x128xf32> to vector<8x32xf32>
    %255 = math.tanh %254 : vector<8x32xf32>
    %256 = vector.extract_strided_slice %253 {offsets = [0, 0], sizes = [8, 32], strides = [1, 1]} : vector<8x96xf32> to vector<8x32xf32>
    %257 = vector.extract_strided_slice %253 {offsets = [0, 32], sizes = [8, 32], strides = [1, 1]} : vector<8x96xf32> to vector<8x32xf32>
    %258 = vector.extract_strided_slice %253 {offsets = [0, 64], sizes = [8, 32], strides = [1, 1]} : vector<8x96xf32> to vector<8x32xf32>
    %259 = arith.mulf %257, %242 : vector<8x32xf32>
    %260 = arith.mulf %256, %255 : vector<8x32xf32>
    %261 = arith.addf %259, %260 : vector<8x32xf32>
    %262 = math.tanh %261 : vector<8x32xf32>
    %263 = arith.mulf %258, %262 : vector<8x32xf32>
    %c104 = arith.constant 104 : index
    %c0_58 = arith.constant 0 : index
    %264 = vector.load %arg10[%c104, %c0_58] : memref<320x256xf32, #tpu.memory_space<vmem>>, vector<8x128xf32>
    %cst_59 = arith.constant dense<0.000000e+00> : vector<8x128xf32>
    %265 = tpu.matmul %263, %14, %cst_59 {dimension_numbers = #tpu.dot_dimension_numbers<[1], [0], [0], [1], [0, 0, 1, 1], [], []>} : vector<8x32xf32>, vector<32x128xf32>, vector<8x128xf32> -> vector<8x128xf32>
    %266 = arith.addf %264, %265 : vector<8x128xf32>
    %267 = vector.extract_strided_slice %266 {offsets = [0, 0], sizes = [8, 96], strides = [1, 1]} : vector<8x128xf32> to vector<8x96xf32>
    %268 = arith.negf %267 : vector<8x96xf32>
    %269 = math.exp %268 : vector<8x96xf32>
    %cst_60 = arith.constant 1.000000e+00 : f32
    %270 = vector.broadcast %cst_60 : f32 to vector<8x96xf32>
    %271 = arith.addf %270, %269 : vector<8x96xf32>
    %272 = arith.divf %270, %271 : vector<8x96xf32>
    %273 = vector.extract_strided_slice %266 {offsets = [0, 96], sizes = [8, 32], strides = [1, 1]} : vector<8x128xf32> to vector<8x32xf32>
    %274 = math.tanh %273 : vector<8x32xf32>
    %275 = vector.extract_strided_slice %272 {offsets = [0, 0], sizes = [8, 32], strides = [1, 1]} : vector<8x96xf32> to vector<8x32xf32>
    %276 = vector.extract_strided_slice %272 {offsets = [0, 32], sizes = [8, 32], strides = [1, 1]} : vector<8x96xf32> to vector<8x32xf32>
    %277 = vector.extract_strided_slice %272 {offsets = [0, 64], sizes = [8, 32], strides = [1, 1]} : vector<8x96xf32> to vector<8x32xf32>
    %278 = arith.mulf %276, %261 : vector<8x32xf32>
    %279 = arith.mulf %275, %274 : vector<8x32xf32>
    %280 = arith.addf %278, %279 : vector<8x32xf32>
    %281 = math.tanh %280 : vector<8x32xf32>
    %282 = arith.mulf %277, %281 : vector<8x32xf32>
    %c112 = arith.constant 112 : index
    %c0_61 = arith.constant 0 : index
    %283 = vector.load %arg10[%c112, %c0_61] : memref<320x256xf32, #tpu.memory_space<vmem>>, vector<8x128xf32>
    %cst_62 = arith.constant dense<0.000000e+00> : vector<8x128xf32>
    %284 = tpu.matmul %282, %14, %cst_62 {dimension_numbers = #tpu.dot_dimension_numbers<[1], [0], [0], [1], [0, 0, 1, 1], [], []>} : vector<8x32xf32>, vector<32x128xf32>, vector<8x128xf32> -> vector<8x128xf32>
    %285 = arith.addf %283, %284 : vector<8x128xf32>
    %286 = vector.extract_strided_slice %285 {offsets = [0, 0], sizes = [8, 96], strides = [1, 1]} : vector<8x128xf32> to vector<8x96xf32>
    %287 = arith.negf %286 : vector<8x96xf32>
    %288 = math.exp %287 : vector<8x96xf32>
    %cst_63 = arith.constant 1.000000e+00 : f32
    %289 = vector.broadcast %cst_63 : f32 to vector<8x96xf32>
    %290 = arith.addf %289, %288 : vector<8x96xf32>
    %291 = arith.divf %289, %290 : vector<8x96xf32>
    %292 = vector.extract_strided_slice %285 {offsets = [0, 96], sizes = [8, 32], strides = [1, 1]} : vector<8x128xf32> to vector<8x32xf32>
    %293 = math.tanh %292 : vector<8x32xf32>
    %294 = vector.extract_strided_slice %291 {offsets = [0, 0], sizes = [8, 32], strides = [1, 1]} : vector<8x96xf32> to vector<8x32xf32>
    %295 = vector.extract_strided_slice %291 {offsets = [0, 32], sizes = [8, 32], strides = [1, 1]} : vector<8x96xf32> to vector<8x32xf32>
    %296 = vector.extract_strided_slice %291 {offsets = [0, 64], sizes = [8, 32], strides = [1, 1]} : vector<8x96xf32> to vector<8x32xf32>
    %297 = arith.mulf %295, %280 : vector<8x32xf32>
    %298 = arith.mulf %294, %293 : vector<8x32xf32>
    %299 = arith.addf %297, %298 : vector<8x32xf32>
    %300 = math.tanh %299 : vector<8x32xf32>
    %301 = arith.mulf %296, %300 : vector<8x32xf32>
    %c120 = arith.constant 120 : index
    %c0_64 = arith.constant 0 : index
    %302 = vector.load %arg10[%c120, %c0_64] : memref<320x256xf32, #tpu.memory_space<vmem>>, vector<8x128xf32>
    %cst_65 = arith.constant dense<0.000000e+00> : vector<8x128xf32>
    %303 = tpu.matmul %301, %14, %cst_65 {dimension_numbers = #tpu.dot_dimension_numbers<[1], [0], [0], [1], [0, 0, 1, 1], [], []>} : vector<8x32xf32>, vector<32x128xf32>, vector<8x128xf32> -> vector<8x128xf32>
    %304 = arith.addf %302, %303 : vector<8x128xf32>
    %305 = vector.extract_strided_slice %304 {offsets = [0, 0], sizes = [8, 96], strides = [1, 1]} : vector<8x128xf32> to vector<8x96xf32>
    %306 = arith.negf %305 : vector<8x96xf32>
    %307 = math.exp %306 : vector<8x96xf32>
    %cst_66 = arith.constant 1.000000e+00 : f32
    %308 = vector.broadcast %cst_66 : f32 to vector<8x96xf32>
    %309 = arith.addf %308, %307 : vector<8x96xf32>
    %310 = arith.divf %308, %309 : vector<8x96xf32>
    %311 = vector.extract_strided_slice %304 {offsets = [0, 96], sizes = [8, 32], strides = [1, 1]} : vector<8x128xf32> to vector<8x32xf32>
    %312 = math.tanh %311 : vector<8x32xf32>
    %313 = vector.extract_strided_slice %310 {offsets = [0, 0], sizes = [8, 32], strides = [1, 1]} : vector<8x96xf32> to vector<8x32xf32>
    %314 = vector.extract_strided_slice %310 {offsets = [0, 32], sizes = [8, 32], strides = [1, 1]} : vector<8x96xf32> to vector<8x32xf32>
    %315 = vector.extract_strided_slice %310 {offsets = [0, 64], sizes = [8, 32], strides = [1, 1]} : vector<8x96xf32> to vector<8x32xf32>
    %316 = arith.mulf %314, %299 : vector<8x32xf32>
    %317 = arith.mulf %313, %312 : vector<8x32xf32>
    %318 = arith.addf %316, %317 : vector<8x32xf32>
    %319 = math.tanh %318 : vector<8x32xf32>
    %320 = arith.mulf %315, %319 : vector<8x32xf32>
    %c128 = arith.constant 128 : index
    %c0_67 = arith.constant 0 : index
    %321 = vector.load %arg10[%c128, %c0_67] : memref<320x256xf32, #tpu.memory_space<vmem>>, vector<8x128xf32>
    %cst_68 = arith.constant dense<0.000000e+00> : vector<8x128xf32>
    %322 = tpu.matmul %320, %14, %cst_68 {dimension_numbers = #tpu.dot_dimension_numbers<[1], [0], [0], [1], [0, 0, 1, 1], [], []>} : vector<8x32xf32>, vector<32x128xf32>, vector<8x128xf32> -> vector<8x128xf32>
    %323 = arith.addf %321, %322 : vector<8x128xf32>
    %324 = vector.extract_strided_slice %323 {offsets = [0, 0], sizes = [8, 96], strides = [1, 1]} : vector<8x128xf32> to vector<8x96xf32>
    %325 = arith.negf %324 : vector<8x96xf32>
    %326 = math.exp %325 : vector<8x96xf32>
    %cst_69 = arith.constant 1.000000e+00 : f32
    %327 = vector.broadcast %cst_69 : f32 to vector<8x96xf32>
    %328 = arith.addf %327, %326 : vector<8x96xf32>
    %329 = arith.divf %327, %328 : vector<8x96xf32>
    %330 = vector.extract_strided_slice %323 {offsets = [0, 96], sizes = [8, 32], strides = [1, 1]} : vector<8x128xf32> to vector<8x32xf32>
    %331 = math.tanh %330 : vector<8x32xf32>
    %332 = vector.extract_strided_slice %329 {offsets = [0, 0], sizes = [8, 32], strides = [1, 1]} : vector<8x96xf32> to vector<8x32xf32>
    %333 = vector.extract_strided_slice %329 {offsets = [0, 32], sizes = [8, 32], strides = [1, 1]} : vector<8x96xf32> to vector<8x32xf32>
    %334 = vector.extract_strided_slice %329 {offsets = [0, 64], sizes = [8, 32], strides = [1, 1]} : vector<8x96xf32> to vector<8x32xf32>
    %335 = arith.mulf %333, %318 : vector<8x32xf32>
    %336 = arith.mulf %332, %331 : vector<8x32xf32>
    %337 = arith.addf %335, %336 : vector<8x32xf32>
    %338 = math.tanh %337 : vector<8x32xf32>
    %339 = arith.mulf %334, %338 : vector<8x32xf32>
    %c136 = arith.constant 136 : index
    %c0_70 = arith.constant 0 : index
    %340 = vector.load %arg10[%c136, %c0_70] : memref<320x256xf32, #tpu.memory_space<vmem>>, vector<8x128xf32>
    %cst_71 = arith.constant dense<0.000000e+00> : vector<8x128xf32>
    %341 = tpu.matmul %339, %14, %cst_71 {dimension_numbers = #tpu.dot_dimension_numbers<[1], [0], [0], [1], [0, 0, 1, 1], [], []>} : vector<8x32xf32>, vector<32x128xf32>, vector<8x128xf32> -> vector<8x128xf32>
    %342 = arith.addf %340, %341 : vector<8x128xf32>
    %343 = vector.extract_strided_slice %342 {offsets = [0, 0], sizes = [8, 96], strides = [1, 1]} : vector<8x128xf32> to vector<8x96xf32>
    %344 = arith.negf %343 : vector<8x96xf32>
    %345 = math.exp %344 : vector<8x96xf32>
    %cst_72 = arith.constant 1.000000e+00 : f32
    %346 = vector.broadcast %cst_72 : f32 to vector<8x96xf32>
    %347 = arith.addf %346, %345 : vector<8x96xf32>
    %348 = arith.divf %346, %347 : vector<8x96xf32>
    %349 = vector.extract_strided_slice %342 {offsets = [0, 96], sizes = [8, 32], strides = [1, 1]} : vector<8x128xf32> to vector<8x32xf32>
    %350 = math.tanh %349 : vector<8x32xf32>
    %351 = vector.extract_strided_slice %348 {offsets = [0, 0], sizes = [8, 32], strides = [1, 1]} : vector<8x96xf32> to vector<8x32xf32>
    %352 = vector.extract_strided_slice %348 {offsets = [0, 32], sizes = [8, 32], strides = [1, 1]} : vector<8x96xf32> to vector<8x32xf32>
    %353 = vector.extract_strided_slice %348 {offsets = [0, 64], sizes = [8, 32], strides = [1, 1]} : vector<8x96xf32> to vector<8x32xf32>
    %354 = arith.mulf %352, %337 : vector<8x32xf32>
    %355 = arith.mulf %351, %350 : vector<8x32xf32>
    %356 = arith.addf %354, %355 : vector<8x32xf32>
    %357 = math.tanh %356 : vector<8x32xf32>
    %358 = arith.mulf %353, %357 : vector<8x32xf32>
    %c144 = arith.constant 144 : index
    %c0_73 = arith.constant 0 : index
    %359 = vector.load %arg10[%c144, %c0_73] : memref<320x256xf32, #tpu.memory_space<vmem>>, vector<8x128xf32>
    %cst_74 = arith.constant dense<0.000000e+00> : vector<8x128xf32>
    %360 = tpu.matmul %358, %14, %cst_74 {dimension_numbers = #tpu.dot_dimension_numbers<[1], [0], [0], [1], [0, 0, 1, 1], [], []>} : vector<8x32xf32>, vector<32x128xf32>, vector<8x128xf32> -> vector<8x128xf32>
    %361 = arith.addf %359, %360 : vector<8x128xf32>
    %362 = vector.extract_strided_slice %361 {offsets = [0, 0], sizes = [8, 96], strides = [1, 1]} : vector<8x128xf32> to vector<8x96xf32>
    %363 = arith.negf %362 : vector<8x96xf32>
    %364 = math.exp %363 : vector<8x96xf32>
    %cst_75 = arith.constant 1.000000e+00 : f32
    %365 = vector.broadcast %cst_75 : f32 to vector<8x96xf32>
    %366 = arith.addf %365, %364 : vector<8x96xf32>
    %367 = arith.divf %365, %366 : vector<8x96xf32>
    %368 = vector.extract_strided_slice %361 {offsets = [0, 96], sizes = [8, 32], strides = [1, 1]} : vector<8x128xf32> to vector<8x32xf32>
    %369 = math.tanh %368 : vector<8x32xf32>
    %370 = vector.extract_strided_slice %367 {offsets = [0, 0], sizes = [8, 32], strides = [1, 1]} : vector<8x96xf32> to vector<8x32xf32>
    %371 = vector.extract_strided_slice %367 {offsets = [0, 32], sizes = [8, 32], strides = [1, 1]} : vector<8x96xf32> to vector<8x32xf32>
    %372 = vector.extract_strided_slice %367 {offsets = [0, 64], sizes = [8, 32], strides = [1, 1]} : vector<8x96xf32> to vector<8x32xf32>
    %373 = arith.mulf %371, %356 : vector<8x32xf32>
    %374 = arith.mulf %370, %369 : vector<8x32xf32>
    %375 = arith.addf %373, %374 : vector<8x32xf32>
    %376 = math.tanh %375 : vector<8x32xf32>
    %377 = arith.mulf %372, %376 : vector<8x32xf32>
    %c152 = arith.constant 152 : index
    %c0_76 = arith.constant 0 : index
    %378 = vector.load %arg10[%c152, %c0_76] : memref<320x256xf32, #tpu.memory_space<vmem>>, vector<8x128xf32>
    %cst_77 = arith.constant dense<0.000000e+00> : vector<8x128xf32>
    %379 = tpu.matmul %377, %14, %cst_77 {dimension_numbers = #tpu.dot_dimension_numbers<[1], [0], [0], [1], [0, 0, 1, 1], [], []>} : vector<8x32xf32>, vector<32x128xf32>, vector<8x128xf32> -> vector<8x128xf32>
    %380 = arith.addf %378, %379 : vector<8x128xf32>
    %381 = vector.extract_strided_slice %380 {offsets = [0, 0], sizes = [8, 96], strides = [1, 1]} : vector<8x128xf32> to vector<8x96xf32>
    %382 = arith.negf %381 : vector<8x96xf32>
    %383 = math.exp %382 : vector<8x96xf32>
    %cst_78 = arith.constant 1.000000e+00 : f32
    %384 = vector.broadcast %cst_78 : f32 to vector<8x96xf32>
    %385 = arith.addf %384, %383 : vector<8x96xf32>
    %386 = arith.divf %384, %385 : vector<8x96xf32>
    %387 = vector.extract_strided_slice %380 {offsets = [0, 96], sizes = [8, 32], strides = [1, 1]} : vector<8x128xf32> to vector<8x32xf32>
    %388 = math.tanh %387 : vector<8x32xf32>
    %389 = vector.extract_strided_slice %386 {offsets = [0, 0], sizes = [8, 32], strides = [1, 1]} : vector<8x96xf32> to vector<8x32xf32>
    %390 = vector.extract_strided_slice %386 {offsets = [0, 32], sizes = [8, 32], strides = [1, 1]} : vector<8x96xf32> to vector<8x32xf32>
    %391 = vector.extract_strided_slice %386 {offsets = [0, 64], sizes = [8, 32], strides = [1, 1]} : vector<8x96xf32> to vector<8x32xf32>
    %392 = arith.mulf %390, %375 : vector<8x32xf32>
    %393 = arith.mulf %389, %388 : vector<8x32xf32>
    %394 = arith.addf %392, %393 : vector<8x32xf32>
    %395 = math.tanh %394 : vector<8x32xf32>
    %396 = arith.mulf %391, %395 : vector<8x32xf32>
    %c160 = arith.constant 160 : index
    %c0_79 = arith.constant 0 : index
    %397 = vector.load %arg10[%c160, %c0_79] : memref<320x256xf32, #tpu.memory_space<vmem>>, vector<8x128xf32>
    %cst_80 = arith.constant dense<0.000000e+00> : vector<8x128xf32>
    %398 = tpu.matmul %396, %14, %cst_80 {dimension_numbers = #tpu.dot_dimension_numbers<[1], [0], [0], [1], [0, 0, 1, 1], [], []>} : vector<8x32xf32>, vector<32x128xf32>, vector<8x128xf32> -> vector<8x128xf32>
    %399 = arith.addf %397, %398 : vector<8x128xf32>
    %400 = vector.extract_strided_slice %399 {offsets = [0, 0], sizes = [8, 96], strides = [1, 1]} : vector<8x128xf32> to vector<8x96xf32>
    %401 = arith.negf %400 : vector<8x96xf32>
    %402 = math.exp %401 : vector<8x96xf32>
    %cst_81 = arith.constant 1.000000e+00 : f32
    %403 = vector.broadcast %cst_81 : f32 to vector<8x96xf32>
    %404 = arith.addf %403, %402 : vector<8x96xf32>
    %405 = arith.divf %403, %404 : vector<8x96xf32>
    %406 = vector.extract_strided_slice %399 {offsets = [0, 96], sizes = [8, 32], strides = [1, 1]} : vector<8x128xf32> to vector<8x32xf32>
    %407 = math.tanh %406 : vector<8x32xf32>
    %408 = vector.extract_strided_slice %405 {offsets = [0, 0], sizes = [8, 32], strides = [1, 1]} : vector<8x96xf32> to vector<8x32xf32>
    %409 = vector.extract_strided_slice %405 {offsets = [0, 32], sizes = [8, 32], strides = [1, 1]} : vector<8x96xf32> to vector<8x32xf32>
    %410 = vector.extract_strided_slice %405 {offsets = [0, 64], sizes = [8, 32], strides = [1, 1]} : vector<8x96xf32> to vector<8x32xf32>
    %411 = arith.mulf %409, %394 : vector<8x32xf32>
    %412 = arith.mulf %408, %407 : vector<8x32xf32>
    %413 = arith.addf %411, %412 : vector<8x32xf32>
    %414 = math.tanh %413 : vector<8x32xf32>
    %415 = arith.mulf %410, %414 : vector<8x32xf32>
    %c168 = arith.constant 168 : index
    %c0_82 = arith.constant 0 : index
    %416 = vector.load %arg10[%c168, %c0_82] : memref<320x256xf32, #tpu.memory_space<vmem>>, vector<8x128xf32>
    %cst_83 = arith.constant dense<0.000000e+00> : vector<8x128xf32>
    %417 = tpu.matmul %415, %14, %cst_83 {dimension_numbers = #tpu.dot_dimension_numbers<[1], [0], [0], [1], [0, 0, 1, 1], [], []>} : vector<8x32xf32>, vector<32x128xf32>, vector<8x128xf32> -> vector<8x128xf32>
    %418 = arith.addf %416, %417 : vector<8x128xf32>
    %419 = vector.extract_strided_slice %418 {offsets = [0, 0], sizes = [8, 96], strides = [1, 1]} : vector<8x128xf32> to vector<8x96xf32>
    %420 = arith.negf %419 : vector<8x96xf32>
    %421 = math.exp %420 : vector<8x96xf32>
    %cst_84 = arith.constant 1.000000e+00 : f32
    %422 = vector.broadcast %cst_84 : f32 to vector<8x96xf32>
    %423 = arith.addf %422, %421 : vector<8x96xf32>
    %424 = arith.divf %422, %423 : vector<8x96xf32>
    %425 = vector.extract_strided_slice %418 {offsets = [0, 96], sizes = [8, 32], strides = [1, 1]} : vector<8x128xf32> to vector<8x32xf32>
    %426 = math.tanh %425 : vector<8x32xf32>
    %427 = vector.extract_strided_slice %424 {offsets = [0, 0], sizes = [8, 32], strides = [1, 1]} : vector<8x96xf32> to vector<8x32xf32>
    %428 = vector.extract_strided_slice %424 {offsets = [0, 32], sizes = [8, 32], strides = [1, 1]} : vector<8x96xf32> to vector<8x32xf32>
    %429 = vector.extract_strided_slice %424 {offsets = [0, 64], sizes = [8, 32], strides = [1, 1]} : vector<8x96xf32> to vector<8x32xf32>
    %430 = arith.mulf %428, %413 : vector<8x32xf32>
    %431 = arith.mulf %427, %426 : vector<8x32xf32>
    %432 = arith.addf %430, %431 : vector<8x32xf32>
    %433 = math.tanh %432 : vector<8x32xf32>
    %434 = arith.mulf %429, %433 : vector<8x32xf32>
    %c176 = arith.constant 176 : index
    %c0_85 = arith.constant 0 : index
    %435 = vector.load %arg10[%c176, %c0_85] : memref<320x256xf32, #tpu.memory_space<vmem>>, vector<8x128xf32>
    %cst_86 = arith.constant dense<0.000000e+00> : vector<8x128xf32>
    %436 = tpu.matmul %434, %14, %cst_86 {dimension_numbers = #tpu.dot_dimension_numbers<[1], [0], [0], [1], [0, 0, 1, 1], [], []>} : vector<8x32xf32>, vector<32x128xf32>, vector<8x128xf32> -> vector<8x128xf32>
    %437 = arith.addf %435, %436 : vector<8x128xf32>
    %438 = vector.extract_strided_slice %437 {offsets = [0, 0], sizes = [8, 96], strides = [1, 1]} : vector<8x128xf32> to vector<8x96xf32>
    %439 = arith.negf %438 : vector<8x96xf32>
    %440 = math.exp %439 : vector<8x96xf32>
    %cst_87 = arith.constant 1.000000e+00 : f32
    %441 = vector.broadcast %cst_87 : f32 to vector<8x96xf32>
    %442 = arith.addf %441, %440 : vector<8x96xf32>
    %443 = arith.divf %441, %442 : vector<8x96xf32>
    %444 = vector.extract_strided_slice %437 {offsets = [0, 96], sizes = [8, 32], strides = [1, 1]} : vector<8x128xf32> to vector<8x32xf32>
    %445 = math.tanh %444 : vector<8x32xf32>
    %446 = vector.extract_strided_slice %443 {offsets = [0, 0], sizes = [8, 32], strides = [1, 1]} : vector<8x96xf32> to vector<8x32xf32>
    %447 = vector.extract_strided_slice %443 {offsets = [0, 32], sizes = [8, 32], strides = [1, 1]} : vector<8x96xf32> to vector<8x32xf32>
    %448 = vector.extract_strided_slice %443 {offsets = [0, 64], sizes = [8, 32], strides = [1, 1]} : vector<8x96xf32> to vector<8x32xf32>
    %449 = arith.mulf %447, %432 : vector<8x32xf32>
    %450 = arith.mulf %446, %445 : vector<8x32xf32>
    %451 = arith.addf %449, %450 : vector<8x32xf32>
    %452 = math.tanh %451 : vector<8x32xf32>
    %453 = arith.mulf %448, %452 : vector<8x32xf32>
    %c184 = arith.constant 184 : index
    %c0_88 = arith.constant 0 : index
    %454 = vector.load %arg10[%c184, %c0_88] : memref<320x256xf32, #tpu.memory_space<vmem>>, vector<8x128xf32>
    %cst_89 = arith.constant dense<0.000000e+00> : vector<8x128xf32>
    %455 = tpu.matmul %453, %14, %cst_89 {dimension_numbers = #tpu.dot_dimension_numbers<[1], [0], [0], [1], [0, 0, 1, 1], [], []>} : vector<8x32xf32>, vector<32x128xf32>, vector<8x128xf32> -> vector<8x128xf32>
    %456 = arith.addf %454, %455 : vector<8x128xf32>
    %457 = vector.extract_strided_slice %456 {offsets = [0, 0], sizes = [8, 96], strides = [1, 1]} : vector<8x128xf32> to vector<8x96xf32>
    %458 = arith.negf %457 : vector<8x96xf32>
    %459 = math.exp %458 : vector<8x96xf32>
    %cst_90 = arith.constant 1.000000e+00 : f32
    %460 = vector.broadcast %cst_90 : f32 to vector<8x96xf32>
    %461 = arith.addf %460, %459 : vector<8x96xf32>
    %462 = arith.divf %460, %461 : vector<8x96xf32>
    %463 = vector.extract_strided_slice %456 {offsets = [0, 96], sizes = [8, 32], strides = [1, 1]} : vector<8x128xf32> to vector<8x32xf32>
    %464 = math.tanh %463 : vector<8x32xf32>
    %465 = vector.extract_strided_slice %462 {offsets = [0, 0], sizes = [8, 32], strides = [1, 1]} : vector<8x96xf32> to vector<8x32xf32>
    %466 = vector.extract_strided_slice %462 {offsets = [0, 32], sizes = [8, 32], strides = [1, 1]} : vector<8x96xf32> to vector<8x32xf32>
    %467 = vector.extract_strided_slice %462 {offsets = [0, 64], sizes = [8, 32], strides = [1, 1]} : vector<8x96xf32> to vector<8x32xf32>
    %468 = arith.mulf %466, %451 : vector<8x32xf32>
    %469 = arith.mulf %465, %464 : vector<8x32xf32>
    %470 = arith.addf %468, %469 : vector<8x32xf32>
    %471 = math.tanh %470 : vector<8x32xf32>
    %472 = arith.mulf %467, %471 : vector<8x32xf32>
    %c192 = arith.constant 192 : index
    %c0_91 = arith.constant 0 : index
    %473 = vector.load %arg10[%c192, %c0_91] : memref<320x256xf32, #tpu.memory_space<vmem>>, vector<8x128xf32>
    %cst_92 = arith.constant dense<0.000000e+00> : vector<8x128xf32>
    %474 = tpu.matmul %472, %14, %cst_92 {dimension_numbers = #tpu.dot_dimension_numbers<[1], [0], [0], [1], [0, 0, 1, 1], [], []>} : vector<8x32xf32>, vector<32x128xf32>, vector<8x128xf32> -> vector<8x128xf32>
    %475 = arith.addf %473, %474 : vector<8x128xf32>
    %476 = vector.extract_strided_slice %475 {offsets = [0, 0], sizes = [8, 96], strides = [1, 1]} : vector<8x128xf32> to vector<8x96xf32>
    %477 = arith.negf %476 : vector<8x96xf32>
    %478 = math.exp %477 : vector<8x96xf32>
    %cst_93 = arith.constant 1.000000e+00 : f32
    %479 = vector.broadcast %cst_93 : f32 to vector<8x96xf32>
    %480 = arith.addf %479, %478 : vector<8x96xf32>
    %481 = arith.divf %479, %480 : vector<8x96xf32>
    %482 = vector.extract_strided_slice %475 {offsets = [0, 96], sizes = [8, 32], strides = [1, 1]} : vector<8x128xf32> to vector<8x32xf32>
    %483 = math.tanh %482 : vector<8x32xf32>
    %484 = vector.extract_strided_slice %481 {offsets = [0, 0], sizes = [8, 32], strides = [1, 1]} : vector<8x96xf32> to vector<8x32xf32>
    %485 = vector.extract_strided_slice %481 {offsets = [0, 32], sizes = [8, 32], strides = [1, 1]} : vector<8x96xf32> to vector<8x32xf32>
    %486 = vector.extract_strided_slice %481 {offsets = [0, 64], sizes = [8, 32], strides = [1, 1]} : vector<8x96xf32> to vector<8x32xf32>
    %487 = arith.mulf %485, %470 : vector<8x32xf32>
    %488 = arith.mulf %484, %483 : vector<8x32xf32>
    %489 = arith.addf %487, %488 : vector<8x32xf32>
    %490 = math.tanh %489 : vector<8x32xf32>
    %491 = arith.mulf %486, %490 : vector<8x32xf32>
    %c200 = arith.constant 200 : index
    %c0_94 = arith.constant 0 : index
    %492 = vector.load %arg10[%c200, %c0_94] : memref<320x256xf32, #tpu.memory_space<vmem>>, vector<8x128xf32>
    %cst_95 = arith.constant dense<0.000000e+00> : vector<8x128xf32>
    %493 = tpu.matmul %491, %14, %cst_95 {dimension_numbers = #tpu.dot_dimension_numbers<[1], [0], [0], [1], [0, 0, 1, 1], [], []>} : vector<8x32xf32>, vector<32x128xf32>, vector<8x128xf32> -> vector<8x128xf32>
    %494 = arith.addf %492, %493 : vector<8x128xf32>
    %495 = vector.extract_strided_slice %494 {offsets = [0, 0], sizes = [8, 96], strides = [1, 1]} : vector<8x128xf32> to vector<8x96xf32>
    %496 = arith.negf %495 : vector<8x96xf32>
    %497 = math.exp %496 : vector<8x96xf32>
    %cst_96 = arith.constant 1.000000e+00 : f32
    %498 = vector.broadcast %cst_96 : f32 to vector<8x96xf32>
    %499 = arith.addf %498, %497 : vector<8x96xf32>
    %500 = arith.divf %498, %499 : vector<8x96xf32>
    %501 = vector.extract_strided_slice %494 {offsets = [0, 96], sizes = [8, 32], strides = [1, 1]} : vector<8x128xf32> to vector<8x32xf32>
    %502 = math.tanh %501 : vector<8x32xf32>
    %503 = vector.extract_strided_slice %500 {offsets = [0, 0], sizes = [8, 32], strides = [1, 1]} : vector<8x96xf32> to vector<8x32xf32>
    %504 = vector.extract_strided_slice %500 {offsets = [0, 32], sizes = [8, 32], strides = [1, 1]} : vector<8x96xf32> to vector<8x32xf32>
    %505 = vector.extract_strided_slice %500 {offsets = [0, 64], sizes = [8, 32], strides = [1, 1]} : vector<8x96xf32> to vector<8x32xf32>
    %506 = arith.mulf %504, %489 : vector<8x32xf32>
    %507 = arith.mulf %503, %502 : vector<8x32xf32>
    %508 = arith.addf %506, %507 : vector<8x32xf32>
    %509 = math.tanh %508 : vector<8x32xf32>
    %510 = arith.mulf %505, %509 : vector<8x32xf32>
    %c208 = arith.constant 208 : index
    %c0_97 = arith.constant 0 : index
    %511 = vector.load %arg10[%c208, %c0_97] : memref<320x256xf32, #tpu.memory_space<vmem>>, vector<8x128xf32>
    %cst_98 = arith.constant dense<0.000000e+00> : vector<8x128xf32>
    %512 = tpu.matmul %510, %14, %cst_98 {dimension_numbers = #tpu.dot_dimension_numbers<[1], [0], [0], [1], [0, 0, 1, 1], [], []>} : vector<8x32xf32>, vector<32x128xf32>, vector<8x128xf32> -> vector<8x128xf32>
    %513 = arith.addf %511, %512 : vector<8x128xf32>
    %514 = vector.extract_strided_slice %513 {offsets = [0, 0], sizes = [8, 96], strides = [1, 1]} : vector<8x128xf32> to vector<8x96xf32>
    %515 = arith.negf %514 : vector<8x96xf32>
    %516 = math.exp %515 : vector<8x96xf32>
    %cst_99 = arith.constant 1.000000e+00 : f32
    %517 = vector.broadcast %cst_99 : f32 to vector<8x96xf32>
    %518 = arith.addf %517, %516 : vector<8x96xf32>
    %519 = arith.divf %517, %518 : vector<8x96xf32>
    %520 = vector.extract_strided_slice %513 {offsets = [0, 96], sizes = [8, 32], strides = [1, 1]} : vector<8x128xf32> to vector<8x32xf32>
    %521 = math.tanh %520 : vector<8x32xf32>
    %522 = vector.extract_strided_slice %519 {offsets = [0, 0], sizes = [8, 32], strides = [1, 1]} : vector<8x96xf32> to vector<8x32xf32>
    %523 = vector.extract_strided_slice %519 {offsets = [0, 32], sizes = [8, 32], strides = [1, 1]} : vector<8x96xf32> to vector<8x32xf32>
    %524 = vector.extract_strided_slice %519 {offsets = [0, 64], sizes = [8, 32], strides = [1, 1]} : vector<8x96xf32> to vector<8x32xf32>
    %525 = arith.mulf %523, %508 : vector<8x32xf32>
    %526 = arith.mulf %522, %521 : vector<8x32xf32>
    %527 = arith.addf %525, %526 : vector<8x32xf32>
    %528 = math.tanh %527 : vector<8x32xf32>
    %529 = arith.mulf %524, %528 : vector<8x32xf32>
    %c216 = arith.constant 216 : index
    %c0_100 = arith.constant 0 : index
    %530 = vector.load %arg10[%c216, %c0_100] : memref<320x256xf32, #tpu.memory_space<vmem>>, vector<8x128xf32>
    %cst_101 = arith.constant dense<0.000000e+00> : vector<8x128xf32>
    %531 = tpu.matmul %529, %14, %cst_101 {dimension_numbers = #tpu.dot_dimension_numbers<[1], [0], [0], [1], [0, 0, 1, 1], [], []>} : vector<8x32xf32>, vector<32x128xf32>, vector<8x128xf32> -> vector<8x128xf32>
    %532 = arith.addf %530, %531 : vector<8x128xf32>
    %533 = vector.extract_strided_slice %532 {offsets = [0, 0], sizes = [8, 96], strides = [1, 1]} : vector<8x128xf32> to vector<8x96xf32>
    %534 = arith.negf %533 : vector<8x96xf32>
    %535 = math.exp %534 : vector<8x96xf32>
    %cst_102 = arith.constant 1.000000e+00 : f32
    %536 = vector.broadcast %cst_102 : f32 to vector<8x96xf32>
    %537 = arith.addf %536, %535 : vector<8x96xf32>
    %538 = arith.divf %536, %537 : vector<8x96xf32>
    %539 = vector.extract_strided_slice %532 {offsets = [0, 96], sizes = [8, 32], strides = [1, 1]} : vector<8x128xf32> to vector<8x32xf32>
    %540 = math.tanh %539 : vector<8x32xf32>
    %541 = vector.extract_strided_slice %538 {offsets = [0, 0], sizes = [8, 32], strides = [1, 1]} : vector<8x96xf32> to vector<8x32xf32>
    %542 = vector.extract_strided_slice %538 {offsets = [0, 32], sizes = [8, 32], strides = [1, 1]} : vector<8x96xf32> to vector<8x32xf32>
    %543 = vector.extract_strided_slice %538 {offsets = [0, 64], sizes = [8, 32], strides = [1, 1]} : vector<8x96xf32> to vector<8x32xf32>
    %544 = arith.mulf %542, %527 : vector<8x32xf32>
    %545 = arith.mulf %541, %540 : vector<8x32xf32>
    %546 = arith.addf %544, %545 : vector<8x32xf32>
    %547 = math.tanh %546 : vector<8x32xf32>
    %548 = arith.mulf %543, %547 : vector<8x32xf32>
    %c224 = arith.constant 224 : index
    %c0_103 = arith.constant 0 : index
    %549 = vector.load %arg10[%c224, %c0_103] : memref<320x256xf32, #tpu.memory_space<vmem>>, vector<8x128xf32>
    %cst_104 = arith.constant dense<0.000000e+00> : vector<8x128xf32>
    %550 = tpu.matmul %548, %14, %cst_104 {dimension_numbers = #tpu.dot_dimension_numbers<[1], [0], [0], [1], [0, 0, 1, 1], [], []>} : vector<8x32xf32>, vector<32x128xf32>, vector<8x128xf32> -> vector<8x128xf32>
    %551 = arith.addf %549, %550 : vector<8x128xf32>
    %552 = vector.extract_strided_slice %551 {offsets = [0, 0], sizes = [8, 96], strides = [1, 1]} : vector<8x128xf32> to vector<8x96xf32>
    %553 = arith.negf %552 : vector<8x96xf32>
    %554 = math.exp %553 : vector<8x96xf32>
    %cst_105 = arith.constant 1.000000e+00 : f32
    %555 = vector.broadcast %cst_105 : f32 to vector<8x96xf32>
    %556 = arith.addf %555, %554 : vector<8x96xf32>
    %557 = arith.divf %555, %556 : vector<8x96xf32>
    %558 = vector.extract_strided_slice %551 {offsets = [0, 96], sizes = [8, 32], strides = [1, 1]} : vector<8x128xf32> to vector<8x32xf32>
    %559 = math.tanh %558 : vector<8x32xf32>
    %560 = vector.extract_strided_slice %557 {offsets = [0, 0], sizes = [8, 32], strides = [1, 1]} : vector<8x96xf32> to vector<8x32xf32>
    %561 = vector.extract_strided_slice %557 {offsets = [0, 32], sizes = [8, 32], strides = [1, 1]} : vector<8x96xf32> to vector<8x32xf32>
    %562 = vector.extract_strided_slice %557 {offsets = [0, 64], sizes = [8, 32], strides = [1, 1]} : vector<8x96xf32> to vector<8x32xf32>
    %563 = arith.mulf %561, %546 : vector<8x32xf32>
    %564 = arith.mulf %560, %559 : vector<8x32xf32>
    %565 = arith.addf %563, %564 : vector<8x32xf32>
    %566 = math.tanh %565 : vector<8x32xf32>
    %567 = arith.mulf %562, %566 : vector<8x32xf32>
    %c232 = arith.constant 232 : index
    %c0_106 = arith.constant 0 : index
    %568 = vector.load %arg10[%c232, %c0_106] : memref<320x256xf32, #tpu.memory_space<vmem>>, vector<8x128xf32>
    %cst_107 = arith.constant dense<0.000000e+00> : vector<8x128xf32>
    %569 = tpu.matmul %567, %14, %cst_107 {dimension_numbers = #tpu.dot_dimension_numbers<[1], [0], [0], [1], [0, 0, 1, 1], [], []>} : vector<8x32xf32>, vector<32x128xf32>, vector<8x128xf32> -> vector<8x128xf32>
    %570 = arith.addf %568, %569 : vector<8x128xf32>
    %571 = vector.extract_strided_slice %570 {offsets = [0, 0], sizes = [8, 96], strides = [1, 1]} : vector<8x128xf32> to vector<8x96xf32>
    %572 = arith.negf %571 : vector<8x96xf32>
    %573 = math.exp %572 : vector<8x96xf32>
    %cst_108 = arith.constant 1.000000e+00 : f32
    %574 = vector.broadcast %cst_108 : f32 to vector<8x96xf32>
    %575 = arith.addf %574, %573 : vector<8x96xf32>
    %576 = arith.divf %574, %575 : vector<8x96xf32>
    %577 = vector.extract_strided_slice %570 {offsets = [0, 96], sizes = [8, 32], strides = [1, 1]} : vector<8x128xf32> to vector<8x32xf32>
    %578 = math.tanh %577 : vector<8x32xf32>
    %579 = vector.extract_strided_slice %576 {offsets = [0, 0], sizes = [8, 32], strides = [1, 1]} : vector<8x96xf32> to vector<8x32xf32>
    %580 = vector.extract_strided_slice %576 {offsets = [0, 32], sizes = [8, 32], strides = [1, 1]} : vector<8x96xf32> to vector<8x32xf32>
    %581 = vector.extract_strided_slice %576 {offsets = [0, 64], sizes = [8, 32], strides = [1, 1]} : vector<8x96xf32> to vector<8x32xf32>
    %582 = arith.mulf %580, %565 : vector<8x32xf32>
    %583 = arith.mulf %579, %578 : vector<8x32xf32>
    %584 = arith.addf %582, %583 : vector<8x32xf32>
    %585 = math.tanh %584 : vector<8x32xf32>
    %586 = arith.mulf %581, %585 : vector<8x32xf32>
    %c240 = arith.constant 240 : index
    %c0_109 = arith.constant 0 : index
    %587 = vector.load %arg10[%c240, %c0_109] : memref<320x256xf32, #tpu.memory_space<vmem>>, vector<8x128xf32>
    %cst_110 = arith.constant dense<0.000000e+00> : vector<8x128xf32>
    %588 = tpu.matmul %586, %14, %cst_110 {dimension_numbers = #tpu.dot_dimension_numbers<[1], [0], [0], [1], [0, 0, 1, 1], [], []>} : vector<8x32xf32>, vector<32x128xf32>, vector<8x128xf32> -> vector<8x128xf32>
    %589 = arith.addf %587, %588 : vector<8x128xf32>
    %590 = vector.extract_strided_slice %589 {offsets = [0, 0], sizes = [8, 96], strides = [1, 1]} : vector<8x128xf32> to vector<8x96xf32>
    %591 = arith.negf %590 : vector<8x96xf32>
    %592 = math.exp %591 : vector<8x96xf32>
    %cst_111 = arith.constant 1.000000e+00 : f32
    %593 = vector.broadcast %cst_111 : f32 to vector<8x96xf32>
    %594 = arith.addf %593, %592 : vector<8x96xf32>
    %595 = arith.divf %593, %594 : vector<8x96xf32>
    %596 = vector.extract_strided_slice %589 {offsets = [0, 96], sizes = [8, 32], strides = [1, 1]} : vector<8x128xf32> to vector<8x32xf32>
    %597 = math.tanh %596 : vector<8x32xf32>
    %598 = vector.extract_strided_slice %595 {offsets = [0, 0], sizes = [8, 32], strides = [1, 1]} : vector<8x96xf32> to vector<8x32xf32>
    %599 = vector.extract_strided_slice %595 {offsets = [0, 32], sizes = [8, 32], strides = [1, 1]} : vector<8x96xf32> to vector<8x32xf32>
    %600 = vector.extract_strided_slice %595 {offsets = [0, 64], sizes = [8, 32], strides = [1, 1]} : vector<8x96xf32> to vector<8x32xf32>
    %601 = arith.mulf %599, %584 : vector<8x32xf32>
    %602 = arith.mulf %598, %597 : vector<8x32xf32>
    %603 = arith.addf %601, %602 : vector<8x32xf32>
    %604 = math.tanh %603 : vector<8x32xf32>
    %605 = arith.mulf %600, %604 : vector<8x32xf32>
    %c248 = arith.constant 248 : index
    %c0_112 = arith.constant 0 : index
    %606 = vector.load %arg10[%c248, %c0_112] : memref<320x256xf32, #tpu.memory_space<vmem>>, vector<8x128xf32>
    %cst_113 = arith.constant dense<0.000000e+00> : vector<8x128xf32>
    %607 = tpu.matmul %605, %14, %cst_113 {dimension_numbers = #tpu.dot_dimension_numbers<[1], [0], [0], [1], [0, 0, 1, 1], [], []>} : vector<8x32xf32>, vector<32x128xf32>, vector<8x128xf32> -> vector<8x128xf32>
    %608 = arith.addf %606, %607 : vector<8x128xf32>
    %609 = vector.extract_strided_slice %608 {offsets = [0, 0], sizes = [8, 96], strides = [1, 1]} : vector<8x128xf32> to vector<8x96xf32>
    %610 = arith.negf %609 : vector<8x96xf32>
    %611 = math.exp %610 : vector<8x96xf32>
    %cst_114 = arith.constant 1.000000e+00 : f32
    %612 = vector.broadcast %cst_114 : f32 to vector<8x96xf32>
    %613 = arith.addf %612, %611 : vector<8x96xf32>
    %614 = arith.divf %612, %613 : vector<8x96xf32>
    %615 = vector.extract_strided_slice %608 {offsets = [0, 96], sizes = [8, 32], strides = [1, 1]} : vector<8x128xf32> to vector<8x32xf32>
    %616 = math.tanh %615 : vector<8x32xf32>
    %617 = vector.extract_strided_slice %614 {offsets = [0, 0], sizes = [8, 32], strides = [1, 1]} : vector<8x96xf32> to vector<8x32xf32>
    %618 = vector.extract_strided_slice %614 {offsets = [0, 32], sizes = [8, 32], strides = [1, 1]} : vector<8x96xf32> to vector<8x32xf32>
    %619 = vector.extract_strided_slice %614 {offsets = [0, 64], sizes = [8, 32], strides = [1, 1]} : vector<8x96xf32> to vector<8x32xf32>
    %620 = arith.mulf %618, %603 : vector<8x32xf32>
    %621 = arith.mulf %617, %616 : vector<8x32xf32>
    %622 = arith.addf %620, %621 : vector<8x32xf32>
    %623 = math.tanh %622 : vector<8x32xf32>
    %624 = arith.mulf %619, %623 : vector<8x32xf32>
    %c256 = arith.constant 256 : index
    %c0_115 = arith.constant 0 : index
    %625 = vector.load %arg10[%c256, %c0_115] : memref<320x256xf32, #tpu.memory_space<vmem>>, vector<8x128xf32>
    %cst_116 = arith.constant dense<0.000000e+00> : vector<8x128xf32>
    %626 = tpu.matmul %624, %14, %cst_116 {dimension_numbers = #tpu.dot_dimension_numbers<[1], [0], [0], [1], [0, 0, 1, 1], [], []>} : vector<8x32xf32>, vector<32x128xf32>, vector<8x128xf32> -> vector<8x128xf32>
    %627 = arith.addf %625, %626 : vector<8x128xf32>
    %628 = vector.extract_strided_slice %627 {offsets = [0, 0], sizes = [8, 96], strides = [1, 1]} : vector<8x128xf32> to vector<8x96xf32>
    %629 = arith.negf %628 : vector<8x96xf32>
    %630 = math.exp %629 : vector<8x96xf32>
    %cst_117 = arith.constant 1.000000e+00 : f32
    %631 = vector.broadcast %cst_117 : f32 to vector<8x96xf32>
    %632 = arith.addf %631, %630 : vector<8x96xf32>
    %633 = arith.divf %631, %632 : vector<8x96xf32>
    %634 = vector.extract_strided_slice %627 {offsets = [0, 96], sizes = [8, 32], strides = [1, 1]} : vector<8x128xf32> to vector<8x32xf32>
    %635 = math.tanh %634 : vector<8x32xf32>
    %636 = vector.extract_strided_slice %633 {offsets = [0, 0], sizes = [8, 32], strides = [1, 1]} : vector<8x96xf32> to vector<8x32xf32>
    %637 = vector.extract_strided_slice %633 {offsets = [0, 32], sizes = [8, 32], strides = [1, 1]} : vector<8x96xf32> to vector<8x32xf32>
    %638 = vector.extract_strided_slice %633 {offsets = [0, 64], sizes = [8, 32], strides = [1, 1]} : vector<8x96xf32> to vector<8x32xf32>
    %639 = arith.mulf %637, %622 : vector<8x32xf32>
    %640 = arith.mulf %636, %635 : vector<8x32xf32>
    %641 = arith.addf %639, %640 : vector<8x32xf32>
    %642 = math.tanh %641 : vector<8x32xf32>
    %643 = arith.mulf %638, %642 : vector<8x32xf32>
    %c264 = arith.constant 264 : index
    %c0_118 = arith.constant 0 : index
    %644 = vector.load %arg10[%c264, %c0_118] : memref<320x256xf32, #tpu.memory_space<vmem>>, vector<8x128xf32>
    %cst_119 = arith.constant dense<0.000000e+00> : vector<8x128xf32>
    %645 = tpu.matmul %643, %14, %cst_119 {dimension_numbers = #tpu.dot_dimension_numbers<[1], [0], [0], [1], [0, 0, 1, 1], [], []>} : vector<8x32xf32>, vector<32x128xf32>, vector<8x128xf32> -> vector<8x128xf32>
    %646 = arith.addf %644, %645 : vector<8x128xf32>
    %647 = vector.extract_strided_slice %646 {offsets = [0, 0], sizes = [8, 96], strides = [1, 1]} : vector<8x128xf32> to vector<8x96xf32>
    %648 = arith.negf %647 : vector<8x96xf32>
    %649 = math.exp %648 : vector<8x96xf32>
    %cst_120 = arith.constant 1.000000e+00 : f32
    %650 = vector.broadcast %cst_120 : f32 to vector<8x96xf32>
    %651 = arith.addf %650, %649 : vector<8x96xf32>
    %652 = arith.divf %650, %651 : vector<8x96xf32>
    %653 = vector.extract_strided_slice %646 {offsets = [0, 96], sizes = [8, 32], strides = [1, 1]} : vector<8x128xf32> to vector<8x32xf32>
    %654 = math.tanh %653 : vector<8x32xf32>
    %655 = vector.extract_strided_slice %652 {offsets = [0, 0], sizes = [8, 32], strides = [1, 1]} : vector<8x96xf32> to vector<8x32xf32>
    %656 = vector.extract_strided_slice %652 {offsets = [0, 32], sizes = [8, 32], strides = [1, 1]} : vector<8x96xf32> to vector<8x32xf32>
    %657 = vector.extract_strided_slice %652 {offsets = [0, 64], sizes = [8, 32], strides = [1, 1]} : vector<8x96xf32> to vector<8x32xf32>
    %658 = arith.mulf %656, %641 : vector<8x32xf32>
    %659 = arith.mulf %655, %654 : vector<8x32xf32>
    %660 = arith.addf %658, %659 : vector<8x32xf32>
    %661 = math.tanh %660 : vector<8x32xf32>
    %662 = arith.mulf %657, %661 : vector<8x32xf32>
    %c272 = arith.constant 272 : index
    %c0_121 = arith.constant 0 : index
    %663 = vector.load %arg10[%c272, %c0_121] : memref<320x256xf32, #tpu.memory_space<vmem>>, vector<8x128xf32>
    %cst_122 = arith.constant dense<0.000000e+00> : vector<8x128xf32>
    %664 = tpu.matmul %662, %14, %cst_122 {dimension_numbers = #tpu.dot_dimension_numbers<[1], [0], [0], [1], [0, 0, 1, 1], [], []>} : vector<8x32xf32>, vector<32x128xf32>, vector<8x128xf32> -> vector<8x128xf32>
    %665 = arith.addf %663, %664 : vector<8x128xf32>
    %666 = vector.extract_strided_slice %665 {offsets = [0, 0], sizes = [8, 96], strides = [1, 1]} : vector<8x128xf32> to vector<8x96xf32>
    %667 = arith.negf %666 : vector<8x96xf32>
    %668 = math.exp %667 : vector<8x96xf32>
    %cst_123 = arith.constant 1.000000e+00 : f32
    %669 = vector.broadcast %cst_123 : f32 to vector<8x96xf32>
    %670 = arith.addf %669, %668 : vector<8x96xf32>
    %671 = arith.divf %669, %670 : vector<8x96xf32>
    %672 = vector.extract_strided_slice %665 {offsets = [0, 96], sizes = [8, 32], strides = [1, 1]} : vector<8x128xf32> to vector<8x32xf32>
    %673 = math.tanh %672 : vector<8x32xf32>
    %674 = vector.extract_strided_slice %671 {offsets = [0, 0], sizes = [8, 32], strides = [1, 1]} : vector<8x96xf32> to vector<8x32xf32>
    %675 = vector.extract_strided_slice %671 {offsets = [0, 32], sizes = [8, 32], strides = [1, 1]} : vector<8x96xf32> to vector<8x32xf32>
    %676 = vector.extract_strided_slice %671 {offsets = [0, 64], sizes = [8, 32], strides = [1, 1]} : vector<8x96xf32> to vector<8x32xf32>
    %677 = arith.mulf %675, %660 : vector<8x32xf32>
    %678 = arith.mulf %674, %673 : vector<8x32xf32>
    %679 = arith.addf %677, %678 : vector<8x32xf32>
    %680 = math.tanh %679 : vector<8x32xf32>
    %681 = arith.mulf %676, %680 : vector<8x32xf32>
    %c280 = arith.constant 280 : index
    %c0_124 = arith.constant 0 : index
    %682 = vector.load %arg10[%c280, %c0_124] : memref<320x256xf32, #tpu.memory_space<vmem>>, vector<8x128xf32>
    %cst_125 = arith.constant dense<0.000000e+00> : vector<8x128xf32>
    %683 = tpu.matmul %681, %14, %cst_125 {dimension_numbers = #tpu.dot_dimension_numbers<[1], [0], [0], [1], [0, 0, 1, 1], [], []>} : vector<8x32xf32>, vector<32x128xf32>, vector<8x128xf32> -> vector<8x128xf32>
    %684 = arith.addf %682, %683 : vector<8x128xf32>
    %685 = vector.extract_strided_slice %684 {offsets = [0, 0], sizes = [8, 96], strides = [1, 1]} : vector<8x128xf32> to vector<8x96xf32>
    %686 = arith.negf %685 : vector<8x96xf32>
    %687 = math.exp %686 : vector<8x96xf32>
    %cst_126 = arith.constant 1.000000e+00 : f32
    %688 = vector.broadcast %cst_126 : f32 to vector<8x96xf32>
    %689 = arith.addf %688, %687 : vector<8x96xf32>
    %690 = arith.divf %688, %689 : vector<8x96xf32>
    %691 = vector.extract_strided_slice %684 {offsets = [0, 96], sizes = [8, 32], strides = [1, 1]} : vector<8x128xf32> to vector<8x32xf32>
    %692 = math.tanh %691 : vector<8x32xf32>
    %693 = vector.extract_strided_slice %690 {offsets = [0, 0], sizes = [8, 32], strides = [1, 1]} : vector<8x96xf32> to vector<8x32xf32>
    %694 = vector.extract_strided_slice %690 {offsets = [0, 32], sizes = [8, 32], strides = [1, 1]} : vector<8x96xf32> to vector<8x32xf32>
    %695 = vector.extract_strided_slice %690 {offsets = [0, 64], sizes = [8, 32], strides = [1, 1]} : vector<8x96xf32> to vector<8x32xf32>
    %696 = arith.mulf %694, %679 : vector<8x32xf32>
    %697 = arith.mulf %693, %692 : vector<8x32xf32>
    %698 = arith.addf %696, %697 : vector<8x32xf32>
    %699 = math.tanh %698 : vector<8x32xf32>
    %700 = arith.mulf %695, %699 : vector<8x32xf32>
    %c288 = arith.constant 288 : index
    %c0_127 = arith.constant 0 : index
    %701 = vector.load %arg10[%c288, %c0_127] : memref<320x256xf32, #tpu.memory_space<vmem>>, vector<8x128xf32>
    %cst_128 = arith.constant dense<0.000000e+00> : vector<8x128xf32>
    %702 = tpu.matmul %700, %14, %cst_128 {dimension_numbers = #tpu.dot_dimension_numbers<[1], [0], [0], [1], [0, 0, 1, 1], [], []>} : vector<8x32xf32>, vector<32x128xf32>, vector<8x128xf32> -> vector<8x128xf32>
    %703 = arith.addf %701, %702 : vector<8x128xf32>
    %704 = vector.extract_strided_slice %703 {offsets = [0, 0], sizes = [8, 96], strides = [1, 1]} : vector<8x128xf32> to vector<8x96xf32>
    %705 = arith.negf %704 : vector<8x96xf32>
    %706 = math.exp %705 : vector<8x96xf32>
    %cst_129 = arith.constant 1.000000e+00 : f32
    %707 = vector.broadcast %cst_129 : f32 to vector<8x96xf32>
    %708 = arith.addf %707, %706 : vector<8x96xf32>
    %709 = arith.divf %707, %708 : vector<8x96xf32>
    %710 = vector.extract_strided_slice %703 {offsets = [0, 96], sizes = [8, 32], strides = [1, 1]} : vector<8x128xf32> to vector<8x32xf32>
    %711 = math.tanh %710 : vector<8x32xf32>
    %712 = vector.extract_strided_slice %709 {offsets = [0, 0], sizes = [8, 32], strides = [1, 1]} : vector<8x96xf32> to vector<8x32xf32>
    %713 = vector.extract_strided_slice %709 {offsets = [0, 32], sizes = [8, 32], strides = [1, 1]} : vector<8x96xf32> to vector<8x32xf32>
    %714 = vector.extract_strided_slice %709 {offsets = [0, 64], sizes = [8, 32], strides = [1, 1]} : vector<8x96xf32> to vector<8x32xf32>
    %715 = arith.mulf %713, %698 : vector<8x32xf32>
    %716 = arith.mulf %712, %711 : vector<8x32xf32>
    %717 = arith.addf %715, %716 : vector<8x32xf32>
    %718 = math.tanh %717 : vector<8x32xf32>
    %719 = arith.mulf %714, %718 : vector<8x32xf32>
    %c312 = arith.constant 312 : index
    %c128_130 = arith.constant 128 : index
    %720 = vector.load %arg10[%c312, %c128_130] : memref<320x256xf32, #tpu.memory_space<vmem>>, vector<8x128xf32>
    %cst_131 = arith.constant dense<0.000000e+00> : vector<8x128xf32>
    %721 = tpu.matmul %16, %15, %cst_131 {dimension_numbers = #tpu.dot_dimension_numbers<[1], [0], [0], [1], [0, 0, 1, 1], [], []>} : vector<8x32xf32>, vector<32x128xf32>, vector<8x128xf32> -> vector<8x128xf32>
    %722 = arith.addf %720, %721 : vector<8x128xf32>
    %723 = vector.extract_strided_slice %722 {offsets = [0, 0], sizes = [8, 96], strides = [1, 1]} : vector<8x128xf32> to vector<8x96xf32>
    %724 = arith.negf %723 : vector<8x96xf32>
    %725 = math.exp %724 : vector<8x96xf32>
    %cst_132 = arith.constant 1.000000e+00 : f32
    %726 = vector.broadcast %cst_132 : f32 to vector<8x96xf32>
    %727 = arith.addf %726, %725 : vector<8x96xf32>
    %728 = arith.divf %726, %727 : vector<8x96xf32>
    %729 = vector.extract_strided_slice %722 {offsets = [0, 96], sizes = [8, 32], strides = [1, 1]} : vector<8x128xf32> to vector<8x32xf32>
    %730 = math.tanh %729 : vector<8x32xf32>
    %731 = vector.extract_strided_slice %728 {offsets = [0, 0], sizes = [8, 32], strides = [1, 1]} : vector<8x96xf32> to vector<8x32xf32>
    %732 = vector.extract_strided_slice %728 {offsets = [0, 32], sizes = [8, 32], strides = [1, 1]} : vector<8x96xf32> to vector<8x32xf32>
    %733 = vector.extract_strided_slice %728 {offsets = [0, 64], sizes = [8, 32], strides = [1, 1]} : vector<8x96xf32> to vector<8x32xf32>
    %734 = arith.mulf %732, %16 : vector<8x32xf32>
    %735 = arith.mulf %731, %730 : vector<8x32xf32>
    %736 = arith.addf %734, %735 : vector<8x32xf32>
    %737 = math.tanh %736 : vector<8x32xf32>
    %738 = arith.mulf %733, %737 : vector<8x32xf32>
    %c304 = arith.constant 304 : index
    %c128_133 = arith.constant 128 : index
    %739 = vector.load %arg10[%c304, %c128_133] : memref<320x256xf32, #tpu.memory_space<vmem>>, vector<8x128xf32>
    %cst_134 = arith.constant dense<0.000000e+00> : vector<8x128xf32>
    %740 = tpu.matmul %738, %15, %cst_134 {dimension_numbers = #tpu.dot_dimension_numbers<[1], [0], [0], [1], [0, 0, 1, 1], [], []>} : vector<8x32xf32>, vector<32x128xf32>, vector<8x128xf32> -> vector<8x128xf32>
    %741 = arith.addf %739, %740 : vector<8x128xf32>
    %742 = vector.extract_strided_slice %741 {offsets = [0, 0], sizes = [8, 96], strides = [1, 1]} : vector<8x128xf32> to vector<8x96xf32>
    %743 = arith.negf %742 : vector<8x96xf32>
    %744 = math.exp %743 : vector<8x96xf32>
    %cst_135 = arith.constant 1.000000e+00 : f32
    %745 = vector.broadcast %cst_135 : f32 to vector<8x96xf32>
    %746 = arith.addf %745, %744 : vector<8x96xf32>
    %747 = arith.divf %745, %746 : vector<8x96xf32>
    %748 = vector.extract_strided_slice %741 {offsets = [0, 96], sizes = [8, 32], strides = [1, 1]} : vector<8x128xf32> to vector<8x32xf32>
    %749 = math.tanh %748 : vector<8x32xf32>
    %750 = vector.extract_strided_slice %747 {offsets = [0, 0], sizes = [8, 32], strides = [1, 1]} : vector<8x96xf32> to vector<8x32xf32>
    %751 = vector.extract_strided_slice %747 {offsets = [0, 32], sizes = [8, 32], strides = [1, 1]} : vector<8x96xf32> to vector<8x32xf32>
    %752 = vector.extract_strided_slice %747 {offsets = [0, 64], sizes = [8, 32], strides = [1, 1]} : vector<8x96xf32> to vector<8x32xf32>
    %753 = arith.mulf %751, %736 : vector<8x32xf32>
    %754 = arith.mulf %750, %749 : vector<8x32xf32>
    %755 = arith.addf %753, %754 : vector<8x32xf32>
    %756 = math.tanh %755 : vector<8x32xf32>
    %757 = arith.mulf %752, %756 : vector<8x32xf32>
    %c296 = arith.constant 296 : index
    %c128_136 = arith.constant 128 : index
    %758 = vector.load %arg10[%c296, %c128_136] : memref<320x256xf32, #tpu.memory_space<vmem>>, vector<8x128xf32>
    %cst_137 = arith.constant dense<0.000000e+00> : vector<8x128xf32>
    %759 = tpu.matmul %757, %15, %cst_137 {dimension_numbers = #tpu.dot_dimension_numbers<[1], [0], [0], [1], [0, 0, 1, 1], [], []>} : vector<8x32xf32>, vector<32x128xf32>, vector<8x128xf32> -> vector<8x128xf32>
    %760 = arith.addf %758, %759 : vector<8x128xf32>
    %761 = vector.extract_strided_slice %760 {offsets = [0, 0], sizes = [8, 96], strides = [1, 1]} : vector<8x128xf32> to vector<8x96xf32>
    %762 = arith.negf %761 : vector<8x96xf32>
    %763 = math.exp %762 : vector<8x96xf32>
    %cst_138 = arith.constant 1.000000e+00 : f32
    %764 = vector.broadcast %cst_138 : f32 to vector<8x96xf32>
    %765 = arith.addf %764, %763 : vector<8x96xf32>
    %766 = arith.divf %764, %765 : vector<8x96xf32>
    %767 = vector.extract_strided_slice %760 {offsets = [0, 96], sizes = [8, 32], strides = [1, 1]} : vector<8x128xf32> to vector<8x32xf32>
    %768 = math.tanh %767 : vector<8x32xf32>
    %769 = vector.extract_strided_slice %766 {offsets = [0, 0], sizes = [8, 32], strides = [1, 1]} : vector<8x96xf32> to vector<8x32xf32>
    %770 = vector.extract_strided_slice %766 {offsets = [0, 32], sizes = [8, 32], strides = [1, 1]} : vector<8x96xf32> to vector<8x32xf32>
    %771 = vector.extract_strided_slice %766 {offsets = [0, 64], sizes = [8, 32], strides = [1, 1]} : vector<8x96xf32> to vector<8x32xf32>
    %772 = arith.mulf %770, %755 : vector<8x32xf32>
    %773 = arith.mulf %769, %768 : vector<8x32xf32>
    %774 = arith.addf %772, %773 : vector<8x32xf32>
    %775 = math.tanh %774 : vector<8x32xf32>
    %776 = arith.mulf %771, %775 : vector<8x32xf32>
    %c288_139 = arith.constant 288 : index
    %c128_140 = arith.constant 128 : index
    %777 = vector.load %arg10[%c288_139, %c128_140] : memref<320x256xf32, #tpu.memory_space<vmem>>, vector<8x128xf32>
    %cst_141 = arith.constant dense<0.000000e+00> : vector<8x128xf32>
    %778 = tpu.matmul %776, %15, %cst_141 {dimension_numbers = #tpu.dot_dimension_numbers<[1], [0], [0], [1], [0, 0, 1, 1], [], []>} : vector<8x32xf32>, vector<32x128xf32>, vector<8x128xf32> -> vector<8x128xf32>
    %779 = arith.addf %777, %778 : vector<8x128xf32>
    %780 = vector.extract_strided_slice %779 {offsets = [0, 0], sizes = [8, 96], strides = [1, 1]} : vector<8x128xf32> to vector<8x96xf32>
    %781 = arith.negf %780 : vector<8x96xf32>
    %782 = math.exp %781 : vector<8x96xf32>
    %cst_142 = arith.constant 1.000000e+00 : f32
    %783 = vector.broadcast %cst_142 : f32 to vector<8x96xf32>
    %784 = arith.addf %783, %782 : vector<8x96xf32>
    %785 = arith.divf %783, %784 : vector<8x96xf32>
    %786 = vector.extract_strided_slice %779 {offsets = [0, 96], sizes = [8, 32], strides = [1, 1]} : vector<8x128xf32> to vector<8x32xf32>
    %787 = math.tanh %786 : vector<8x32xf32>
    %788 = vector.extract_strided_slice %785 {offsets = [0, 0], sizes = [8, 32], strides = [1, 1]} : vector<8x96xf32> to vector<8x32xf32>
    %789 = vector.extract_strided_slice %785 {offsets = [0, 32], sizes = [8, 32], strides = [1, 1]} : vector<8x96xf32> to vector<8x32xf32>
    %790 = vector.extract_strided_slice %785 {offsets = [0, 64], sizes = [8, 32], strides = [1, 1]} : vector<8x96xf32> to vector<8x32xf32>
    %791 = arith.mulf %789, %774 : vector<8x32xf32>
    %792 = arith.mulf %788, %787 : vector<8x32xf32>
    %793 = arith.addf %791, %792 : vector<8x32xf32>
    %794 = math.tanh %793 : vector<8x32xf32>
    %795 = arith.mulf %790, %794 : vector<8x32xf32>
    %796 = tpu.concatenate %719, %795 in 1 : vector<8x32xf32>, vector<8x32xf32> -> vector<8x64xf32>
    %c0_143 = arith.constant 0 : index
    %c0_144 = arith.constant 0 : index
    %797 = vector.load %arg7[%c0_143, %c0_144] : memref<64x15xf32, #tpu.memory_space<vmem>>, vector<64x15xf32>
    %cst_145 = arith.constant dense<0.000000e+00> : vector<8x15xf32>
    %798 = tpu.matmul %796, %797, %cst_145 {dimension_numbers = #tpu.dot_dimension_numbers<[1], [0], [0], [1], [0, 0, 1, 1], [], []>} : vector<8x64xf32>, vector<64x15xf32>, vector<8x15xf32> -> vector<8x15xf32>
    %c0_146 = arith.constant 0 : index
    %c0_147 = arith.constant 0 : index
    %799 = vector.load %arg8[%c0_146, %c0_147] : memref<1x15xf32, #tpu.memory_space<vmem>>, vector<1x15xf32>
    %800 = vector.broadcast %799 : vector<1x15xf32> to vector<8x15xf32>
    %801 = arith.addf %798, %800 : vector<8x15xf32>
    %802 = vector.extract_strided_slice %801 {offsets = [0, 0], sizes = [8, 12], strides = [1, 1]} : vector<8x15xf32> to vector<8x12xf32>
    %803 = vector.extract_strided_slice %801 {offsets = [0, 12], sizes = [8, 1], strides = [1, 1]} : vector<8x15xf32> to vector<8x1xf32>
    %804 = vector.extract_strided_slice %801 {offsets = [0, 13], sizes = [8, 1], strides = [1, 1]} : vector<8x15xf32> to vector<8x1xf32>
    %805 = vector.extract_strided_slice %801 {offsets = [0, 14], sizes = [8, 1], strides = [1, 1]} : vector<8x15xf32> to vector<8x1xf32>
    %806 = math.cos %803 : vector<8x1xf32>
    %807 = math.sin %803 : vector<8x1xf32>
    %808 = vector.extract_strided_slice %802 {offsets = [0, 1], sizes = [8, 11], strides = [1, 1]} : vector<8x12xf32> to vector<8x11xf32>
    %809 = vector.extract_strided_slice %802 {offsets = [0, 0], sizes = [8, 1], strides = [1, 1]} : vector<8x12xf32> to vector<8x1xf32>
    %810 = tpu.concatenate %808, %809 in 1 : vector<8x11xf32>, vector<8x1xf32> -> vector<8x12xf32>
    %811 = vector.extract_strided_slice %802 {offsets = [0, 11], sizes = [8, 1], strides = [1, 1]} : vector<8x12xf32> to vector<8x1xf32>
    %812 = vector.extract_strided_slice %802 {offsets = [0, 0], sizes = [8, 11], strides = [1, 1]} : vector<8x12xf32> to vector<8x11xf32>
    %813 = tpu.concatenate %811, %812 in 1 : vector<8x1xf32>, vector<8x11xf32> -> vector<8x12xf32>
    %814 = vector.broadcast %804 : vector<8x1xf32> to vector<8x12xf32>
    %815 = arith.subf %802, %814 : vector<8x12xf32>
    %816 = vector.broadcast %806 : vector<8x1xf32> to vector<8x12xf32>
    %817 = arith.mulf %816, %815 : vector<8x12xf32>
    %818 = arith.addf %802, %817 : vector<8x12xf32>
    %819 = vector.broadcast %805 : vector<8x1xf32> to vector<8x12xf32>
    %820 = arith.subf %810, %819 : vector<8x12xf32>
    %821 = vector.broadcast %807 : vector<8x1xf32> to vector<8x12xf32>
    %822 = arith.mulf %821, %820 : vector<8x12xf32>
    %823 = arith.subf %818, %822 : vector<8x12xf32>
    %824 = vector.broadcast %804 : vector<8x1xf32> to vector<8x12xf32>
    %825 = arith.subf %813, %824 : vector<8x12xf32>
    %826 = vector.broadcast %807 : vector<8x1xf32> to vector<8x12xf32>
    %827 = arith.mulf %826, %825 : vector<8x12xf32>
    %828 = arith.addf %802, %827 : vector<8x12xf32>
    %829 = vector.broadcast %805 : vector<8x1xf32> to vector<8x12xf32>
    %830 = arith.subf %802, %829 : vector<8x12xf32>
    %831 = vector.broadcast %806 : vector<8x1xf32> to vector<8x12xf32>
    %832 = arith.mulf %831, %830 : vector<8x12xf32>
    %833 = arith.addf %828, %832 : vector<8x12xf32>
    %834 = tpu.iota {dimensions = array<i32: 1>} : vector<8x12xi32>
    %c3_i32 = arith.constant 3 : i32
    %c0_i32 = arith.constant 0 : i32
    %835 = arith.cmpi eq, %c3_i32, %c0_i32 : i32
    %c1_i32 = arith.constant 1 : i32
    %836 = arith.select %835, %c1_i32, %c3_i32 : i32
    %837 = vector.broadcast %836 : i32 to vector<8x12xi32>
    %838 = arith.remsi %834, %837 : vector<8x12xi32>
    %c0_i32_148 = arith.constant 0 : i32
    %839 = vector.broadcast %c0_i32_148 : i32 to vector<8x12xi32>
    %840 = arith.cmpi ne, %838, %839 : vector<8x12xi32>
    %c0_i32_149 = arith.constant 0 : i32
    %841 = vector.broadcast %c0_i32_149 : i32 to vector<8x12xi32>
    %842 = arith.cmpi slt, %838, %841 : vector<8x12xi32>
    %c0_i32_150 = arith.constant 0 : i32
    %843 = arith.cmpi slt, %836, %c0_i32_150 : i32
    %844 = vector.broadcast %843 : i1 to vector<8x12xi1>
    %845 = vector.broadcast %844 : vector<8x12xi1> to vector<8x12xi1>
    %846 = arith.xori %842, %845 : vector<8x12xi1>
    %847 = arith.andi %846, %840 : vector<8x12xi1>
    %848 = vector.broadcast %836 : i32 to vector<8x12xi32>
    %849 = arith.addi %838, %848 : vector<8x12xi32>
    %850 = arith.select %847, %849, %838 : vector<8x12xi1>, vector<8x12xi32>
    %c0_i32_151 = arith.constant 0 : i32
    %851 = vector.broadcast %c0_i32_151 : i32 to vector<8x12xi32>
    %852 = arith.cmpi eq, %850, %851 : vector<8x12xi32>
    %c1_i32_152 = arith.constant 1 : i32
    %853 = vector.broadcast %c1_i32_152 : i32 to vector<8x12xi32>
    %854 = arith.cmpi eq, %850, %853 : vector<8x12xi32>
    %855 = arith.select %854, %833, %802 : vector<8x12xi1>, vector<8x12xf32>
    %856 = arith.select %852, %823, %855 : vector<8x12xi1>, vector<8x12xf32>
    %c0_153 = arith.constant 0 : index
    %c0_154 = arith.constant 0 : index
    %857 = vector.load %arg9[%c0_153, %c0_154] : memref<8x12xf32, #tpu.memory_space<vmem>>, vector<8x12xf32>
    tpu.vector_store %arg9[%c0_153, %c0_154], %856 {strides = array<i32>} : memref<8x12xf32, #tpu.memory_space<vmem>>, vector<8x12xf32>,
    return
  }
}

</mosaic_0001>

<llo_original>
// kernel: tpu_custom_call.1
$region0: #{tpu_custom_call.1}
  #allocation0 [shape = 'u32[]', space=smem, size = 0x4, offset = 0x4, fixed_abs, tag = 'smem constant byte address 0x4 - core index']
  #allocation1 [shape = 'u32[72,128]{1,0:T(1,128)}', space=vmem, size = 0x9000, scoped, tag = 'internal scratch']
  #allocation2 [shape = 'f32[320,256]{1,0:T(8,128)}', space=vmem, size = 0x50000, scoped, tag = 'scratch operand']
  %s0 = inlined_call_operand.vmem [shape: f32[320,12], index: 0, kind: input, shape index: {}]
  %s1 = inlined_call_operand.vmem [shape: f32[12,12], index: 1, kind: input, shape index: {}]
  %s2 = inlined_call_operand.vmem [shape: f32[1,12], index: 2, kind: input, shape index: {}]
  %s3 = inlined_call_operand.vmem [shape: f32[12,256], index: 3, kind: input, shape index: {}]
  %s4 = inlined_call_operand.vmem [shape: f32[1,256], index: 4, kind: input, shape index: {}]
  %s5 = inlined_call_operand.vmem [shape: f32[32,128], index: 5, kind: input, shape index: {}]
  %s6 = inlined_call_operand.vmem [shape: f32[32,128], index: 6, kind: input, shape index: {}]
  %s7 = inlined_call_operand.vmem [shape: f32[64,15], index: 7, kind: input, shape index: {}]
  %s8 = inlined_call_operand.vmem [shape: f32[1,15], index: 8, kind: input, shape index: {}]
  %s9 = inlined_call_operand.hbm [shape: f32[8,12], index: 9, kind: output, shape index: {}]
  %s10 = sld [smem:[#allocation0]]
  $region46: #{tpu_custom_call.1} parent=0
    _
  %s12 = ssub.s32 1, %s10
  %s13 = scalar_select 0, %s12, %s10
  $region1: #{tpu_custom_call.1} parent=0
    #allocation3 [shape = 'u8[4096]{0}', space=vmem, size = 0x1000, scoped, tag = 'output window, operand 0, single buffered']
    #allocation4 [shape = 's32[1]{0}', space=sflag, size = 0x4, scoped, tag = 'scoped memory for tpu_custom_call.1']
    %14 = vsyncpa [#allocation4], 0
    // Predicated region
    $region2: #{tpu_custom_call.1} parent=1 // pred_check
      _
    $region3: #{tpu_custom_call.1} parent=1 // pred_check_branch
      %16 = sbr.rel (0) target = $region5
    $region4: #{tpu_custom_call.1} parent=1 // pred_region
      _
    $region5: #{tpu_custom_call.1} parent=1 // pred_fallthru
      _
    // Predicated region
    $region6: #{tpu_custom_call.1} parent=1 // pred_check
      _
    $region7: #{tpu_custom_call.1} parent=1 // pred_check_branch
      %18 = sbr.rel (0) target = $region9
    $region8: #{tpu_custom_call.1} parent=1 // pred_region
      _
    $region9: #{tpu_custom_call.1} parent=1 // pred_fallthru
      _
    // Predicated region
    $region10: #{tpu_custom_call.1} parent=1 // pred_check
      _
    $region11: #{tpu_custom_call.1} parent=1 // pred_check_branch
      %20 = sbr.rel (0) target = $region13
    $region12: #{tpu_custom_call.1} parent=1 // pred_region
      _
    $region13: #{tpu_custom_call.1} parent=1 // pred_fallthru
      _
    // Predicated region
    $region14: #{tpu_custom_call.1} parent=1 // pred_check
      _
    $region15: #{tpu_custom_call.1} parent=1 // pred_check_branch
      %22 = sbr.rel (0) target = $region17
    $region16: #{tpu_custom_call.1} parent=1 // pred_region
      _
    $region17: #{tpu_custom_call.1} parent=1 // pred_fallthru
      _
    // Predicated region
    $region18: #{tpu_custom_call.1} parent=1 // pred_check
      _
    $region19: #{tpu_custom_call.1} parent=1 // pred_check_branch
      %24 = sbr.rel (0) target = $region21
    $region20: #{tpu_custom_call.1} parent=1 // pred_region
      _
    $region21: #{tpu_custom_call.1} parent=1 // pred_fallthru
      _
    // Predicated region
    $region22: #{tpu_custom_call.1} parent=1 // pred_check
      _
    $region23: #{tpu_custom_call.1} parent=1 // pred_check_branch
      %26 = sbr.rel (0) target = $region25
    $region24: #{tpu_custom_call.1} parent=1 // pred_region
      _
    $region25: #{tpu_custom_call.1} parent=1 // pred_fallthru
      _
    // Predicated region
    $region26: #{tpu_custom_call.1} parent=1 // pred_check
      _
    $region27: #{tpu_custom_call.1} parent=1 // pred_check_branch
      %28 = sbr.rel (0) target = $region29
    $region28: #{tpu_custom_call.1} parent=1 // pred_region
      _
    $region29: #{tpu_custom_call.1} parent=1 // pred_fallthru
      _
    // Predicated region
    $region30: #{tpu_custom_call.1} parent=1 // pred_check
      _
    $region31: #{tpu_custom_call.1} parent=1 // pred_check_branch
      %30 = sbr.rel (0) target = $region33
    $region32: #{tpu_custom_call.1} parent=1 // pred_region
      _
    $region33: #{tpu_custom_call.1} parent=1 // pred_fallthru
      _
    // Predicated region
    $region34: #{tpu_custom_call.1} parent=1 // pred_check
      _
    $region35: #{tpu_custom_call.1} parent=1 // pred_check_branch
      %32 = sbr.rel (0) target = $region37
    $region36: #{tpu_custom_call.1} parent=1 // pred_region
      _
    $region37: #{tpu_custom_call.1} parent=1 // pred_fallthru
      _
    %v33 = vld [vmem:[%s0] sm:$0xff]
    %v34 = vld [vmem:[%s0 + $0x8] sm:$0xff]
    %v35 = vld [vmem:[%s0 + $0x10] sm:$0xff]
    %v36 = vld [vmem:[%s0 + $0x18] sm:$0xff]
    %v37 = vld [vmem:[%s0 + $0x20] sm:$0xff]
    %v38 = vld [vmem:[%s0 + $0x28] sm:$0xff]
    %v39 = vld [vmem:[%s0 + $0x30] sm:$0xff]
    %v40 = vld [vmem:[%s0 + $0x38] sm:$0xff]
    %v41 = vld [vmem:[%s0 + $0x40] sm:$0xff]
    %v42 = vld [vmem:[%s0 + $0x48] sm:$0xff]
    %v43 = vld [vmem:[%s0 + $0x50] sm:$0xff]
    %v44 = vld [vmem:[%s0 + $0x58] sm:$0xff]
    %v45 = vld [vmem:[%s0 + $0x60] sm:$0xff]
    %v46 = vld [vmem:[%s0 + $0x68] sm:$0xff]
    %v47 = vld [vmem:[%s0 + $0x70] sm:$0xff]
    %v48 = vld [vmem:[%s0 + $0x78] sm:$0xff]
    %v49 = vld [vmem:[%s0 + $0x80] sm:$0xff]
    %v50 = vld [vmem:[%s0 + $0x88] sm:$0xff]
    %v51 = vld [vmem:[%s0 + $0x90] sm:$0xff]
    %v52 = vld [vmem:[%s0 + $0x98] sm:$0xff]
    %v53 = vld [vmem:[%s0 + $0xa0] sm:$0xff]
    %v54 = vld [vmem:[%s0 + $0xa8] sm:$0xff]
    %v55 = vld [vmem:[%s0 + $0xb0] sm:$0xff]
    %v56 = vld [vmem:[%s0 + $0xb8] sm:$0xff]
    %v57 = vld [vmem:[%s0 + $0xc0] sm:$0xff]
    %v58 = vld [vmem:[%s0 + $0xc8] sm:$0xff]
    %v59 = vld [vmem:[%s0 + $0xd0] sm:$0xff]
    %v60 = vld [vmem:[%s0 + $0xd8] sm:$0xff]
    %v61 = vld [vmem:[%s0 + $0xe0] sm:$0xff]
    %v62 = vld [vmem:[%s0 + $0xe8] sm:$0xff]
    %v63 = vld [vmem:[%s0 + $0xf0] sm:$0xff]
    %v64 = vld [vmem:[%s0 + $0xf8] sm:$0xff]
    %v65 = vld [vmem:[%s0 + $0x100] sm:$0xff]
    %v66 = vld [vmem:[%s0 + $0x108] sm:$0xff]
    %v67 = vld [vmem:[%s0 + $0x110] sm:$0xff]
    %v68 = vld [vmem:[%s0 + $0x118] sm:$0xff]
    %v69 = vld [vmem:[%s0 + $0x120] sm:$0xff]
    %v70 = vld [vmem:[%s0 + $0x128] sm:$0xff]
    %v71 = vld [vmem:[%s0 + $0x130] sm:$0xff]
    %v72 = vld [vmem:[%s0 + $0x138] sm:$0xff]
    %v73 = vld [vmem:[%s1] sm:$0xff]
    %v74 = vld [vmem:[%s1 + $0x8] sm:$0xf]
    %v75 = vld [vmem:[%s2] sm:$0x1]
    %v77 = vperm.slane %v75, 0
    %vm79 = vcmask 97280
    %v81 = vsel %vm79, %v33, 0
    %v84 = vsel %vm79, %v34, 0
    %v87 = vsel %vm79, %v35, 0
    %v90 = vsel %vm79, %v36, 0
    %v93 = vsel %vm79, %v37, 0
    %v96 = vsel %vm79, %v38, 0
    %v99 = vsel %vm79, %v39, 0
    %v102 = vsel %vm79, %v40, 0
    %v105 = vsel %vm79, %v41, 0
    %v108 = vsel %vm79, %v42, 0
    %v111 = vsel %vm79, %v43, 0
    %v114 = vsel %vm79, %v44, 0
    %v117 = vsel %vm79, %v45, 0
    %v120 = vsel %vm79, %v46, 0
    %v123 = vsel %vm79, %v47, 0
    %v126 = vsel %vm79, %v48, 0
    %v129 = vsel %vm79, %v49, 0
    %v132 = vsel %vm79, %v50, 0
    %v135 = vsel %vm79, %v51, 0
    %v138 = vsel %vm79, %v52, 0
    %v141 = vsel %vm79, %v53, 0
    %v144 = vsel %vm79, %v54, 0
    %v147 = vsel %vm79, %v55, 0
    %v150 = vsel %vm79, %v56, 0
    %v153 = vsel %vm79, %v57, 0
    %v156 = vsel %vm79, %v58, 0
    %v159 = vsel %vm79, %v59, 0
    %v162 = vsel %vm79, %v60, 0
    %v165 = vsel %vm79, %v61, 0
    %v168 = vsel %vm79, %v62, 0
    %v171 = vsel %vm79, %v63, 0
    %v174 = vsel %vm79, %v64, 0
    %v177 = vsel %vm79, %v65, 0
    %v180 = vsel %vm79, %v66, 0
    %v183 = vsel %vm79, %v67, 0
    %v186 = vsel %vm79, %v68, 0
    %v189 = vsel %vm79, %v69, 0
    %v192 = vsel %vm79, %v70, 0
    %v195 = vsel %vm79, %v71, 0
    %v198 = vsel %vm79, %v72, 0
    %vm200 = vcmask 1043456
    %v202 = vsel %vm200, %v74, 0
    %204 = vmatpush.msra.mxu0 0.0
    %205 = vmatpush.msra.mxu0 0.0
    %206 = vmatpush.msra.mxu0 0.0
    %207 = vmatpush.msra.mxu0 0.0
    %208 = vmatpush.msra.mxu0 0.0
    %209 = vmatpush.msra.mxu0 0.0
    %210 = vmatpush.msra.mxu0 0.0
    %211 = vmatpush.msra.mxu0 0.0
    %212 = vmatpush.msra.mxu0 0.0
    %213 = vmatpush.msra.mxu0 0.0
    %214 = vmatpush.msra.mxu0 0.0
    %215 = vmatpush.msra.mxu0 0.0
    %216 = vmatpush.msra.mxu0 0.0
    %217 = vmatpush.msra.mxu0 0.0
    %218 = vmatpush.msra.mxu0 %v202
    %219 = vmatpush.msra.mxu0 %v73
    %220 = vmatmul.f32.gmra.mxu0 %v81
    %v221 = vpop.f32.mrf.mxu0
    %v222 = vadd.f32 %v77, %v221
    %223 = vmatmul.f32.gmra.mxu0 %v84
    %v224 = vpop.f32.mrf.mxu0
    %v225 = vadd.f32 %v77, %v224
    %226 = vmatmul.f32.gmra.mxu0 %v87
    %v227 = vpop.f32.mrf.mxu0
    %v228 = vadd.f32 %v77, %v227
    %229 = vmatmul.f32.gmra.mxu0 %v90
    %v230 = vpop.f32.mrf.mxu0
    %v231 = vadd.f32 %v77, %v230
    %232 = vmatmul.f32.gmra.mxu0 %v93
    %v233 = vpop.f32.mrf.mxu0
    %v234 = vadd.f32 %v77, %v233
    %235 = vmatmul.f32.gmra.mxu0 %v96
    %v236 = vpop.f32.mrf.mxu0
    %v237 = vadd.f32 %v77, %v236
    %238 = vmatmul.f32.gmra.mxu0 %v99
    %v239 = vpop.f32.mrf.mxu0
    %v240 = vadd.f32 %v77, %v239
    %241 = vmatmul.f32.gmra.mxu0 %v102
    %v242 = vpop.f32.mrf.mxu0
    %v243 = vadd.f32 %v77, %v242
    %244 = vmatmul.f32.gmra.mxu0 %v105
    %v245 = vpop.f32.mrf.mxu0
    %v246 = vadd.f32 %v77, %v245
    %247 = vmatmul.f32.gmra.mxu0 %v108
    %v248 = vpop.f32.mrf.mxu0
    %v249 = vadd.f32 %v77, %v248
    %250 = vmatmul.f32.gmra.mxu0 %v111
    %v251 = vpop.f32.mrf.mxu0
    %v252 = vadd.f32 %v77, %v251
    %253 = vmatmul.f32.gmra.mxu0 %v114
    %v254 = vpop.f32.mrf.mxu0
    %v255 = vadd.f32 %v77, %v254
    %256 = vmatmul.f32.gmra.mxu0 %v117
    %v257 = vpop.f32.mrf.mxu0
    %v258 = vadd.f32 %v77, %v257
    %259 = vmatmul.f32.gmra.mxu0 %v120
    %v260 = vpop.f32.mrf.mxu0
    %v261 = vadd.f32 %v77, %v260
    %262 = vmatmul.f32.gmra.mxu0 %v123
    %v263 = vpop.f32.mrf.mxu0
    %v264 = vadd.f32 %v77, %v263
    %265 = vmatmul.f32.gmra.mxu0 %v126
    %v266 = vpop.f32.mrf.mxu0
    %v267 = vadd.f32 %v77, %v266
    %268 = vmatmul.f32.gmra.mxu0 %v129
    %v269 = vpop.f32.mrf.mxu0
    %v270 = vadd.f32 %v77, %v269
    %271 = vmatmul.f32.gmra.mxu0 %v132
    %v272 = vpop.f32.mrf.mxu0
    %v273 = vadd.f32 %v77, %v272
    %274 = vmatmul.f32.gmra.mxu0 %v135
    %v275 = vpop.f32.mrf.mxu0
    %v276 = vadd.f32 %v77, %v275
    %277 = vmatmul.f32.gmra.mxu0 %v138
    %v278 = vpop.f32.mrf.mxu0
    %v279 = vadd.f32 %v77, %v278
    %280 = vmatmul.f32.gmra.mxu0 %v141
    %v281 = vpop.f32.mrf.mxu0
    %v282 = vadd.f32 %v77, %v281
    %283 = vmatmul.f32.gmra.mxu0 %v144
    %v284 = vpop.f32.mrf.mxu0
    %v285 = vadd.f32 %v77, %v284
    %286 = vmatmul.f32.gmra.mxu0 %v147
    %v287 = vpop.f32.mrf.mxu0
    %v288 = vadd.f32 %v77, %v287
    %289 = vmatmul.f32.gmra.mxu0 %v150
    %v290 = vpop.f32.mrf.mxu0
    %v291 = vadd.f32 %v77, %v290
    %292 = vmatmul.f32.gmra.mxu0 %v153
    %v293 = vpop.f32.mrf.mxu0
    %v294 = vadd.f32 %v77, %v293
    %295 = vmatmul.f32.gmra.mxu0 %v156
    %v296 = vpop.f32.mrf.mxu0
    %v297 = vadd.f32 %v77, %v296
    %298 = vmatmul.f32.gmra.mxu0 %v159
    %v299 = vpop.f32.mrf.mxu0
    %v300 = vadd.f32 %v77, %v299
    %301 = vmatmul.f32.gmra.mxu0 %v162
    %v302 = vpop.f32.mrf.mxu0
    %v303 = vadd.f32 %v77, %v302
    %304 = vmatmul.f32.gmra.mxu0 %v165
    %v305 = vpop.f32.mrf.mxu0
    %v306 = vadd.f32 %v77, %v305
    %307 = vmatmul.f32.gmra.mxu0 %v168
    %v308 = vpop.f32.mrf.mxu0
    %v309 = vadd.f32 %v77, %v308
    %310 = vmatmul.f32.gmra.mxu0 %v171
    %v311 = vpop.f32.mrf.mxu0
    %v312 = vadd.f32 %v77, %v311
    %313 = vmatmul.f32.gmra.mxu0 %v174
    %v314 = vpop.f32.mrf.mxu0
    %v315 = vadd.f32 %v77, %v314
    %316 = vmatmul.f32.gmra.mxu0 %v177
    %v317 = vpop.f32.mrf.mxu0
    %v318 = vadd.f32 %v77, %v317
    %319 = vmatmul.f32.gmra.mxu0 %v180
    %v320 = vpop.f32.mrf.mxu0
    %v321 = vadd.f32 %v77, %v320
    %322 = vmatmul.f32.gmra.mxu0 %v183
    %v323 = vpop.f32.mrf.mxu0
    %v324 = vadd.f32 %v77, %v323
    %325 = vmatmul.f32.gmra.mxu0 %v186
    %v326 = vpop.f32.mrf.mxu0
    %v327 = vadd.f32 %v77, %v326
    %328 = vmatmul.f32.gmra.mxu0 %v189
    %v329 = vpop.f32.mrf.mxu0
    %v330 = vadd.f32 %v77, %v329
    %331 = vmatmul.f32.gmra.mxu0 %v192
    %v332 = vpop.f32.mrf.mxu0
    %v333 = vadd.f32 %v77, %v332
    %334 = vmatmul.f32.gmra.mxu0 %v195
    %v335 = vpop.f32.mrf.mxu0
    %v336 = vadd.f32 %v77, %v335
    %337 = vmatmul.f32.gmra.mxu0 %v198
    %v338 = vpop.f32.mrf.mxu0
    %v339 = vadd.f32 %v77, %v338
    %340 = vdwg.mxu0
    %v341 = vmax.f32 %v222, 0.0
    %v342 = vmax.f32 %v225, 0.0
    %v343 = vmax.f32 %v228, 0.0
    %v344 = vmax.f32 %v231, 0.0
    %v345 = vmax.f32 %v234, 0.0
    %v346 = vmax.f32 %v237, 0.0
    %v347 = vmax.f32 %v240, 0.0
    %v348 = vmax.f32 %v243, 0.0
    %v349 = vmax.f32 %v246, 0.0
    %v350 = vmax.f32 %v249, 0.0
    %v351 = vmax.f32 %v252, 0.0
    %v352 = vmax.f32 %v255, 0.0
    %v353 = vmax.f32 %v258, 0.0
    %v354 = vmax.f32 %v261, 0.0
    %v355 = vmax.f32 %v264, 0.0
    %v356 = vmax.f32 %v267, 0.0
    %v357 = vmax.f32 %v270, 0.0
    %v358 = vmax.f32 %v273, 0.0
    %v359 = vmax.f32 %v276, 0.0
    %v360 = vmax.f32 %v279, 0.0
    %v361 = vmax.f32 %v282, 0.0
    %v362 = vmax.f32 %v285, 0.0
    %v363 = vmax.f32 %v288, 0.0
    %v364 = vmax.f32 %v291, 0.0
    %v365 = vmax.f32 %v294, 0.0
    %v366 = vmax.f32 %v297, 0.0
    %v367 = vmax.f32 %v300, 0.0
    %v368 = vmax.f32 %v303, 0.0
    %v369 = vmax.f32 %v306, 0.0
    %v370 = vmax.f32 %v309, 0.0
    %v371 = vmax.f32 %v312, 0.0
    %v372 = vmax.f32 %v315, 0.0
    %v373 = vmax.f32 %v318, 0.0
    %v374 = vmax.f32 %v321, 0.0
    %v375 = vmax.f32 %v324, 0.0
    %v376 = vmax.f32 %v327, 0.0
    %v377 = vmax.f32 %v330, 0.0
    %v378 = vmax.f32 %v333, 0.0
    %v379 = vmax.f32 %v336, 0.0
    %v380 = vmax.f32 %v339, 0.0
    %v381 = vld [vmem:[%s3] sm:$0xff]
    %v382 = vld [vmem:[%s3 + $0x8] sm:$0xff]
    %v383 = vld [vmem:[%s3 + $0x10] sm:$0xf]
    %v384 = vld [vmem:[%s3 + $0x18] sm:$0xf]
    %v385 = vld [vmem:[%s4] sm:$0x3]
    %v387 = vperm.slane %v385, 0
    %v388 = vperm.slane %v385, 1
    %v392 = vsel %vm79, %v341, 0
    %v395 = vsel %vm79, %v342, 0
    %v398 = vsel %vm79, %v343, 0
    %v401 = vsel %vm79, %v344, 0
    %v404 = vsel %vm79, %v345, 0
    %v407 = vsel %vm79, %v346, 0
    %v410 = vsel %vm79, %v347, 0
    %v413 = vsel %vm79, %v348, 0
    %v416 = vsel %vm79, %v349, 0
    %v419 = vsel %vm79, %v350, 0
    %v422 = vsel %vm79, %v351, 0
    %v425 = vsel %vm79, %v352, 0
    %v428 = vsel %vm79, %v353, 0
    %v431 = vsel %vm79, %v354, 0
    %v434 = vsel %vm79, %v355, 0
    %v437 = vsel %vm79, %v356, 0
    %v440 = vsel %vm79, %v357, 0
    %v443 = vsel %vm79, %v358, 0
    %v446 = vsel %vm79, %v359, 0
    %v449 = vsel %vm79, %v360, 0
    %v452 = vsel %vm79, %v361, 0
    %v455 = vsel %vm79, %v362, 0
    %v458 = vsel %vm79, %v363, 0
    %v461 = vsel %vm79, %v364, 0
    %v464 = vsel %vm79, %v365, 0
    %v467 = vsel %vm79, %v366, 0
    %v470 = vsel %vm79, %v367, 0
    %v473 = vsel %vm79, %v368, 0
    %v476 = vsel %vm79, %v369, 0
    %v479 = vsel %vm79, %v370, 0
    %v482 = vsel %vm79, %v371, 0
    %v485 = vsel %vm79, %v372, 0
    %v488 = vsel %vm79, %v373, 0
    %v491 = vsel %vm79, %v374, 0
    %v494 = vsel %vm79, %v375, 0
    %v497 = vsel %vm79, %v376, 0
    %v500 = vsel %vm79, %v377, 0
    %v503 = vsel %vm79, %v378, 0
    %v506 = vsel %vm79, %v379, 0
    %v509 = vsel %vm79, %v380, 0
    %v512 = vsel %vm200, %v383, 0
    %v515 = vsel %vm200, %v384, 0
    %517 = vmatpush.msra.mxu0 0.0
    %518 = vmatpush.msra.mxu0 0.0
    %519 = vmatpush.msra.mxu0 0.0
    %520 = vmatpush.msra.mxu0 0.0
    %521 = vmatpush.msra.mxu0 0.0
    %522 = vmatpush.msra.mxu0 0.0
    %523 = vmatpush.msra.mxu0 0.0
    %524 = vmatpush.msra.mxu0 0.0
    %525 = vmatpush.msra.mxu0 0.0
    %526 = vmatpush.msra.mxu0 0.0
    %527 = vmatpush.msra.mxu0 0.0
    %528 = vmatpush.msra.mxu0 0.0
    %529 = vmatpush.msra.mxu0 0.0
    %530 = vmatpush.msra.mxu0 0.0
    %531 = vmatpush.msra.mxu0 %v512
    %532 = vmatpush.msra.mxu0 %v381
    %533 = vmatmul.f32.gmra.mxu0 %v392
    %v534 = vpop.f32.mrf.mxu0
    %v535 = vadd.f32 %v387, %v534
    %536 = vmatmul.f32.gmra.mxu0 %v395
    %v537 = vpop.f32.mrf.mxu0
    %v538 = vadd.f32 %v387, %v537
    %539 = vmatmul.f32.gmra.mxu0 %v398
    %v540 = vpop.f32.mrf.mxu0
    %v541 = vadd.f32 %v387, %v540
    %542 = vmatmul.f32.gmra.mxu0 %v401
    %v543 = vpop.f32.mrf.mxu0
    %v544 = vadd.f32 %v387, %v543
    %545 = vmatmul.f32.gmra.mxu0 %v404
    %v546 = vpop.f32.mrf.mxu0
    %v547 = vadd.f32 %v387, %v546
    %548 = vmatmul.f32.gmra.mxu0 %v407
    %v549 = vpop.f32.mrf.mxu0
    %v550 = vadd.f32 %v387, %v549
    %551 = vmatmul.f32.gmra.mxu0 %v410
    %v552 = vpop.f32.mrf.mxu0
    %v553 = vadd.f32 %v387, %v552
    %554 = vmatmul.f32.gmra.mxu0 %v413
    %v555 = vpop.f32.mrf.mxu0
    %v556 = vadd.f32 %v387, %v555
    %557 = vmatmul.f32.gmra.mxu0 %v416
    %v558 = vpop.f32.mrf.mxu0
    %v559 = vadd.f32 %v387, %v558
    %560 = vmatmul.f32.gmra.mxu0 %v419
    %v561 = vpop.f32.mrf.mxu0
    %v562 = vadd.f32 %v387, %v561
    %563 = vmatmul.f32.gmra.mxu0 %v422
    %v564 = vpop.f32.mrf.mxu0
    %v565 = vadd.f32 %v387, %v564
    %566 = vmatmul.f32.gmra.mxu0 %v425
    %v567 = vpop.f32.mrf.mxu0
    %v568 = vadd.f32 %v387, %v567
    %569 = vmatmul.f32.gmra.mxu0 %v428
    %v570 = vpop.f32.mrf.mxu0
    %v571 = vadd.f32 %v387, %v570
    %572 = vmatmul.f32.gmra.mxu0 %v431
    %v573 = vpop.f32.mrf.mxu0
    %v574 = vadd.f32 %v387, %v573
    %575 = vmatmul.f32.gmra.mxu0 %v434
    %v576 = vpop.f32.mrf.mxu0
    %v577 = vadd.f32 %v387, %v576
    %578 = vmatmul.f32.gmra.mxu0 %v437
    %v579 = vpop.f32.mrf.mxu0
    %v580 = vadd.f32 %v387, %v579
    %581 = vmatmul.f32.gmra.mxu0 %v440
    %v582 = vpop.f32.mrf.mxu0
    %v583 = vadd.f32 %v387, %v582
    %584 = vmatmul.f32.gmra.mxu0 %v443
    %v585 = vpop.f32.mrf.mxu0
    %v586 = vadd.f32 %v387, %v585
    %587 = vmatmul.f32.gmra.mxu0 %v446
    %v588 = vpop.f32.mrf.mxu0
    %v589 = vadd.f32 %v387, %v588
    %590 = vmatmul.f32.gmra.mxu0 %v449
    %v591 = vpop.f32.mrf.mxu0
    %v592 = vadd.f32 %v387, %v591
    %593 = vmatmul.f32.gmra.mxu0 %v452
    %v594 = vpop.f32.mrf.mxu0
    %v595 = vadd.f32 %v387, %v594
    %596 = vmatmul.f32.gmra.mxu0 %v455
    %v597 = vpop.f32.mrf.mxu0
    %v598 = vadd.f32 %v387, %v597
    %599 = vmatmul.f32.gmra.mxu0 %v458
    %v600 = vpop.f32.mrf.mxu0
    %v601 = vadd.f32 %v387, %v600
    %602 = vmatmul.f32.gmra.mxu0 %v461
    %v603 = vpop.f32.mrf.mxu0
    %v604 = vadd.f32 %v387, %v603
    %605 = vmatmul.f32.gmra.mxu0 %v464
    %v606 = vpop.f32.mrf.mxu0
    %v607 = vadd.f32 %v387, %v606
    %608 = vmatmul.f32.gmra.mxu0 %v467
    %v609 = vpop.f32.mrf.mxu0
    %v610 = vadd.f32 %v387, %v609
    %611 = vmatmul.f32.gmra.mxu0 %v470
    %v612 = vpop.f32.mrf.mxu0
    %v613 = vadd.f32 %v387, %v612
    %614 = vmatmul.f32.gmra.mxu0 %v473
    %v615 = vpop.f32.mrf.mxu0
    %v616 = vadd.f32 %v387, %v615
    %617 = vmatmul.f32.gmra.mxu0 %v476
    %v618 = vpop.f32.mrf.mxu0
    %v619 = vadd.f32 %v387, %v618
    %620 = vmatmul.f32.gmra.mxu0 %v479
    %v621 = vpop.f32.mrf.mxu0
    %v622 = vadd.f32 %v387, %v621
    %623 = vmatmul.f32.gmra.mxu0 %v482
    %v624 = vpop.f32.mrf.mxu0
    %v625 = vadd.f32 %v387, %v624
    %626 = vmatmul.f32.gmra.mxu0 %v485
    %v627 = vpop.f32.mrf.mxu0
    %v628 = vadd.f32 %v387, %v627
    %629 = vmatmul.f32.gmra.mxu0 %v488
    %v630 = vpop.f32.mrf.mxu0
    %v631 = vadd.f32 %v387, %v630
    %632 = vmatmul.f32.gmra.mxu0 %v491
    %v633 = vpop.f32.mrf.mxu0
    %v634 = vadd.f32 %v387, %v633
    %635 = vmatmul.f32.gmra.mxu0 %v494
    %v636 = vpop.f32.mrf.mxu0
    %v637 = vadd.f32 %v387, %v636
    %638 = vmatmul.f32.gmra.mxu0 %v497
    %v639 = vpop.f32.mrf.mxu0
    %v640 = vadd.f32 %v387, %v639
    %641 = vmatmul.f32.gmra.mxu0 %v500
    %v642 = vpop.f32.mrf.mxu0
    %v643 = vadd.f32 %v387, %v642
    %644 = vmatmul.f32.gmra.mxu0 %v503
    %v645 = vpop.f32.mrf.mxu0
    %v646 = vadd.f32 %v387, %v645
    %647 = vmatmul.f32.gmra.mxu0 %v506
    %v648 = vpop.f32.mrf.mxu0
    %v649 = vadd.f32 %v387, %v648
    %650 = vmatmul.f32.gmra.mxu0 %v509
    %v651 = vpop.f32.mrf.mxu0
    %v652 = vadd.f32 %v387, %v651
    %653 = vdwg.mxu0
    %654 = vmatpush.msra.mxu0 0.0
    %655 = vmatpush.msra.mxu0 0.0
    %656 = vmatpush.msra.mxu0 0.0
    %657 = vmatpush.msra.mxu0 0.0
    %658 = vmatpush.msra.mxu0 0.0
    %659 = vmatpush.msra.mxu0 0.0
    %660 = vmatpush.msra.mxu0 0.0
    %661 = vmatpush.msra.mxu0 0.0
    %662 = vmatpush.msra.mxu0 0.0
    %663 = vmatpush.msra.mxu0 0.0
    %664 = vmatpush.msra.mxu0 0.0
    %665 = vmatpush.msra.mxu0 0.0
    %666 = vmatpush.msra.mxu0 0.0
    %667 = vmatpush.msra.mxu0 0.0
    %668 = vmatpush.msra.mxu0 %v515
    %669 = vmatpush.msra.mxu0 %v382
    %670 = vmatmul.f32.gmra.mxu0 %v392
    %v671 = vpop.f32.mrf.mxu0
    %v672 = vadd.f32 %v388, %v671
    %673 = vmatmul.f32.gmra.mxu0 %v395
    %v674 = vpop.f32.mrf.mxu0
    %v675 = vadd.f32 %v388, %v674
    %676 = vmatmul.f32.gmra.mxu0 %v398
    %v677 = vpop.f32.mrf.mxu0
    %v678 = vadd.f32 %v388, %v677
    %679 = vmatmul.f32.gmra.mxu0 %v401
    %v680 = vpop.f32.mrf.mxu0
    %v681 = vadd.f32 %v388, %v680
    %682 = vmatmul.f32.gmra.mxu0 %v404
    %v683 = vpop.f32.mrf.mxu0
    %v684 = vadd.f32 %v388, %v683
    %685 = vmatmul.f32.gmra.mxu0 %v407
    %v686 = vpop.f32.mrf.mxu0
    %v687 = vadd.f32 %v388, %v686
    %688 = vmatmul.f32.gmra.mxu0 %v410
    %v689 = vpop.f32.mrf.mxu0
    %v690 = vadd.f32 %v388, %v689
    %691 = vmatmul.f32.gmra.mxu0 %v413
    %v692 = vpop.f32.mrf.mxu0
    %v693 = vadd.f32 %v388, %v692
    %694 = vmatmul.f32.gmra.mxu0 %v416
    %v695 = vpop.f32.mrf.mxu0
    %v696 = vadd.f32 %v388, %v695
    %697 = vmatmul.f32.gmra.mxu0 %v419
    %v698 = vpop.f32.mrf.mxu0
    %v699 = vadd.f32 %v388, %v698
    %700 = vmatmul.f32.gmra.mxu0 %v422
    %v701 = vpop.f32.mrf.mxu0
    %v702 = vadd.f32 %v388, %v701
    %703 = vmatmul.f32.gmra.mxu0 %v425
    %v704 = vpop.f32.mrf.mxu0
    %v705 = vadd.f32 %v388, %v704
    %706 = vmatmul.f32.gmra.mxu0 %v428
    %v707 = vpop.f32.mrf.mxu0
    %v708 = vadd.f32 %v388, %v707
    %709 = vmatmul.f32.gmra.mxu0 %v431
    %v710 = vpop.f32.mrf.mxu0
    %v711 = vadd.f32 %v388, %v710
    %712 = vmatmul.f32.gmra.mxu0 %v434
    %v713 = vpop.f32.mrf.mxu0
    %v714 = vadd.f32 %v388, %v713
    %715 = vmatmul.f32.gmra.mxu0 %v437
    %v716 = vpop.f32.mrf.mxu0
    %v717 = vadd.f32 %v388, %v716
    %718 = vmatmul.f32.gmra.mxu0 %v440
    %v719 = vpop.f32.mrf.mxu0
    %v720 = vadd.f32 %v388, %v719
    %721 = vmatmul.f32.gmra.mxu0 %v443
    %v722 = vpop.f32.mrf.mxu0
    %v723 = vadd.f32 %v388, %v722
    %724 = vmatmul.f32.gmra.mxu0 %v446
    %v725 = vpop.f32.mrf.mxu0
    %v726 = vadd.f32 %v388, %v725
    %727 = vmatmul.f32.gmra.mxu0 %v449
    %v728 = vpop.f32.mrf.mxu0
    %v729 = vadd.f32 %v388, %v728
    %730 = vmatmul.f32.gmra.mxu0 %v452
    %v731 = vpop.f32.mrf.mxu0
    %v732 = vadd.f32 %v388, %v731
    %733 = vmatmul.f32.gmra.mxu0 %v455
    %v734 = vpop.f32.mrf.mxu0
    %v735 = vadd.f32 %v388, %v734
    %736 = vmatmul.f32.gmra.mxu0 %v458
    %v737 = vpop.f32.mrf.mxu0
    %v738 = vadd.f32 %v388, %v737
    %739 = vmatmul.f32.gmra.mxu0 %v461
    %v740 = vpop.f32.mrf.mxu0
    %v741 = vadd.f32 %v388, %v740
    %742 = vmatmul.f32.gmra.mxu0 %v464
    %v743 = vpop.f32.mrf.mxu0
    %v744 = vadd.f32 %v388, %v743
    %745 = vmatmul.f32.gmra.mxu0 %v467
    %v746 = vpop.f32.mrf.mxu0
    %v747 = vadd.f32 %v388, %v746
    %748 = vmatmul.f32.gmra.mxu0 %v470
    %v749 = vpop.f32.mrf.mxu0
    %v750 = vadd.f32 %v388, %v749
    %751 = vmatmul.f32.gmra.mxu0 %v473
    %v752 = vpop.f32.mrf.mxu0
    %v753 = vadd.f32 %v388, %v752
    %754 = vmatmul.f32.gmra.mxu0 %v476
    %v755 = vpop.f32.mrf.mxu0
    %v756 = vadd.f32 %v388, %v755
    %757 = vmatmul.f32.gmra.mxu0 %v479
    %v758 = vpop.f32.mrf.mxu0
    %v759 = vadd.f32 %v388, %v758
    %760 = vmatmul.f32.gmra.mxu0 %v482
    %v761 = vpop.f32.mrf.mxu0
    %v762 = vadd.f32 %v388, %v761
    %763 = vmatmul.f32.gmra.mxu0 %v485
    %v764 = vpop.f32.mrf.mxu0
    %v765 = vadd.f32 %v388, %v764
    %766 = vmatmul.f32.gmra.mxu0 %v488
    %v767 = vpop.f32.mrf.mxu0
    %v768 = vadd.f32 %v388, %v767
    %769 = vmatmul.f32.gmra.mxu0 %v491
    %v770 = vpop.f32.mrf.mxu0
    %v771 = vadd.f32 %v388, %v770
    %772 = vmatmul.f32.gmra.mxu0 %v494
    %v773 = vpop.f32.mrf.mxu0
    %v774 = vadd.f32 %v388, %v773
    %775 = vmatmul.f32.gmra.mxu0 %v497
    %v776 = vpop.f32.mrf.mxu0
    %v777 = vadd.f32 %v388, %v776
    %778 = vmatmul.f32.gmra.mxu0 %v500
    %v779 = vpop.f32.mrf.mxu0
    %v780 = vadd.f32 %v388, %v779
    %781 = vmatmul.f32.gmra.mxu0 %v503
    %v782 = vpop.f32.mrf.mxu0
    %v783 = vadd.f32 %v388, %v782
    %784 = vmatmul.f32.gmra.mxu0 %v506
    %v785 = vpop.f32.mrf.mxu0
    %v786 = vadd.f32 %v388, %v785
    %787 = vmatmul.f32.gmra.mxu0 %v509
    %v788 = vpop.f32.mrf.mxu0
    %v789 = vadd.f32 %v388, %v788
    %790 = vdwg.mxu0
    %791 = vst [vmem:[#allocation2] sm:$0xff] %v535
    %792 = vst [vmem:[#allocation2 + $0x8] sm:$0xff] %v672
    %793 = vst [vmem:[#allocation2 + $0x10] sm:$0xff] %v538
    %794 = vst [vmem:[#allocation2 + $0x18] sm:$0xff] %v675
    %795 = vst [vmem:[#allocation2 + $0x20] sm:$0xff] %v541
    %796 = vst [vmem:[#allocation2 + $0x28] sm:$0xff] %v678
    %797 = vst [vmem:[#allocation2 + $0x30] sm:$0xff] %v544
    %798 = vst [vmem:[#allocation2 + $0x38] sm:$0xff] %v681
    %799 = vst [vmem:[#allocation2 + $0x40] sm:$0xff] %v547
    %800 = vst [vmem:[#allocation2 + $0x48] sm:$0xff] %v684
    %801 = vst [vmem:[#allocation2 + $0x50] sm:$0xff] %v550
    %802 = vst [vmem:[#allocation2 + $0x58] sm:$0xff] %v687
    %803 = vst [vmem:[#allocation2 + $0x60] sm:$0xff] %v553
    %804 = vst [vmem:[#allocation2 + $0x68] sm:$0xff] %v690
    %805 = vst [vmem:[#allocation2 + $0x70] sm:$0xff] %v556
    %806 = vst [vmem:[#allocation2 + $0x78] sm:$0xff] %v693
    %807 = vst [vmem:[#allocation2 + $0x80] sm:$0xff] %v559
    %808 = vst [vmem:[#allocation2 + $0x88] sm:$0xff] %v696
    %809 = vst [vmem:[#allocation2 + $0x90] sm:$0xff] %v562
    %810 = vst [vmem:[#allocation2 + $0x98] sm:$0xff] %v699
    %811 = vst [vmem:[#allocation2 + $0xa0] sm:$0xff] %v565
    %812 = vst [vmem:[#allocation2 + $0xa8] sm:$0xff] %v702
    %813 = vst [vmem:[#allocation2 + $0xb0] sm:$0xff] %v568
    %814 = vst [vmem:[#allocation2 + $0xb8] sm:$0xff] %v705
    %815 = vst [vmem:[#allocation2 + $0xc0] sm:$0xff] %v571
    %816 = vst [vmem:[#allocation2 + $0xc8] sm:$0xff] %v708
    %817 = vst [vmem:[#allocation2 + $0xd0] sm:$0xff] %v574
    %818 = vst [vmem:[#allocation2 + $0xd8] sm:$0xff] %v711
    %819 = vst [vmem:[#allocation2 + $0xe0] sm:$0xff] %v577
    %820 = vst [vmem:[#allocation2 + $0xe8] sm:$0xff] %v714
    %821 = vst [vmem:[#allocation2 + $0xf0] sm:$0xff] %v580
    %822 = vst [vmem:[#allocation2 + $0xf8] sm:$0xff] %v717
    %823 = vst [vmem:[#allocation2 + $0x100] sm:$0xff] %v583
    %824 = vst [vmem:[#allocation2 + $0x108] sm:$0xff] %v720
    %825 = vst [vmem:[#allocation2 + $0x110] sm:$0xff] %v586
    %826 = vst [vmem:[#allocation2 + $0x118] sm:$0xff] %v723
    %827 = vst [vmem:[#allocation2 + $0x120] sm:$0xff] %v589
    %828 = vst [vmem:[#allocation2 + $0x128] sm:$0xff] %v726
    %829 = vst [vmem:[#allocation2 + $0x130] sm:$0xff] %v592
    %830 = vst [vmem:[#allocation2 + $0x138] sm:$0xff] %v729
    %831 = vst [vmem:[#allocation2 + $0x140] sm:$0xff] %v595
    %832 = vst [vmem:[#allocation2 + $0x148] sm:$0xff] %v732
    %833 = vst [vmem:[#allocation2 + $0x150] sm:$0xff] %v598
    %834 = vst [vmem:[#allocation2 + $0x158] sm:$0xff] %v735
    %835 = vst [vmem:[#allocation2 + $0x160] sm:$0xff] %v601
    %836 = vst [vmem:[#allocation2 + $0x168] sm:$0xff] %v738
    %837 = vst [vmem:[#allocation2 + $0x170] sm:$0xff] %v604
    %838 = vst [vmem:[#allocation2 + $0x178] sm:$0xff] %v741
    %839 = vst [vmem:[#allocation2 + $0x180] sm:$0xff] %v607
    %840 = vst [vmem:[#allocation2 + $0x188] sm:$0xff] %v744
    %841 = vst [vmem:[#allocation2 + $0x190] sm:$0xff] %v610
    %842 = vst [vmem:[#allocation2 + $0x198] sm:$0xff] %v747
    %843 = vst [vmem:[#allocation2 + $0x1a0] sm:$0xff] %v613
    %844 = vst [vmem:[#allocation2 + $0x1a8] sm:$0xff] %v750
    %845 = vst [vmem:[#allocation2 + $0x1b0] sm:$0xff] %v616
    %846 = vst [vmem:[#allocation2 + $0x1b8] sm:$0xff] %v753
    %847 = vst [vmem:[#allocation2 + $0x1c0] sm:$0xff] %v619
    %848 = vst [vmem:[#allocation2 + $0x1c8] sm:$0xff] %v756
    %849 = vst [vmem:[#allocation2 + $0x1d0] sm:$0xff] %v622
    %850 = vst [vmem:[#allocation2 + $0x1d8] sm:$0xff] %v759
    %851 = vst [vmem:[#allocation2 + $0x1e0] sm:$0xff] %v625
    %852 = vst [vmem:[#allocation2 + $0x1e8] sm:$0xff] %v762
    %853 = vst [vmem:[#allocation2 + $0x1f0] sm:$0xff] %v628
    %854 = vst [vmem:[#allocation2 + $0x1f8] sm:$0xff] %v765
    %855 = vst [vmem:[#allocation2 + $0x200] sm:$0xff] %v631
    %856 = vst [vmem:[#allocation2 + $0x208] sm:$0xff] %v768
    %857 = vst [vmem:[#allocation2 + $0x210] sm:$0xff] %v634
    %858 = vst [vmem:[#allocation2 + $0x218] sm:$0xff] %v771
    %859 = vst [vmem:[#allocation2 + $0x220] sm:$0xff] %v637
    %860 = vst [vmem:[#allocation2 + $0x228] sm:$0xff] %v774
    %861 = vst [vmem:[#allocation2 + $0x230] sm:$0xff] %v640
    %862 = vst [vmem:[#allocation2 + $0x238] sm:$0xff] %v777
    %863 = vst [vmem:[#allocation2 + $0x240] sm:$0xff] %v643
    %864 = vst [vmem:[#allocation2 + $0x248] sm:$0xff] %v780
    %865 = vst [vmem:[#allocation2 + $0x250] sm:$0xff] %v646
    %866 = vst [vmem:[#allocation2 + $0x258] sm:$0xff] %v783
    %867 = vst [vmem:[#allocation2 + $0x260] sm:$0xff] %v649
    %868 = vst [vmem:[#allocation2 + $0x268] sm:$0xff] %v786
    %869 = vst [vmem:[#allocation2 + $0x270] sm:$0xff] %v652
    %870 = vst [vmem:[#allocation2 + $0x278] sm:$0xff] %v789
    %v871 = vld [vmem:[%s5] sm:$0xff]
    %v872 = vld [vmem:[%s5 + $0x8] sm:$0xff]
    %v873 = vld [vmem:[%s5 + $0x10] sm:$0xff]
    %v874 = vld [vmem:[%s5 + $0x18] sm:$0xff]
    %v875 = vld [vmem:[%s6] sm:$0xff]
    %v876 = vld [vmem:[%s6 + $0x8] sm:$0xff]
    %v877 = vld [vmem:[%s6 + $0x10] sm:$0xff]
    %v878 = vld [vmem:[%s6 + $0x18] sm:$0xff]
    %v879 = vld [vmem:[#allocation2] sm:$0xff]
    %vm880 = vcmask 261120
    %v882 = vsel %vm880, 0.0, 0
    %884 = vmatpush.msra.mxu0 0.0
    %885 = vmatpush.msra.mxu0 0.0
    %886 = vmatpush.msra.mxu0 0.0
    %887 = vmatpush.msra.mxu0 0.0
    %888 = vmatpush.msra.mxu0 0.0
    %889 = vmatpush.msra.mxu0 0.0
    %890 = vmatpush.msra.mxu0 0.0
    %891 = vmatpush.msra.mxu0 0.0
    %892 = vmatpush.msra.mxu0 0.0
    %893 = vmatpush.msra.mxu0 0.0
    %894 = vmatpush.msra.mxu0 0.0
    %895 = vmatpush.msra.mxu0 0.0
    %896 = vmatpush.msra.mxu0 %v874
    %897 = vmatpush.msra.mxu0 %v873
    %898 = vmatpush.msra.mxu0 %v872
    %899 = vmatpush.msra.mxu0 %v871
    %900 = vmatmul.f32.gmra.mxu0 %v882
    %v901 = vpop.f32.mrf.mxu0
    %v902 = vadd.f32 0.0, %v901
    %903 = vdwg.mxu0
    %v904 = vadd.f32 %v879, %v902
    %v905 = vxor.u32 %v904, 2147483648
    %v906 = vmul.f32 %v905, 1.442695
    %v907 = vpow.pop %v906
    %v908 = vadd.f32 %v907, 1.0
    %v909 = vrcp.pop %v908
    %v910 = vmul.f32 %v908, %v909
    %v911 = vsub.f32 1.0, %v910
    %v912 = vmul.f32 %v909, %v911
    %v913 = vadd.f32 %v909, %v912
    %vm914 = vweird.f32 %v908
    %vm915 = vweird.f32 %v909
    %vm916 = vmor %vm914, %vm915
    %v917 = vsel %vm916, %v909, %v913
    %v918 = vand.u32 2147483647, %v908
    %vm919 = vcmp.eq.f32.partialorder %v918, 8.507059e+37
    %v920 = vand.u32 %v908, 2147483648
    %v921 = vor.u32 1.1754944e-38, %v920
    %v922 = vsel %vm919, %v921, %v917
    %v923 = vmul.f32 1.0, %v922
    %v924 = vtanh.pop %v904
    %v925 = vmul.f32 %v923, 0.0
    %927 = vrot.lane.b32.xlu0 %v924, 32
    %v928 = vpop.permute.xlu0 %927
    %v930 = vmul.f32 %v923, %v928
    %932 = vrot.lane.b32.xlu0 %v930, 32
    %v933 = vpop.permute.xlu0 %932
    %v935 = vadd.f32 %v925, %v933
    %v936 = vtanh.pop %v935
    %938 = vrot.lane.b32.xlu0 %v936, 32
    %v939 = vpop.permute.xlu0 %938
    %v941 = vmul.f32 %v923, %v939
    %v942 = vld [vmem:[#allocation2 + $0x10] sm:$0xff]
    %944 = vrot.lane.b32.xlu0 %v941, 64
    %v945 = vpop.permute.xlu0 %944
    %v946 = vsel %vm880, %v945, 0
    %948 = vmatpush.msra.mxu0 0.0
    %949 = vmatpush.msra.mxu0 0.0
    %950 = vmatpush.msra.mxu0 0.0
    %951 = vmatpush.msra.mxu0 0.0
    %952 = vmatpush.msra.mxu0 0.0
    %953 = vmatpush.msra.mxu0 0.0
    %954 = vmatpush.msra.mxu0 0.0
    %955 = vmatpush.msra.mxu0 0.0
    %956 = vmatpush.msra.mxu0 0.0
    %957 = vmatpush.msra.mxu0 0.0
    %958 = vmatpush.msra.mxu0 0.0
    %959 = vmatpush.msra.mxu0 0.0
    %960 = vmatpush.msra.mxu0 %v874
    %961 = vmatpush.msra.mxu0 %v873
    %962 = vmatpush.msra.mxu0 %v872
    %963 = vmatpush.msra.mxu0 %v871
    %964 = vmatmul.f32.gmra.mxu0 %v946
    %v965 = vpop.f32.mrf.mxu0
    %v966 = vadd.f32 0.0, %v965
    %967 = vdwg.mxu0
    %v968 = vadd.f32 %v942, %v966
    %v969 = vxor.u32 %v968, 2147483648
    %v970 = vmul.f32 %v969, 1.442695
    %v971 = vpow.pop %v970
    %v972 = vadd.f32 %v971, 1.0
    %v973 = vrcp.pop %v972
    %v974 = vmul.f32 %v972, %v973
    %v975 = vsub.f32 1.0, %v974
    %v976 = vmul.f32 %v973, %v975
    %v977 = vadd.f32 %v973, %v976
    %vm978 = vweird.f32 %v972
    %vm979 = vweird.f32 %v973
    %vm980 = vmor %vm978, %vm979
    %v981 = vsel %vm980, %v973, %v977
    %v982 = vand.u32 2147483647, %v972
    %vm983 = vcmp.eq.f32.partialorder %v982, 8.507059e+37
    %v984 = vand.u32 %v972, 2147483648
    %v985 = vor.u32 1.1754944e-38, %v984
    %v986 = vsel %vm983, %v985, %v981
    %v987 = vmul.f32 1.0, %v986
    %v988 = vtanh.pop %v968
    %v989 = vmul.f32 %v987, %v935
    %991 = vrot.lane.b32.xlu0 %v988, 32
    %v992 = vpop.permute.xlu0 %991
    %v994 = vmul.f32 %v987, %v992
    %996 = vrot.lane.b32.xlu0 %v994, 32
    %v997 = vpop.permute.xlu0 %996
    %v999 = vadd.f32 %v989, %v997
    %v1000 = vtanh.pop %v999
    %1002 = vrot.lane.b32.xlu0 %v1000, 32
    %v1003 = vpop.permute.xlu0 %1002
    %v1005 = vmul.f32 %v987, %v1003
    %v1006 = vld [vmem:[#allocation2 + $0x20] sm:$0xff]
    %1008 = vrot.lane.b32.xlu0 %v1005, 64
    %v1009 = vpop.permute.xlu0 %1008
    %v1010 = vsel %vm880, %v1009, 0
    %1012 = vmatpush.msra.mxu0 0.0
    %1013 = vmatpush.msra.mxu0 0.0
    %1014 = vmatpush.msra.mxu0 0.0
    %1015 = vmatpush.msra.mxu0 0.0
    %1016 = vmatpush.msra.mxu0 0.0
    %1017 = vmatpush.msra.mxu0 0.0
    %1018 = vmatpush.msra.mxu0 0.0
    %1019 = vmatpush.msra.mxu0 0.0
    %1020 = vmatpush.msra.mxu0 0.0
    %1021 = vmatpush.msra.mxu0 0.0
    %1022 = vmatpush.msra.mxu0 0.0
    %1023 = vmatpush.msra.mxu0 0.0
    %1024 = vmatpush.msra.mxu0 %v874
    %1025 = vmatpush.msra.mxu0 %v873
    %1026 = vmatpush.msra.mxu0 %v872
    %1027 = vmatpush.msra.mxu0 %v871
    %1028 = vmatmul.f32.gmra.mxu0 %v1010
    %v1029 = vpop.f32.mrf.mxu0
    %v1030 = vadd.f32 0.0, %v1029
    %1031 = vdwg.mxu0
    %v1032 = vadd.f32 %v1006, %v1030
    %v1033 = vxor.u32 %v1032, 2147483648
    %v1034 = vmul.f32 %v1033, 1.442695
    %v1035 = vpow.pop %v1034
    %v1036 = vadd.f32 %v1035, 1.0
    %v1037 = vrcp.pop %v1036
    %v1038 = vmul.f32 %v1036, %v1037
    %v1039 = vsub.f32 1.0, %v1038
    %v1040 = vmul.f32 %v1037, %v1039
    %v1041 = vadd.f32 %v1037, %v1040
    %vm1042 = vweird.f32 %v1036
    %vm1043 = vweird.f32 %v1037
    %vm1044 = vmor %vm1042, %vm1043
    %v1045 = vsel %vm1044, %v1037, %v1041
    %v1046 = vand.u32 2147483647, %v1036
    %vm1047 = vcmp.eq.f32.partialorder %v1046, 8.507059e+37
    %v1048 = vand.u32 %v1036, 2147483648
    %v1049 = vor.u32 1.1754944e-38, %v1048
    %v1050 = vsel %vm1047, %v1049, %v1045
    %v1051 = vmul.f32 1.0, %v1050
    %v1052 = vtanh.pop %v1032
    %v1053 = vmul.f32 %v1051, %v999
    %1055 = vrot.lane.b32.xlu0 %v1052, 32
    %v1056 = vpop.permute.xlu0 %1055
    %v1058 = vmul.f32 %v1051, %v1056
    %1060 = vrot.lane.b32.xlu0 %v1058, 32
    %v1061 = vpop.permute.xlu0 %1060
    %v1063 = vadd.f32 %v1053, %v1061
    %v1064 = vtanh.pop %v1063
    %1066 = vrot.lane.b32.xlu0 %v1064, 32
    %v1067 = vpop.permute.xlu0 %1066
    %v1069 = vmul.f32 %v1051, %v1067
    %v1070 = vld [vmem:[#allocation2 + $0x30] sm:$0xff]
    %1072 = vrot.lane.b32.xlu0 %v1069, 64
    %v1073 = vpop.permute.xlu0 %1072
    %v1074 = vsel %vm880, %v1073, 0
    %1076 = vmatpush.msra.mxu0 0.0
    %1077 = vmatpush.msra.mxu0 0.0
    %1078 = vmatpush.msra.mxu0 0.0
    %1079 = vmatpush.msra.mxu0 0.0
    %1080 = vmatpush.msra.mxu0 0.0
    %1081 = vmatpush.msra.mxu0 0.0
    %1082 = vmatpush.msra.mxu0 0.0
    %1083 = vmatpush.msra.mxu0 0.0
    %1084 = vmatpush.msra.mxu0 0.0
    %1085 = vmatpush.msra.mxu0 0.0
    %1086 = vmatpush.msra.mxu0 0.0
    %1087 = vmatpush.msra.mxu0 0.0
    %1088 = vmatpush.msra.mxu0 %v874
    %1089 = vmatpush.msra.mxu0 %v873
    %1090 = vmatpush.msra.mxu0 %v872
    %1091 = vmatpush.msra.mxu0 %v871
    %1092 = vmatmul.f32.gmra.mxu0 %v1074
    %v1093 = vpop.f32.mrf.mxu0
    %v1094 = vadd.f32 0.0, %v1093
    %1095 = vdwg.mxu0
    %v1096 = vadd.f32 %v1070, %v1094
    %v1097 = vxor.u32 %v1096, 2147483648
    %v1098 = vmul.f32 %v1097, 1.442695
    %v1099 = vpow.pop %v1098
    %v1100 = vadd.f32 %v1099, 1.0
    %v1101 = vrcp.pop %v1100
    %v1102 = vmul.f32 %v1100, %v1101
    %v1103 = vsub.f32 1.0, %v1102
    %v1104 = vmul.f32 %v1101, %v1103
    %v1105 = vadd.f32 %v1101, %v1104
    %vm1106 = vweird.f32 %v1100
    %vm1107 = vweird.f32 %v1101
    %vm1108 = vmor %vm1106, %vm1107
    %v1109 = vsel %vm1108, %v1101, %v1105
    %v1110 = vand.u32 2147483647, %v1100
    %vm1111 = vcmp.eq.f32.partialorder %v1110, 8.507059e+37
    %v1112 = vand.u32 %v1100, 2147483648
    %v1113 = vor.u32 1.1754944e-38, %v1112
    %v1114 = vsel %vm1111, %v1113, %v1109
    %v1115 = vmul.f32 1.0, %v1114
    %v1116 = vtanh.pop %v1096
    %v1117 = vmul.f32 %v1115, %v1063
    %1119 = vrot.lane.b32.xlu0 %v1116, 32
    %v1120 = vpop.permute.xlu0 %1119
    %v1122 = vmul.f32 %v1115, %v1120
    %1124 = vrot.lane.b32.xlu0 %v1122, 32
    %v1125 = vpop.permute.xlu0 %1124
    %v1127 = vadd.f32 %v1117, %v1125
    %v1128 = vtanh.pop %v1127
    %1130 = vrot.lane.b32.xlu0 %v1128, 32
    %v1131 = vpop.permute.xlu0 %1130
    %v1133 = vmul.f32 %v1115, %v1131
    %v1134 = vld [vmem:[#allocation2 + $0x40] sm:$0xff]
    %1136 = vrot.lane.b32.xlu0 %v1133, 64
    %v1137 = vpop.permute.xlu0 %1136
    %v1138 = vsel %vm880, %v1137, 0
    %1140 = vmatpush.msra.mxu0 0.0
    %1141 = vmatpush.msra.mxu0 0.0
    %1142 = vmatpush.msra.mxu0 0.0
    %1143 = vmatpush.msra.mxu0 0.0
    %1144 = vmatpush.msra.mxu0 0.0
    %1145 = vmatpush.msra.mxu0 0.0
    %1146 = vmatpush.msra.mxu0 0.0
    %1147 = vmatpush.msra.mxu0 0.0
    %1148 = vmatpush.msra.mxu0 0.0
    %1149 = vmatpush.msra.mxu0 0.0
    %1150 = vmatpush.msra.mxu0 0.0
    %1151 = vmatpush.msra.mxu0 0.0
    %1152 = vmatpush.msra.mxu0 %v874
    %1153 = vmatpush.msra.mxu0 %v873
    %1154 = vmatpush.msra.mxu0 %v872
    %1155 = vmatpush.msra.mxu0 %v871
    %1156 = vmatmul.f32.gmra.mxu0 %v1138
    %v1157 = vpop.f32.mrf.mxu0
    %v1158 = vadd.f32 0.0, %v1157
    %1159 = vdwg.mxu0
    %v1160 = vadd.f32 %v1134, %v1158
    %v1161 = vxor.u32 %v1160, 2147483648
    %v1162 = vmul.f32 %v1161, 1.442695
    %v1163 = vpow.pop %v1162
    %v1164 = vadd.f32 %v1163, 1.0
    %v1165 = vrcp.pop %v1164
    %v1166 = vmul.f32 %v1164, %v1165
    %v1167 = vsub.f32 1.0, %v1166
    %v1168 = vmul.f32 %v1165, %v1167
    %v1169 = vadd.f32 %v1165, %v1168
    %vm1170 = vweird.f32 %v1164
    %vm1171 = vweird.f32 %v1165
    %vm1172 = vmor %vm1170, %vm1171
    %v1173 = vsel %vm1172, %v1165, %v1169
    %v1174 = vand.u32 2147483647, %v1164
    %vm1175 = vcmp.eq.f32.partialorder %v1174, 8.507059e+37
    %v1176 = vand.u32 %v1164, 2147483648
    %v1177 = vor.u32 1.1754944e-38, %v1176
    %v1178 = vsel %vm1175, %v1177, %v1173
    %v1179 = vmul.f32 1.0, %v1178
    %v1180 = vtanh.pop %v1160
    %v1181 = vmul.f32 %v1179, %v1127
    %1183 = vrot.lane.b32.xlu0 %v1180, 32
    %v1184 = vpop.permute.xlu0 %1183
    %v1186 = vmul.f32 %v1179, %v1184
    %1188 = vrot.lane.b32.xlu0 %v1186, 32
    %v1189 = vpop.permute.xlu0 %1188
    %v1191 = vadd.f32 %v1181, %v1189
    %v1192 = vtanh.pop %v1191
    %1194 = vrot.lane.b32.xlu0 %v1192, 32
    %v1195 = vpop.permute.xlu0 %1194
    %v1197 = vmul.f32 %v1179, %v1195
    %v1198 = vld [vmem:[#allocation2 + $0x50] sm:$0xff]
    %1200 = vrot.lane.b32.xlu0 %v1197, 64
    %v1201 = vpop.permute.xlu0 %1200
    %v1202 = vsel %vm880, %v1201, 0
    %1204 = vmatpush.msra.mxu0 0.0
    %1205 = vmatpush.msra.mxu0 0.0
    %1206 = vmatpush.msra.mxu0 0.0
    %1207 = vmatpush.msra.mxu0 0.0
    %1208 = vmatpush.msra.mxu0 0.0
    %1209 = vmatpush.msra.mxu0 0.0
    %1210 = vmatpush.msra.mxu0 0.0
    %1211 = vmatpush.msra.mxu0 0.0
    %1212 = vmatpush.msra.mxu0 0.0
    %1213 = vmatpush.msra.mxu0 0.0
    %1214 = vmatpush.msra.mxu0 0.0
    %1215 = vmatpush.msra.mxu0 0.0
    %1216 = vmatpush.msra.mxu0 %v874
    %1217 = vmatpush.msra.mxu0 %v873
    %1218 = vmatpush.msra.mxu0 %v872
    %1219 = vmatpush.msra.mxu0 %v871
    %1220 = vmatmul.f32.gmra.mxu0 %v1202
    %v1221 = vpop.f32.mrf.mxu0
    %v1222 = vadd.f32 0.0, %v1221
    %1223 = vdwg.mxu0
    %v1224 = vadd.f32 %v1198, %v1222
    %v1225 = vxor.u32 %v1224, 2147483648
    %v1226 = vmul.f32 %v1225, 1.442695
    %v1227 = vpow.pop %v1226
    %v1228 = vadd.f32 %v1227, 1.0
    %v1229 = vrcp.pop %v1228
    %v1230 = vmul.f32 %v1228, %v1229
    %v1231 = vsub.f32 1.0, %v1230
    %v1232 = vmul.f32 %v1229, %v1231
    %v1233 = vadd.f32 %v1229, %v1232
    %vm1234 = vweird.f32 %v1228
    %vm1235 = vweird.f32 %v1229
    %vm1236 = vmor %vm1234, %vm1235
    %v1237 = vsel %vm1236, %v1229, %v1233
    %v1238 = vand.u32 2147483647, %v1228
    %vm1239 = vcmp.eq.f32.partialorder %v1238, 8.507059e+37
    %v1240 = vand.u32 %v1228, 2147483648
    %v1241 = vor.u32 1.1754944e-38, %v1240
    %v1242 = vsel %vm1239, %v1241, %v1237
    %v1243 = vmul.f32 1.0, %v1242
    %v1244 = vtanh.pop %v1224
    %v1245 = vmul.f32 %v1243, %v1191
    %1247 = vrot.lane.b32.xlu0 %v1244, 32
    %v1248 = vpop.permute.xlu0 %1247
    %v1250 = vmul.f32 %v1243, %v1248
    %1252 = vrot.lane.b32.xlu0 %v1250, 32
    %v1253 = vpop.permute.xlu0 %1252
    %v1255 = vadd.f32 %v1245, %v1253
    %v1256 = vtanh.pop %v1255
    %1258 = vrot.lane.b32.xlu0 %v1256, 32
    %v1259 = vpop.permute.xlu0 %1258
    %v1261 = vmul.f32 %v1243, %v1259
    %v1262 = vld [vmem:[#allocation2 + $0x60] sm:$0xff]
    %1264 = vrot.lane.b32.xlu0 %v1261, 64
    %v1265 = vpop.permute.xlu0 %1264
    %v1266 = vsel %vm880, %v1265, 0
    %1268 = vmatpush.msra.mxu0 0.0
    %1269 = vmatpush.msra.mxu0 0.0
    %1270 = vmatpush.msra.mxu0 0.0
    %1271 = vmatpush.msra.mxu0 0.0
    %1272 = vmatpush.msra.mxu0 0.0
    %1273 = vmatpush.msra.mxu0 0.0
    %1274 = vmatpush.msra.mxu0 0.0
    %1275 = vmatpush.msra.mxu0 0.0
    %1276 = vmatpush.msra.mxu0 0.0
    %1277 = vmatpush.msra.mxu0 0.0
    %1278 = vmatpush.msra.mxu0 0.0
    %1279 = vmatpush.msra.mxu0 0.0
    %1280 = vmatpush.msra.mxu0 %v874
    %1281 = vmatpush.msra.mxu0 %v873
    %1282 = vmatpush.msra.mxu0 %v872
    %1283 = vmatpush.msra.mxu0 %v871
    %1284 = vmatmul.f32.gmra.mxu0 %v1266
    %v1285 = vpop.f32.mrf.mxu0
    %v1286 = vadd.f32 0.0, %v1285
    %1287 = vdwg.mxu0
    %v1288 = vadd.f32 %v1262, %v1286
    %v1289 = vxor.u32 %v1288, 2147483648
    %v1290 = vmul.f32 %v1289, 1.442695
    %v1291 = vpow.pop %v1290
    %v1292 = vadd.f32 %v1291, 1.0
    %v1293 = vrcp.pop %v1292
    %v1294 = vmul.f32 %v1292, %v1293
    %v1295 = vsub.f32 1.0, %v1294
    %v1296 = vmul.f32 %v1293, %v1295
    %v1297 = vadd.f32 %v1293, %v1296
    %vm1298 = vweird.f32 %v1292
    %vm1299 = vweird.f32 %v1293
    %vm1300 = vmor %vm1298, %vm1299
    %v1301 = vsel %vm1300, %v1293, %v1297
    %v1302 = vand.u32 2147483647, %v1292
    %vm1303 = vcmp.eq.f32.partialorder %v1302, 8.507059e+37
    %v1304 = vand.u32 %v1292, 2147483648
    %v1305 = vor.u32 1.1754944e-38, %v1304
    %v1306 = vsel %vm1303, %v1305, %v1301
    %v1307 = vmul.f32 1.0, %v1306
    %v1308 = vtanh.pop %v1288
    %v1309 = vmul.f32 %v1307, %v1255
    %1311 = vrot.lane.b32.xlu0 %v1308, 32
    %v1312 = vpop.permute.xlu0 %1311
    %v1314 = vmul.f32 %v1307, %v1312
    %1316 = vrot.lane.b32.xlu0 %v1314, 32
    %v1317 = vpop.permute.xlu0 %1316
    %v1319 = vadd.f32 %v1309, %v1317
    %v1320 = vtanh.pop %v1319
    %1322 = vrot.lane.b32.xlu0 %v1320, 32
    %v1323 = vpop.permute.xlu0 %1322
    %v1325 = vmul.f32 %v1307, %v1323
    %v1326 = vld [vmem:[#allocation2 + $0x70] sm:$0xff]
    %1328 = vrot.lane.b32.xlu0 %v1325, 64
    %v1329 = vpop.permute.xlu0 %1328
    %v1330 = vsel %vm880, %v1329, 0
    %1332 = vmatpush.msra.mxu0 0.0
    %1333 = vmatpush.msra.mxu0 0.0
    %1334 = vmatpush.msra.mxu0 0.0
    %1335 = vmatpush.msra.mxu0 0.0
    %1336 = vmatpush.msra.mxu0 0.0
    %1337 = vmatpush.msra.mxu0 0.0
    %1338 = vmatpush.msra.mxu0 0.0
    %1339 = vmatpush.msra.mxu0 0.0
    %1340 = vmatpush.msra.mxu0 0.0
    %1341 = vmatpush.msra.mxu0 0.0
    %1342 = vmatpush.msra.mxu0 0.0
    %1343 = vmatpush.msra.mxu0 0.0
    %1344 = vmatpush.msra.mxu0 %v874
    %1345 = vmatpush.msra.mxu0 %v873
    %1346 = vmatpush.msra.mxu0 %v872
    %1347 = vmatpush.msra.mxu0 %v871
    %1348 = vmatmul.f32.gmra.mxu0 %v1330
    %v1349 = vpop.f32.mrf.mxu0
    %v1350 = vadd.f32 0.0, %v1349
    %1351 = vdwg.mxu0
    %v1352 = vadd.f32 %v1326, %v1350
    %v1353 = vxor.u32 %v1352, 2147483648
    %v1354 = vmul.f32 %v1353, 1.442695
    %v1355 = vpow.pop %v1354
    %v1356 = vadd.f32 %v1355, 1.0
    %v1357 = vrcp.pop %v1356
    %v1358 = vmul.f32 %v1356, %v1357
    %v1359 = vsub.f32 1.0, %v1358
    %v1360 = vmul.f32 %v1357, %v1359
    %v1361 = vadd.f32 %v1357, %v1360
    %vm1362 = vweird.f32 %v1356
    %vm1363 = vweird.f32 %v1357
    %vm1364 = vmor %vm1362, %vm1363
    %v1365 = vsel %vm1364, %v1357, %v1361
    %v1366 = vand.u32 2147483647, %v1356
    %vm1367 = vcmp.eq.f32.partialorder %v1366, 8.507059e+37
    %v1368 = vand.u32 %v1356, 2147483648
    %v1369 = vor.u32 1.1754944e-38, %v1368
    %v1370 = vsel %vm1367, %v1369, %v1365
    %v1371 = vmul.f32 1.0, %v1370
    %v1372 = vtanh.pop %v1352
    %v1373 = vmul.f32 %v1371, %v1319
    %1375 = vrot.lane.b32.xlu0 %v1372, 32
    %v1376 = vpop.permute.xlu0 %1375
    %v1378 = vmul.f32 %v1371, %v1376
    %1380 = vrot.lane.b32.xlu0 %v1378, 32
    %v1381 = vpop.permute.xlu0 %1380
    %v1383 = vadd.f32 %v1373, %v1381
    %v1384 = vtanh.pop %v1383
    %1386 = vrot.lane.b32.xlu0 %v1384, 32
    %v1387 = vpop.permute.xlu0 %1386
    %v1389 = vmul.f32 %v1371, %v1387
    %v1390 = vld [vmem:[#allocation2 + $0x80] sm:$0xff]
    %1392 = vrot.lane.b32.xlu0 %v1389, 64
    %v1393 = vpop.permute.xlu0 %1392
    %v1394 = vsel %vm880, %v1393, 0
    %1396 = vmatpush.msra.mxu0 0.0
    %1397 = vmatpush.msra.mxu0 0.0
    %1398 = vmatpush.msra.mxu0 0.0
    %1399 = vmatpush.msra.mxu0 0.0
    %1400 = vmatpush.msra.mxu0 0.0
    %1401 = vmatpush.msra.mxu0 0.0
    %1402 = vmatpush.msra.mxu0 0.0
    %1403 = vmatpush.msra.mxu0 0.0
    %1404 = vmatpush.msra.mxu0 0.0
    %1405 = vmatpush.msra.mxu0 0.0
    %1406 = vmatpush.msra.mxu0 0.0
    %1407 = vmatpush.msra.mxu0 0.0
    %1408 = vmatpush.msra.mxu0 %v874
    %1409 = vmatpush.msra.mxu0 %v873
    %1410 = vmatpush.msra.mxu0 %v872
    %1411 = vmatpush.msra.mxu0 %v871
    %1412 = vmatmul.f32.gmra.mxu0 %v1394
    %v1413 = vpop.f32.mrf.mxu0
    %v1414 = vadd.f32 0.0, %v1413
    %1415 = vdwg.mxu0
    %v1416 = vadd.f32 %v1390, %v1414
    %v1417 = vxor.u32 %v1416, 2147483648
    %v1418 = vmul.f32 %v1417, 1.442695
    %v1419 = vpow.pop %v1418
    %v1420 = vadd.f32 %v1419, 1.0
    %v1421 = vrcp.pop %v1420
    %v1422 = vmul.f32 %v1420, %v1421
    %v1423 = vsub.f32 1.0, %v1422
    %v1424 = vmul.f32 %v1421, %v1423
    %v1425 = vadd.f32 %v1421, %v1424
    %vm1426 = vweird.f32 %v1420
    %vm1427 = vweird.f32 %v1421
    %vm1428 = vmor %vm1426, %vm1427
    %v1429 = vsel %vm1428, %v1421, %v1425
    %v1430 = vand.u32 2147483647, %v1420
    %vm1431 = vcmp.eq.f32.partialorder %v1430, 8.507059e+37
    %v1432 = vand.u32 %v1420, 2147483648
    %v1433 = vor.u32 1.1754944e-38, %v1432
    %v1434 = vsel %vm1431, %v1433, %v1429
    %v1435 = vmul.f32 1.0, %v1434
    %v1436 = vtanh.pop %v1416
    %v1437 = vmul.f32 %v1435, %v1383
    %1439 = vrot.lane.b32.xlu0 %v1436, 32
    %v1440 = vpop.permute.xlu0 %1439
    %v1442 = vmul.f32 %v1435, %v1440
    %1444 = vrot.lane.b32.xlu0 %v1442, 32
    %v1445 = vpop.permute.xlu0 %1444
    %v1447 = vadd.f32 %v1437, %v1445
    %v1448 = vtanh.pop %v1447
    %1450 = vrot.lane.b32.xlu0 %v1448, 32
    %v1451 = vpop.permute.xlu0 %1450
    %v1453 = vmul.f32 %v1435, %v1451
    %v1454 = vld [vmem:[#allocation2 + $0x90] sm:$0xff]
    %1456 = vrot.lane.b32.xlu0 %v1453, 64
    %v1457 = vpop.permute.xlu0 %1456
    %v1458 = vsel %vm880, %v1457, 0
    %1460 = vmatpush.msra.mxu0 0.0
    %1461 = vmatpush.msra.mxu0 0.0
    %1462 = vmatpush.msra.mxu0 0.0
    %1463 = vmatpush.msra.mxu0 0.0
    %1464 = vmatpush.msra.mxu0 0.0
    %1465 = vmatpush.msra.mxu0 0.0
    %1466 = vmatpush.msra.mxu0 0.0
    %1467 = vmatpush.msra.mxu0 0.0
    %1468 = vmatpush.msra.mxu0 0.0
    %1469 = vmatpush.msra.mxu0 0.0
    %1470 = vmatpush.msra.mxu0 0.0
    %1471 = vmatpush.msra.mxu0 0.0
    %1472 = vmatpush.msra.mxu0 %v874
    %1473 = vmatpush.msra.mxu0 %v873
    %1474 = vmatpush.msra.mxu0 %v872
    %1475 = vmatpush.msra.mxu0 %v871
    %1476 = vmatmul.f32.gmra.mxu0 %v1458
    %v1477 = vpop.f32.mrf.mxu0
    %v1478 = vadd.f32 0.0, %v1477
    %1479 = vdwg.mxu0
    %v1480 = vadd.f32 %v1454, %v1478
    %v1481 = vxor.u32 %v1480, 2147483648
    %v1482 = vmul.f32 %v1481, 1.442695
    %v1483 = vpow.pop %v1482
    %v1484 = vadd.f32 %v1483, 1.0
    %v1485 = vrcp.pop %v1484
    %v1486 = vmul.f32 %v1484, %v1485
    %v1487 = vsub.f32 1.0, %v1486
    %v1488 = vmul.f32 %v1485, %v1487
    %v1489 = vadd.f32 %v1485, %v1488
    %vm1490 = vweird.f32 %v1484
    %vm1491 = vweird.f32 %v1485
    %vm1492 = vmor %vm1490, %vm1491
    %v1493 = vsel %vm1492, %v1485, %v1489
    %v1494 = vand.u32 2147483647, %v1484
    %vm1495 = vcmp.eq.f32.partialorder %v1494, 8.507059e+37
    %v1496 = vand.u32 %v1484, 2147483648
    %v1497 = vor.u32 1.1754944e-38, %v1496
    %v1498 = vsel %vm1495, %v1497, %v1493
    %v1499 = vmul.f32 1.0, %v1498
    %v1500 = vtanh.pop %v1480
    %v1501 = vmul.f32 %v1499, %v1447
    %1503 = vrot.lane.b32.xlu0 %v1500, 32
    %v1504 = vpop.permute.xlu0 %1503
    %v1506 = vmul.f32 %v1499, %v1504
    %1508 = vrot.lane.b32.xlu0 %v1506, 32
    %v1509 = vpop.permute.xlu0 %1508
    %v1511 = vadd.f32 %v1501, %v1509
    %v1512 = vtanh.pop %v1511
    %1514 = vrot.lane.b32.xlu0 %v1512, 32
    %v1515 = vpop.permute.xlu0 %1514
    %v1517 = vmul.f32 %v1499, %v1515
    %v1518 = vld [vmem:[#allocation2 + $0xa0] sm:$0xff]
    %1520 = vrot.lane.b32.xlu0 %v1517, 64
    %v1521 = vpop.permute.xlu0 %1520
    %v1522 = vsel %vm880, %v1521, 0
    %1524 = vmatpush.msra.mxu0 0.0
    %1525 = vmatpush.msra.mxu0 0.0
    %1526 = vmatpush.msra.mxu0 0.0
    %1527 = vmatpush.msra.mxu0 0.0
    %1528 = vmatpush.msra.mxu0 0.0
    %1529 = vmatpush.msra.mxu0 0.0
    %1530 = vmatpush.msra.mxu0 0.0
    %1531 = vmatpush.msra.mxu0 0.0
    %1532 = vmatpush.msra.mxu0 0.0
    %1533 = vmatpush.msra.mxu0 0.0
    %1534 = vmatpush.msra.mxu0 0.0
    %1535 = vmatpush.msra.mxu0 0.0
    %1536 = vmatpush.msra.mxu0 %v874
    %1537 = vmatpush.msra.mxu0 %v873
    %1538 = vmatpush.msra.mxu0 %v872
    %1539 = vmatpush.msra.mxu0 %v871
    %1540 = vmatmul.f32.gmra.mxu0 %v1522
    %v1541 = vpop.f32.mrf.mxu0
    %v1542 = vadd.f32 0.0, %v1541
    %1543 = vdwg.mxu0
    %v1544 = vadd.f32 %v1518, %v1542
    %v1545 = vxor.u32 %v1544, 2147483648
    %v1546 = vmul.f32 %v1545, 1.442695
    %v1547 = vpow.pop %v1546
    %v1548 = vadd.f32 %v1547, 1.0
    %v1549 = vrcp.pop %v1548
    %v1550 = vmul.f32 %v1548, %v1549
    %v1551 = vsub.f32 1.0, %v1550
    %v1552 = vmul.f32 %v1549, %v1551
    %v1553 = vadd.f32 %v1549, %v1552
    %vm1554 = vweird.f32 %v1548
    %vm1555 = vweird.f32 %v1549
    %vm1556 = vmor %vm1554, %vm1555
    %v1557 = vsel %vm1556, %v1549, %v1553
    %v1558 = vand.u32 2147483647, %v1548
    %vm1559 = vcmp.eq.f32.partialorder %v1558, 8.507059e+37
    %v1560 = vand.u32 %v1548, 2147483648
    %v1561 = vor.u32 1.1754944e-38, %v1560
    %v1562 = vsel %vm1559, %v1561, %v1557
    %v1563 = vmul.f32 1.0, %v1562
    %v1564 = vtanh.pop %v1544
    %v1565 = vmul.f32 %v1563, %v1511
    %1567 = vrot.lane.b32.xlu0 %v1564, 32
    %v1568 = vpop.permute.xlu0 %1567
    %v1570 = vmul.f32 %v1563, %v1568
    %1572 = vrot.lane.b32.xlu0 %v1570, 32
    %v1573 = vpop.permute.xlu0 %1572
    %v1575 = vadd.f32 %v1565, %v1573
    %v1576 = vtanh.pop %v1575
    %1578 = vrot.lane.b32.xlu0 %v1576, 32
    %v1579 = vpop.permute.xlu0 %1578
    %v1581 = vmul.f32 %v1563, %v1579
    %v1582 = vld [vmem:[#allocation2 + $0xb0] sm:$0xff]
    %1584 = vrot.lane.b32.xlu0 %v1581, 64
    %v1585 = vpop.permute.xlu0 %1584
    %v1586 = vsel %vm880, %v1585, 0
    %1588 = vmatpush.msra.mxu0 0.0
    %1589 = vmatpush.msra.mxu0 0.0
    %1590 = vmatpush.msra.mxu0 0.0
    %1591 = vmatpush.msra.mxu0 0.0
    %1592 = vmatpush.msra.mxu0 0.0
    %1593 = vmatpush.msra.mxu0 0.0
    %1594 = vmatpush.msra.mxu0 0.0
    %1595 = vmatpush.msra.mxu0 0.0
    %1596 = vmatpush.msra.mxu0 0.0
    %1597 = vmatpush.msra.mxu0 0.0
    %1598 = vmatpush.msra.mxu0 0.0
    %1599 = vmatpush.msra.mxu0 0.0
    %1600 = vmatpush.msra.mxu0 %v874
    %1601 = vmatpush.msra.mxu0 %v873
    %1602 = vmatpush.msra.mxu0 %v872
    %1603 = vmatpush.msra.mxu0 %v871
    %1604 = vmatmul.f32.gmra.mxu0 %v1586
    %v1605 = vpop.f32.mrf.mxu0
    %v1606 = vadd.f32 0.0, %v1605
    %1607 = vdwg.mxu0
    %v1608 = vadd.f32 %v1582, %v1606
    %v1609 = vxor.u32 %v1608, 2147483648
    %v1610 = vmul.f32 %v1609, 1.442695
    %v1611 = vpow.pop %v1610
    %v1612 = vadd.f32 %v1611, 1.0
    %v1613 = vrcp.pop %v1612
    %v1614 = vmul.f32 %v1612, %v1613
    %v1615 = vsub.f32 1.0, %v1614
    %v1616 = vmul.f32 %v1613, %v1615
    %v1617 = vadd.f32 %v1613, %v1616
    %vm1618 = vweird.f32 %v1612
    %vm1619 = vweird.f32 %v1613
    %vm1620 = vmor %vm1618, %vm1619
    %v1621 = vsel %vm1620, %v1613, %v1617
    %v1622 = vand.u32 2147483647, %v1612
    %vm1623 = vcmp.eq.f32.partialorder %v1622, 8.507059e+37
    %v1624 = vand.u32 %v1612, 2147483648
    %v1625 = vor.u32 1.1754944e-38, %v1624
    %v1626 = vsel %vm1623, %v1625, %v1621
    %v1627 = vmul.f32 1.0, %v1626
    %v1628 = vtanh.pop %v1608
    %v1629 = vmul.f32 %v1627, %v1575
    %1631 = vrot.lane.b32.xlu0 %v1628, 32
    %v1632 = vpop.permute.xlu0 %1631
    %v1634 = vmul.f32 %v1627, %v1632
    %1636 = vrot.lane.b32.xlu0 %v1634, 32
    %v1637 = vpop.permute.xlu0 %1636
    %v1639 = vadd.f32 %v1629, %v1637
    %v1640 = vtanh.pop %v1639
    %1642 = vrot.lane.b32.xlu0 %v1640, 32
    %v1643 = vpop.permute.xlu0 %1642
    %v1645 = vmul.f32 %v1627, %v1643
    %v1646 = vld [vmem:[#allocation2 + $0xc0] sm:$0xff]
    %1648 = vrot.lane.b32.xlu0 %v1645, 64
    %v1649 = vpop.permute.xlu0 %1648
    %v1650 = vsel %vm880, %v1649, 0
    %1652 = vmatpush.msra.mxu0 0.0
    %1653 = vmatpush.msra.mxu0 0.0
    %1654 = vmatpush.msra.mxu0 0.0
    %1655 = vmatpush.msra.mxu0 0.0
    %1656 = vmatpush.msra.mxu0 0.0
    %1657 = vmatpush.msra.mxu0 0.0
    %1658 = vmatpush.msra.mxu0 0.0
    %1659 = vmatpush.msra.mxu0 0.0
    %1660 = vmatpush.msra.mxu0 0.0
    %1661 = vmatpush.msra.mxu0 0.0
    %1662 = vmatpush.msra.mxu0 0.0
    %1663 = vmatpush.msra.mxu0 0.0
    %1664 = vmatpush.msra.mxu0 %v874
    %1665 = vmatpush.msra.mxu0 %v873
    %1666 = vmatpush.msra.mxu0 %v872
    %1667 = vmatpush.msra.mxu0 %v871
    %1668 = vmatmul.f32.gmra.mxu0 %v1650
    %v1669 = vpop.f32.mrf.mxu0
    %v1670 = vadd.f32 0.0, %v1669
    %1671 = vdwg.mxu0
    %v1672 = vadd.f32 %v1646, %v1670
    %v1673 = vxor.u32 %v1672, 2147483648
    %v1674 = vmul.f32 %v1673, 1.442695
    %v1675 = vpow.pop %v1674
    %v1676 = vadd.f32 %v1675, 1.0
    %v1677 = vrcp.pop %v1676
    %v1678 = vmul.f32 %v1676, %v1677
    %v1679 = vsub.f32 1.0, %v1678
    %v1680 = vmul.f32 %v1677, %v1679
    %v1681 = vadd.f32 %v1677, %v1680
    %vm1682 = vweird.f32 %v1676
    %vm1683 = vweird.f32 %v1677
    %vm1684 = vmor %vm1682, %vm1683
    %v1685 = vsel %vm1684, %v1677, %v1681
    %v1686 = vand.u32 2147483647, %v1676
    %vm1687 = vcmp.eq.f32.partialorder %v1686, 8.507059e+37
    %v1688 = vand.u32 %v1676, 2147483648
    %v1689 = vor.u32 1.1754944e-38, %v1688
    %v1690 = vsel %vm1687, %v1689, %v1685
    %v1691 = vmul.f32 1.0, %v1690
    %v1692 = vtanh.pop %v1672
    %v1693 = vmul.f32 %v1691, %v1639
    %1695 = vrot.lane.b32.xlu0 %v1692, 32
    %v1696 = vpop.permute.xlu0 %1695
    %v1698 = vmul.f32 %v1691, %v1696
    %1700 = vrot.lane.b32.xlu0 %v1698, 32
    %v1701 = vpop.permute.xlu0 %1700
    %v1703 = vadd.f32 %v1693, %v1701
    %v1704 = vtanh.pop %v1703
    %1706 = vrot.lane.b32.xlu0 %v1704, 32
    %v1707 = vpop.permute.xlu0 %1706
    %v1709 = vmul.f32 %v1691, %v1707
    %v1710 = vld [vmem:[#allocation2 + $0xd0] sm:$0xff]
    %1712 = vrot.lane.b32.xlu0 %v1709, 64
    %v1713 = vpop.permute.xlu0 %1712
    %v1714 = vsel %vm880, %v1713, 0
    %1716 = vmatpush.msra.mxu0 0.0
    %1717 = vmatpush.msra.mxu0 0.0
    %1718 = vmatpush.msra.mxu0 0.0
    %1719 = vmatpush.msra.mxu0 0.0
    %1720 = vmatpush.msra.mxu0 0.0
    %1721 = vmatpush.msra.mxu0 0.0
    %1722 = vmatpush.msra.mxu0 0.0
    %1723 = vmatpush.msra.mxu0 0.0
    %1724 = vmatpush.msra.mxu0 0.0
    %1725 = vmatpush.msra.mxu0 0.0
    %1726 = vmatpush.msra.mxu0 0.0
    %1727 = vmatpush.msra.mxu0 0.0
    %1728 = vmatpush.msra.mxu0 %v874
    %1729 = vmatpush.msra.mxu0 %v873
    %1730 = vmatpush.msra.mxu0 %v872
    %1731 = vmatpush.msra.mxu0 %v871
    %1732 = vmatmul.f32.gmra.mxu0 %v1714
    %v1733 = vpop.f32.mrf.mxu0
    %v1734 = vadd.f32 0.0, %v1733
    %1735 = vdwg.mxu0
    %v1736 = vadd.f32 %v1710, %v1734
    %v1737 = vxor.u32 %v1736, 2147483648
    %v1738 = vmul.f32 %v1737, 1.442695
    %v1739 = vpow.pop %v1738
    %v1740 = vadd.f32 %v1739, 1.0
    %v1741 = vrcp.pop %v1740
    %v1742 = vmul.f32 %v1740, %v1741
    %v1743 = vsub.f32 1.0, %v1742
    %v1744 = vmul.f32 %v1741, %v1743
    %v1745 = vadd.f32 %v1741, %v1744
    %vm1746 = vweird.f32 %v1740
    %vm1747 = vweird.f32 %v1741
    %vm1748 = vmor %vm1746, %vm1747
    %v1749 = vsel %vm1748, %v1741, %v1745
    %v1750 = vand.u32 2147483647, %v1740
    %vm1751 = vcmp.eq.f32.partialorder %v1750, 8.507059e+37
    %v1752 = vand.u32 %v1740, 2147483648
    %v1753 = vor.u32 1.1754944e-38, %v1752
    %v1754 = vsel %vm1751, %v1753, %v1749
    %v1755 = vmul.f32 1.0, %v1754
    %v1756 = vtanh.pop %v1736
    %v1757 = vmul.f32 %v1755, %v1703
    %1759 = vrot.lane.b32.xlu0 %v1756, 32
    %v1760 = vpop.permute.xlu0 %1759
    %v1762 = vmul.f32 %v1755, %v1760
    %1764 = vrot.lane.b32.xlu0 %v1762, 32
    %v1765 = vpop.permute.xlu0 %1764
    %v1767 = vadd.f32 %v1757, %v1765
    %v1768 = vtanh.pop %v1767
    %1770 = vrot.lane.b32.xlu0 %v1768, 32
    %v1771 = vpop.permute.xlu0 %1770
    %v1773 = vmul.f32 %v1755, %v1771
    %v1774 = vld [vmem:[#allocation2 + $0xe0] sm:$0xff]
    %1776 = vrot.lane.b32.xlu0 %v1773, 64
    %v1777 = vpop.permute.xlu0 %1776
    %v1778 = vsel %vm880, %v1777, 0
    %1780 = vmatpush.msra.mxu0 0.0
    %1781 = vmatpush.msra.mxu0 0.0
    %1782 = vmatpush.msra.mxu0 0.0
    %1783 = vmatpush.msra.mxu0 0.0
    %1784 = vmatpush.msra.mxu0 0.0
    %1785 = vmatpush.msra.mxu0 0.0
    %1786 = vmatpush.msra.mxu0 0.0
    %1787 = vmatpush.msra.mxu0 0.0
    %1788 = vmatpush.msra.mxu0 0.0
    %1789 = vmatpush.msra.mxu0 0.0
    %1790 = vmatpush.msra.mxu0 0.0
    %1791 = vmatpush.msra.mxu0 0.0
    %1792 = vmatpush.msra.mxu0 %v874
    %1793 = vmatpush.msra.mxu0 %v873
    %1794 = vmatpush.msra.mxu0 %v872
    %1795 = vmatpush.msra.mxu0 %v871
    %1796 = vmatmul.f32.gmra.mxu0 %v1778
    %v1797 = vpop.f32.mrf.mxu0
    %v1798 = vadd.f32 0.0, %v1797
    %1799 = vdwg.mxu0
    %v1800 = vadd.f32 %v1774, %v1798
    %v1801 = vxor.u32 %v1800, 2147483648
    %v1802 = vmul.f32 %v1801, 1.442695
    %v1803 = vpow.pop %v1802
    %v1804 = vadd.f32 %v1803, 1.0
    %v1805 = vrcp.pop %v1804
    %v1806 = vmul.f32 %v1804, %v1805
    %v1807 = vsub.f32 1.0, %v1806
    %v1808 = vmul.f32 %v1805, %v1807
    %v1809 = vadd.f32 %v1805, %v1808
    %vm1810 = vweird.f32 %v1804
    %vm1811 = vweird.f32 %v1805
    %vm1812 = vmor %vm1810, %vm1811
    %v1813 = vsel %vm1812, %v1805, %v1809
    %v1814 = vand.u32 2147483647, %v1804
    %vm1815 = vcmp.eq.f32.partialorder %v1814, 8.507059e+37
    %v1816 = vand.u32 %v1804, 2147483648
    %v1817 = vor.u32 1.1754944e-38, %v1816
    %v1818 = vsel %vm1815, %v1817, %v1813
    %v1819 = vmul.f32 1.0, %v1818
    %v1820 = vtanh.pop %v1800
    %v1821 = vmul.f32 %v1819, %v1767
    %1823 = vrot.lane.b32.xlu0 %v1820, 32
    %v1824 = vpop.permute.xlu0 %1823
    %v1826 = vmul.f32 %v1819, %v1824
    %1828 = vrot.lane.b32.xlu0 %v1826, 32
    %v1829 = vpop.permute.xlu0 %1828
    %v1831 = vadd.f32 %v1821, %v1829
    %v1832 = vtanh.pop %v1831
    %1834 = vrot.lane.b32.xlu0 %v1832, 32
    %v1835 = vpop.permute.xlu0 %1834
    %v1837 = vmul.f32 %v1819, %v1835
    %v1838 = vld [vmem:[#allocation2 + $0xf0] sm:$0xff]
    %1840 = vrot.lane.b32.xlu0 %v1837, 64
    %v1841 = vpop.permute.xlu0 %1840
    %v1842 = vsel %vm880, %v1841, 0
    %1844 = vmatpush.msra.mxu0 0.0
    %1845 = vmatpush.msra.mxu0 0.0
    %1846 = vmatpush.msra.mxu0 0.0
    %1847 = vmatpush.msra.mxu0 0.0
    %1848 = vmatpush.msra.mxu0 0.0
    %1849 = vmatpush.msra.mxu0 0.0
    %1850 = vmatpush.msra.mxu0 0.0
    %1851 = vmatpush.msra.mxu0 0.0
    %1852 = vmatpush.msra.mxu0 0.0
    %1853 = vmatpush.msra.mxu0 0.0
    %1854 = vmatpush.msra.mxu0 0.0
    %1855 = vmatpush.msra.mxu0 0.0
    %1856 = vmatpush.msra.mxu0 %v874
    %1857 = vmatpush.msra.mxu0 %v873
    %1858 = vmatpush.msra.mxu0 %v872
    %1859 = vmatpush.msra.mxu0 %v871
    %1860 = vmatmul.f32.gmra.mxu0 %v1842
    %v1861 = vpop.f32.mrf.mxu0
    %v1862 = vadd.f32 0.0, %v1861
    %1863 = vdwg.mxu0
    %v1864 = vadd.f32 %v1838, %v1862
    %v1865 = vxor.u32 %v1864, 2147483648
    %v1866 = vmul.f32 %v1865, 1.442695
    %v1867 = vpow.pop %v1866
    %v1868 = vadd.f32 %v1867, 1.0
    %v1869 = vrcp.pop %v1868
    %v1870 = vmul.f32 %v1868, %v1869
    %v1871 = vsub.f32 1.0, %v1870
    %v1872 = vmul.f32 %v1869, %v1871
    %v1873 = vadd.f32 %v1869, %v1872
    %vm1874 = vweird.f32 %v1868
    %vm1875 = vweird.f32 %v1869
    %vm1876 = vmor %vm1874, %vm1875
    %v1877 = vsel %vm1876, %v1869, %v1873
    %v1878 = vand.u32 2147483647, %v1868
    %vm1879 = vcmp.eq.f32.partialorder %v1878, 8.507059e+37
    %v1880 = vand.u32 %v1868, 2147483648
    %v1881 = vor.u32 1.1754944e-38, %v1880
    %v1882 = vsel %vm1879, %v1881, %v1877
    %v1883 = vmul.f32 1.0, %v1882
    %v1884 = vtanh.pop %v1864
    %v1885 = vmul.f32 %v1883, %v1831
    %1887 = vrot.lane.b32.xlu0 %v1884, 32
    %v1888 = vpop.permute.xlu0 %1887
    %v1890 = vmul.f32 %v1883, %v1888
    %1892 = vrot.lane.b32.xlu0 %v1890, 32
    %v1893 = vpop.permute.xlu0 %1892
    %v1895 = vadd.f32 %v1885, %v1893
    %v1896 = vtanh.pop %v1895
    %1898 = vrot.lane.b32.xlu0 %v1896, 32
    %v1899 = vpop.permute.xlu0 %1898
    %v1901 = vmul.f32 %v1883, %v1899
    %v1902 = vld [vmem:[#allocation2 + $0x100] sm:$0xff]
    %1904 = vrot.lane.b32.xlu0 %v1901, 64
    %v1905 = vpop.permute.xlu0 %1904
    %v1906 = vsel %vm880, %v1905, 0
    %1908 = vmatpush.msra.mxu0 0.0
    %1909 = vmatpush.msra.mxu0 0.0
    %1910 = vmatpush.msra.mxu0 0.0
    %1911 = vmatpush.msra.mxu0 0.0
    %1912 = vmatpush.msra.mxu0 0.0
    %1913 = vmatpush.msra.mxu0 0.0
    %1914 = vmatpush.msra.mxu0 0.0
    %1915 = vmatpush.msra.mxu0 0.0
    %1916 = vmatpush.msra.mxu0 0.0
    %1917 = vmatpush.msra.mxu0 0.0
    %1918 = vmatpush.msra.mxu0 0.0
    %1919 = vmatpush.msra.mxu0 0.0
    %1920 = vmatpush.msra.mxu0 %v874
    %1921 = vmatpush.msra.mxu0 %v873
    %1922 = vmatpush.msra.mxu0 %v872
    %1923 = vmatpush.msra.mxu0 %v871
    %1924 = vmatmul.f32.gmra.mxu0 %v1906
    %v1925 = vpop.f32.mrf.mxu0
    %v1926 = vadd.f32 0.0, %v1925
    %1927 = vdwg.mxu0
    %v1928 = vadd.f32 %v1902, %v1926
    %v1929 = vxor.u32 %v1928, 2147483648
    %v1930 = vmul.f32 %v1929, 1.442695
    %v1931 = vpow.pop %v1930
    %v1932 = vadd.f32 %v1931, 1.0
    %v1933 = vrcp.pop %v1932
    %v1934 = vmul.f32 %v1932, %v1933
    %v1935 = vsub.f32 1.0, %v1934
    %v1936 = vmul.f32 %v1933, %v1935
    %v1937 = vadd.f32 %v1933, %v1936
    %vm1938 = vweird.f32 %v1932
    %vm1939 = vweird.f32 %v1933
    %vm1940 = vmor %vm1938, %vm1939
    %v1941 = vsel %vm1940, %v1933, %v1937
    %v1942 = vand.u32 2147483647, %v1932
    %vm1943 = vcmp.eq.f32.partialorder %v1942, 8.507059e+37
    %v1944 = vand.u32 %v1932, 2147483648
    %v1945 = vor.u32 1.1754944e-38, %v1944
    %v1946 = vsel %vm1943, %v1945, %v1941
    %v1947 = vmul.f32 1.0, %v1946
    %v1948 = vtanh.pop %v1928
    %v1949 = vmul.f32 %v1947, %v1895
    %1951 = vrot.lane.b32.xlu0 %v1948, 32
    %v1952 = vpop.permute.xlu0 %1951
    %v1954 = vmul.f32 %v1947, %v1952
    %1956 = vrot.lane.b32.xlu0 %v1954, 32
    %v1957 = vpop.permute.xlu0 %1956
    %v1959 = vadd.f32 %v1949, %v1957
    %v1960 = vtanh.pop %v1959
    %1962 = vrot.lane.b32.xlu0 %v1960, 32
    %v1963 = vpop.permute.xlu0 %1962
    %v1965 = vmul.f32 %v1947, %v1963
    %v1966 = vld [vmem:[#allocation2 + $0x110] sm:$0xff]
    %1968 = vrot.lane.b32.xlu0 %v1965, 64
    %v1969 = vpop.permute.xlu0 %1968
    %v1970 = vsel %vm880, %v1969, 0
    %1972 = vmatpush.msra.mxu0 0.0
    %1973 = vmatpush.msra.mxu0 0.0
    %1974 = vmatpush.msra.mxu0 0.0
    %1975 = vmatpush.msra.mxu0 0.0
    %1976 = vmatpush.msra.mxu0 0.0
    %1977 = vmatpush.msra.mxu0 0.0
    %1978 = vmatpush.msra.mxu0 0.0
    %1979 = vmatpush.msra.mxu0 0.0
    %1980 = vmatpush.msra.mxu0 0.0
    %1981 = vmatpush.msra.mxu0 0.0
    %1982 = vmatpush.msra.mxu0 0.0
    %1983 = vmatpush.msra.mxu0 0.0
    %1984 = vmatpush.msra.mxu0 %v874
    %1985 = vmatpush.msra.mxu0 %v873
    %1986 = vmatpush.msra.mxu0 %v872
    %1987 = vmatpush.msra.mxu0 %v871
    %1988 = vmatmul.f32.gmra.mxu0 %v1970
    %v1989 = vpop.f32.mrf.mxu0
    %v1990 = vadd.f32 0.0, %v1989
    %1991 = vdwg.mxu0
    %v1992 = vadd.f32 %v1966, %v1990
    %v1993 = vxor.u32 %v1992, 2147483648
    %v1994 = vmul.f32 %v1993, 1.442695
    %v1995 = vpow.pop %v1994
    %v1996 = vadd.f32 %v1995, 1.0
    %v1997 = vrcp.pop %v1996
    %v1998 = vmul.f32 %v1996, %v1997
    %v1999 = vsub.f32 1.0, %v1998
    %v2000 = vmul.f32 %v1997, %v1999
    %v2001 = vadd.f32 %v1997, %v2000
    %vm2002 = vweird.f32 %v1996
    %vm2003 = vweird.f32 %v1997
    %vm2004 = vmor %vm2002, %vm2003
    %v2005 = vsel %vm2004, %v1997, %v2001
    %v2006 = vand.u32 2147483647, %v1996
    %vm2007 = vcmp.eq.f32.partialorder %v2006, 8.507059e+37
    %v2008 = vand.u32 %v1996, 2147483648
    %v2009 = vor.u32 1.1754944e-38, %v2008
    %v2010 = vsel %vm2007, %v2009, %v2005
    %v2011 = vmul.f32 1.0, %v2010
    %v2012 = vtanh.pop %v1992
    %v2013 = vmul.f32 %v2011, %v1959
    %2015 = vrot.lane.b32.xlu0 %v2012, 32
    %v2016 = vpop.permute.xlu0 %2015
    %v2018 = vmul.f32 %v2011, %v2016
    %2020 = vrot.lane.b32.xlu0 %v2018, 32
    %v2021 = vpop.permute.xlu0 %2020
    %v2023 = vadd.f32 %v2013, %v2021
    %v2024 = vtanh.pop %v2023
    %2026 = vrot.lane.b32.xlu0 %v2024, 32
    %v2027 = vpop.permute.xlu0 %2026
    %v2029 = vmul.f32 %v2011, %v2027
    %v2030 = vld [vmem:[#allocation2 + $0x120] sm:$0xff]
    %2032 = vrot.lane.b32.xlu0 %v2029, 64
    %v2033 = vpop.permute.xlu0 %2032
    %v2034 = vsel %vm880, %v2033, 0
    %2036 = vmatpush.msra.mxu0 0.0
    %2037 = vmatpush.msra.mxu0 0.0
    %2038 = vmatpush.msra.mxu0 0.0
    %2039 = vmatpush.msra.mxu0 0.0
    %2040 = vmatpush.msra.mxu0 0.0
    %2041 = vmatpush.msra.mxu0 0.0
    %2042 = vmatpush.msra.mxu0 0.0
    %2043 = vmatpush.msra.mxu0 0.0
    %2044 = vmatpush.msra.mxu0 0.0
    %2045 = vmatpush.msra.mxu0 0.0
    %2046 = vmatpush.msra.mxu0 0.0
    %2047 = vmatpush.msra.mxu0 0.0
    %2048 = vmatpush.msra.mxu0 %v874
    %2049 = vmatpush.msra.mxu0 %v873
    %2050 = vmatpush.msra.mxu0 %v872
    %2051 = vmatpush.msra.mxu0 %v871
    %2052 = vmatmul.f32.gmra.mxu0 %v2034
    %v2053 = vpop.f32.mrf.mxu0
    %v2054 = vadd.f32 0.0, %v2053
    %2055 = vdwg.mxu0
    %v2056 = vadd.f32 %v2030, %v2054
    %v2057 = vxor.u32 %v2056, 2147483648
    %v2058 = vmul.f32 %v2057, 1.442695
    %v2059 = vpow.pop %v2058
    %v2060 = vadd.f32 %v2059, 1.0
    %v2061 = vrcp.pop %v2060
    %v2062 = vmul.f32 %v2060, %v2061
    %v2063 = vsub.f32 1.0, %v2062
    %v2064 = vmul.f32 %v2061, %v2063
    %v2065 = vadd.f32 %v2061, %v2064
    %vm2066 = vweird.f32 %v2060
    %vm2067 = vweird.f32 %v2061
    %vm2068 = vmor %vm2066, %vm2067
    %v2069 = vsel %vm2068, %v2061, %v2065
    %v2070 = vand.u32 2147483647, %v2060
    %vm2071 = vcmp.eq.f32.partialorder %v2070, 8.507059e+37
    %v2072 = vand.u32 %v2060, 2147483648
    %v2073 = vor.u32 1.1754944e-38, %v2072
    %v2074 = vsel %vm2071, %v2073, %v2069
    %v2075 = vmul.f32 1.0, %v2074
    %v2076 = vtanh.pop %v2056
    %v2077 = vmul.f32 %v2075, %v2023
    %2079 = vrot.lane.b32.xlu0 %v2076, 32
    %v2080 = vpop.permute.xlu0 %2079
    %v2082 = vmul.f32 %v2075, %v2080
    %2084 = vrot.lane.b32.xlu0 %v2082, 32
    %v2085 = vpop.permute.xlu0 %2084
    %v2087 = vadd.f32 %v2077, %v2085
    %v2088 = vtanh.pop %v2087
    %2090 = vrot.lane.b32.xlu0 %v2088, 32
    %v2091 = vpop.permute.xlu0 %2090
    %v2093 = vmul.f32 %v2075, %v2091
    %v2094 = vld [vmem:[#allocation2 + $0x130] sm:$0xff]
    %2096 = vrot.lane.b32.xlu0 %v2093, 64
    %v2097 = vpop.permute.xlu0 %2096
    %v2098 = vsel %vm880, %v2097, 0
    %2100 = vmatpush.msra.mxu0 0.0
    %2101 = vmatpush.msra.mxu0 0.0
    %2102 = vmatpush.msra.mxu0 0.0
    %2103 = vmatpush.msra.mxu0 0.0
    %2104 = vmatpush.msra.mxu0 0.0
    %2105 = vmatpush.msra.mxu0 0.0
    %2106 = vmatpush.msra.mxu0 0.0
    %2107 = vmatpush.msra.mxu0 0.0
    %2108 = vmatpush.msra.mxu0 0.0
    %2109 = vmatpush.msra.mxu0 0.0
    %2110 = vmatpush.msra.mxu0 0.0
    %2111 = vmatpush.msra.mxu0 0.0
    %2112 = vmatpush.msra.mxu0 %v874
    %2113 = vmatpush.msra.mxu0 %v873
    %2114 = vmatpush.msra.mxu0 %v872
    %2115 = vmatpush.msra.mxu0 %v871
    %2116 = vmatmul.f32.gmra.mxu0 %v2098
    %v2117 = vpop.f32.mrf.mxu0
    %v2118 = vadd.f32 0.0, %v2117
    %2119 = vdwg.mxu0
    %v2120 = vadd.f32 %v2094, %v2118
    %v2121 = vxor.u32 %v2120, 2147483648
    %v2122 = vmul.f32 %v2121, 1.442695
    %v2123 = vpow.pop %v2122
    %v2124 = vadd.f32 %v2123, 1.0
    %v2125 = vrcp.pop %v2124
    %v2126 = vmul.f32 %v2124, %v2125
    %v2127 = vsub.f32 1.0, %v2126
    %v2128 = vmul.f32 %v2125, %v2127
    %v2129 = vadd.f32 %v2125, %v2128
    %vm2130 = vweird.f32 %v2124
    %vm2131 = vweird.f32 %v2125
    %vm2132 = vmor %vm2130, %vm2131
    %v2133 = vsel %vm2132, %v2125, %v2129
    %v2134 = vand.u32 2147483647, %v2124
    %vm2135 = vcmp.eq.f32.partialorder %v2134, 8.507059e+37
    %v2136 = vand.u32 %v2124, 2147483648
    %v2137 = vor.u32 1.1754944e-38, %v2136
    %v2138 = vsel %vm2135, %v2137, %v2133
    %v2139 = vmul.f32 1.0, %v2138
    %v2140 = vtanh.pop %v2120
    %v2141 = vmul.f32 %v2139, %v2087
    %2143 = vrot.lane.b32.xlu0 %v2140, 32
    %v2144 = vpop.permute.xlu0 %2143
    %v2146 = vmul.f32 %v2139, %v2144
    %2148 = vrot.lane.b32.xlu0 %v2146, 32
    %v2149 = vpop.permute.xlu0 %2148
    %v2151 = vadd.f32 %v2141, %v2149
    %v2152 = vtanh.pop %v2151
    %2154 = vrot.lane.b32.xlu0 %v2152, 32
    %v2155 = vpop.permute.xlu0 %2154
    %v2157 = vmul.f32 %v2139, %v2155
    %v2158 = vld [vmem:[#allocation2 + $0x140] sm:$0xff]
    %2160 = vrot.lane.b32.xlu0 %v2157, 64
    %v2161 = vpop.permute.xlu0 %2160
    %v2162 = vsel %vm880, %v2161, 0
    %2164 = vmatpush.msra.mxu0 0.0
    %2165 = vmatpush.msra.mxu0 0.0
    %2166 = vmatpush.msra.mxu0 0.0
    %2167 = vmatpush.msra.mxu0 0.0
    %2168 = vmatpush.msra.mxu0 0.0
    %2169 = vmatpush.msra.mxu0 0.0
    %2170 = vmatpush.msra.mxu0 0.0
    %2171 = vmatpush.msra.mxu0 0.0
    %2172 = vmatpush.msra.mxu0 0.0
    %2173 = vmatpush.msra.mxu0 0.0
    %2174 = vmatpush.msra.mxu0 0.0
    %2175 = vmatpush.msra.mxu0 0.0
    %2176 = vmatpush.msra.mxu0 %v874
    %2177 = vmatpush.msra.mxu0 %v873
    %2178 = vmatpush.msra.mxu0 %v872
    %2179 = vmatpush.msra.mxu0 %v871
    %2180 = vmatmul.f32.gmra.mxu0 %v2162
    %v2181 = vpop.f32.mrf.mxu0
    %v2182 = vadd.f32 0.0, %v2181
    %2183 = vdwg.mxu0
    %v2184 = vadd.f32 %v2158, %v2182
    %v2185 = vxor.u32 %v2184, 2147483648
    %v2186 = vmul.f32 %v2185, 1.442695
    %v2187 = vpow.pop %v2186
    %v2188 = vadd.f32 %v2187, 1.0
    %v2189 = vrcp.pop %v2188
    %v2190 = vmul.f32 %v2188, %v2189
    %v2191 = vsub.f32 1.0, %v2190
    %v2192 = vmul.f32 %v2189, %v2191
    %v2193 = vadd.f32 %v2189, %v2192
    %vm2194 = vweird.f32 %v2188
    %vm2195 = vweird.f32 %v2189
    %vm2196 = vmor %vm2194, %vm2195
    %v2197 = vsel %vm2196, %v2189, %v2193
    %v2198 = vand.u32 2147483647, %v2188
    %vm2199 = vcmp.eq.f32.partialorder %v2198, 8.507059e+37
    %v2200 = vand.u32 %v2188, 2147483648
    %v2201 = vor.u32 1.1754944e-38, %v2200
    %v2202 = vsel %vm2199, %v2201, %v2197
    %v2203 = vmul.f32 1.0, %v2202
    %v2204 = vtanh.pop %v2184
    %v2205 = vmul.f32 %v2203, %v2151
    %2207 = vrot.lane.b32.xlu0 %v2204, 32
    %v2208 = vpop.permute.xlu0 %2207
    %v2210 = vmul.f32 %v2203, %v2208
    %2212 = vrot.lane.b32.xlu0 %v2210, 32
    %v2213 = vpop.permute.xlu0 %2212
    %v2215 = vadd.f32 %v2205, %v2213
    %v2216 = vtanh.pop %v2215
    %2218 = vrot.lane.b32.xlu0 %v2216, 32
    %v2219 = vpop.permute.xlu0 %2218
    %v2221 = vmul.f32 %v2203, %v2219
    %v2222 = vld [vmem:[#allocation2 + $0x150] sm:$0xff]
    %2224 = vrot.lane.b32.xlu0 %v2221, 64
    %v2225 = vpop.permute.xlu0 %2224
    %v2226 = vsel %vm880, %v2225, 0
    %2228 = vmatpush.msra.mxu0 0.0
    %2229 = vmatpush.msra.mxu0 0.0
    %2230 = vmatpush.msra.mxu0 0.0
    %2231 = vmatpush.msra.mxu0 0.0
    %2232 = vmatpush.msra.mxu0 0.0
    %2233 = vmatpush.msra.mxu0 0.0
    %2234 = vmatpush.msra.mxu0 0.0
    %2235 = vmatpush.msra.mxu0 0.0
    %2236 = vmatpush.msra.mxu0 0.0
    %2237 = vmatpush.msra.mxu0 0.0
    %2238 = vmatpush.msra.mxu0 0.0
    %2239 = vmatpush.msra.mxu0 0.0
    %2240 = vmatpush.msra.mxu0 %v874
    %2241 = vmatpush.msra.mxu0 %v873
    %2242 = vmatpush.msra.mxu0 %v872
    %2243 = vmatpush.msra.mxu0 %v871
    %2244 = vmatmul.f32.gmra.mxu0 %v2226
    %v2245 = vpop.f32.mrf.mxu0
    %v2246 = vadd.f32 0.0, %v2245
    %2247 = vdwg.mxu0
    %v2248 = vadd.f32 %v2222, %v2246
    %v2249 = vxor.u32 %v2248, 2147483648
    %v2250 = vmul.f32 %v2249, 1.442695
    %v2251 = vpow.pop %v2250
    %v2252 = vadd.f32 %v2251, 1.0
    %v2253 = vrcp.pop %v2252
    %v2254 = vmul.f32 %v2252, %v2253
    %v2255 = vsub.f32 1.0, %v2254
    %v2256 = vmul.f32 %v2253, %v2255
    %v2257 = vadd.f32 %v2253, %v2256
    %vm2258 = vweird.f32 %v2252
    %vm2259 = vweird.f32 %v2253
    %vm2260 = vmor %vm2258, %vm2259
    %v2261 = vsel %vm2260, %v2253, %v2257
    %v2262 = vand.u32 2147483647, %v2252
    %vm2263 = vcmp.eq.f32.partialorder %v2262, 8.507059e+37
    %v2264 = vand.u32 %v2252, 2147483648
    %v2265 = vor.u32 1.1754944e-38, %v2264
    %v2266 = vsel %vm2263, %v2265, %v2261
    %v2267 = vmul.f32 1.0, %v2266
    %v2268 = vtanh.pop %v2248
    %v2269 = vmul.f32 %v2267, %v2215
    %2271 = vrot.lane.b32.xlu0 %v2268, 32
    %v2272 = vpop.permute.xlu0 %2271
    %v2274 = vmul.f32 %v2267, %v2272
    %2276 = vrot.lane.b32.xlu0 %v2274, 32
    %v2277 = vpop.permute.xlu0 %2276
    %v2279 = vadd.f32 %v2269, %v2277
    %v2280 = vtanh.pop %v2279
    %2282 = vrot.lane.b32.xlu0 %v2280, 32
    %v2283 = vpop.permute.xlu0 %2282
    %v2285 = vmul.f32 %v2267, %v2283
    %v2286 = vld [vmem:[#allocation2 + $0x160] sm:$0xff]
    %2288 = vrot.lane.b32.xlu0 %v2285, 64
    %v2289 = vpop.permute.xlu0 %2288
    %v2290 = vsel %vm880, %v2289, 0
    %2292 = vmatpush.msra.mxu0 0.0
    %2293 = vmatpush.msra.mxu0 0.0
    %2294 = vmatpush.msra.mxu0 0.0
    %2295 = vmatpush.msra.mxu0 0.0
    %2296 = vmatpush.msra.mxu0 0.0
    %2297 = vmatpush.msra.mxu0 0.0
    %2298 = vmatpush.msra.mxu0 0.0
    %2299 = vmatpush.msra.mxu0 0.0
    %2300 = vmatpush.msra.mxu0 0.0
    %2301 = vmatpush.msra.mxu0 0.0
    %2302 = vmatpush.msra.mxu0 0.0
    %2303 = vmatpush.msra.mxu0 0.0
    %2304 = vmatpush.msra.mxu0 %v874
    %2305 = vmatpush.msra.mxu0 %v873
    %2306 = vmatpush.msra.mxu0 %v872
    %2307 = vmatpush.msra.mxu0 %v871
    %2308 = vmatmul.f32.gmra.mxu0 %v2290
    %v2309 = vpop.f32.mrf.mxu0
    %v2310 = vadd.f32 0.0, %v2309
    %2311 = vdwg.mxu0
    %v2312 = vadd.f32 %v2286, %v2310
    %v2313 = vxor.u32 %v2312, 2147483648
    %v2314 = vmul.f32 %v2313, 1.442695
    %v2315 = vpow.pop %v2314
    %v2316 = vadd.f32 %v2315, 1.0
    %v2317 = vrcp.pop %v2316
    %v2318 = vmul.f32 %v2316, %v2317
    %v2319 = vsub.f32 1.0, %v2318
    %v2320 = vmul.f32 %v2317, %v2319
    %v2321 = vadd.f32 %v2317, %v2320
    %vm2322 = vweird.f32 %v2316
    %vm2323 = vweird.f32 %v2317
    %vm2324 = vmor %vm2322, %vm2323
    %v2325 = vsel %vm2324, %v2317, %v2321
    %v2326 = vand.u32 2147483647, %v2316
    %vm2327 = vcmp.eq.f32.partialorder %v2326, 8.507059e+37
    %v2328 = vand.u32 %v2316, 2147483648
    %v2329 = vor.u32 1.1754944e-38, %v2328
    %v2330 = vsel %vm2327, %v2329, %v2325
    %v2331 = vmul.f32 1.0, %v2330
    %v2332 = vtanh.pop %v2312
    %v2333 = vmul.f32 %v2331, %v2279
    %2335 = vrot.lane.b32.xlu0 %v2332, 32
    %v2336 = vpop.permute.xlu0 %2335
    %v2338 = vmul.f32 %v2331, %v2336
    %2340 = vrot.lane.b32.xlu0 %v2338, 32
    %v2341 = vpop.permute.xlu0 %2340
    %v2343 = vadd.f32 %v2333, %v2341
    %v2344 = vtanh.pop %v2343
    %2346 = vrot.lane.b32.xlu0 %v2344, 32
    %v2347 = vpop.permute.xlu0 %2346
    %v2349 = vmul.f32 %v2331, %v2347
    %v2350 = vld [vmem:[#allocation2 + $0x170] sm:$0xff]
    %2352 = vrot.lane.b32.xlu0 %v2349, 64
    %v2353 = vpop.permute.xlu0 %2352
    %v2354 = vsel %vm880, %v2353, 0
    %2356 = vmatpush.msra.mxu0 0.0
    %2357 = vmatpush.msra.mxu0 0.0
    %2358 = vmatpush.msra.mxu0 0.0
    %2359 = vmatpush.msra.mxu0 0.0
    %2360 = vmatpush.msra.mxu0 0.0
    %2361 = vmatpush.msra.mxu0 0.0
    %2362 = vmatpush.msra.mxu0 0.0
    %2363 = vmatpush.msra.mxu0 0.0
    %2364 = vmatpush.msra.mxu0 0.0
    %2365 = vmatpush.msra.mxu0 0.0
    %2366 = vmatpush.msra.mxu0 0.0
    %2367 = vmatpush.msra.mxu0 0.0
    %2368 = vmatpush.msra.mxu0 %v874
    %2369 = vmatpush.msra.mxu0 %v873
    %2370 = vmatpush.msra.mxu0 %v872
    %2371 = vmatpush.msra.mxu0 %v871
    %2372 = vmatmul.f32.gmra.mxu0 %v2354
    %v2373 = vpop.f32.mrf.mxu0
    %v2374 = vadd.f32 0.0, %v2373
    %2375 = vdwg.mxu0
    %v2376 = vadd.f32 %v2350, %v2374
    %v2377 = vxor.u32 %v2376, 2147483648
    %v2378 = vmul.f32 %v2377, 1.442695
    %v2379 = vpow.pop %v2378
    %v2380 = vadd.f32 %v2379, 1.0
    %v2381 = vrcp.pop %v2380
    %v2382 = vmul.f32 %v2380, %v2381
    %v2383 = vsub.f32 1.0, %v2382
    %v2384 = vmul.f32 %v2381, %v2383
    %v2385 = vadd.f32 %v2381, %v2384
    %vm2386 = vweird.f32 %v2380
    %vm2387 = vweird.f32 %v2381
    %vm2388 = vmor %vm2386, %vm2387
    %v2389 = vsel %vm2388, %v2381, %v2385
    %v2390 = vand.u32 2147483647, %v2380
    %vm2391 = vcmp.eq.f32.partialorder %v2390, 8.507059e+37
    %v2392 = vand.u32 %v2380, 2147483648
    %v2393 = vor.u32 1.1754944e-38, %v2392
    %v2394 = vsel %vm2391, %v2393, %v2389
    %v2395 = vmul.f32 1.0, %v2394
    %v2396 = vtanh.pop %v2376
    %v2397 = vmul.f32 %v2395, %v2343
    %2399 = vrot.lane.b32.xlu0 %v2396, 32
    %v2400 = vpop.permute.xlu0 %2399
    %v2402 = vmul.f32 %v2395, %v2400
    %2404 = vrot.lane.b32.xlu0 %v2402, 32
    %v2405 = vpop.permute.xlu0 %2404
    %v2407 = vadd.f32 %v2397, %v2405
    %v2408 = vtanh.pop %v2407
    %2410 = vrot.lane.b32.xlu0 %v2408, 32
    %v2411 = vpop.permute.xlu0 %2410
    %v2413 = vmul.f32 %v2395, %v2411
    %v2414 = vld [vmem:[#allocation2 + $0x180] sm:$0xff]
    %2416 = vrot.lane.b32.xlu0 %v2413, 64
    %v2417 = vpop.permute.xlu0 %2416
    %v2418 = vsel %vm880, %v2417, 0
    %2420 = vmatpush.msra.mxu0 0.0
    %2421 = vmatpush.msra.mxu0 0.0
    %2422 = vmatpush.msra.mxu0 0.0
    %2423 = vmatpush.msra.mxu0 0.0
    %2424 = vmatpush.msra.mxu0 0.0
    %2425 = vmatpush.msra.mxu0 0.0
    %2426 = vmatpush.msra.mxu0 0.0
    %2427 = vmatpush.msra.mxu0 0.0
    %2428 = vmatpush.msra.mxu0 0.0
    %2429 = vmatpush.msra.mxu0 0.0
    %2430 = vmatpush.msra.mxu0 0.0
    %2431 = vmatpush.msra.mxu0 0.0
    %2432 = vmatpush.msra.mxu0 %v874
    %2433 = vmatpush.msra.mxu0 %v873
    %2434 = vmatpush.msra.mxu0 %v872
    %2435 = vmatpush.msra.mxu0 %v871
    %2436 = vmatmul.f32.gmra.mxu0 %v2418
    %v2437 = vpop.f32.mrf.mxu0
    %v2438 = vadd.f32 0.0, %v2437
    %2439 = vdwg.mxu0
    %v2440 = vadd.f32 %v2414, %v2438
    %v2441 = vxor.u32 %v2440, 2147483648
    %v2442 = vmul.f32 %v2441, 1.442695
    %v2443 = vpow.pop %v2442
    %v2444 = vadd.f32 %v2443, 1.0
    %v2445 = vrcp.pop %v2444
    %v2446 = vmul.f32 %v2444, %v2445
    %v2447 = vsub.f32 1.0, %v2446
    %v2448 = vmul.f32 %v2445, %v2447
    %v2449 = vadd.f32 %v2445, %v2448
    %vm2450 = vweird.f32 %v2444
    %vm2451 = vweird.f32 %v2445
    %vm2452 = vmor %vm2450, %vm2451
    %v2453 = vsel %vm2452, %v2445, %v2449
    %v2454 = vand.u32 2147483647, %v2444
    %vm2455 = vcmp.eq.f32.partialorder %v2454, 8.507059e+37
    %v2456 = vand.u32 %v2444, 2147483648
    %v2457 = vor.u32 1.1754944e-38, %v2456
    %v2458 = vsel %vm2455, %v2457, %v2453
    %v2459 = vmul.f32 1.0, %v2458
    %v2460 = vtanh.pop %v2440
    %v2461 = vmul.f32 %v2459, %v2407
    %2463 = vrot.lane.b32.xlu0 %v2460, 32
    %v2464 = vpop.permute.xlu0 %2463
    %v2466 = vmul.f32 %v2459, %v2464
    %2468 = vrot.lane.b32.xlu0 %v2466, 32
    %v2469 = vpop.permute.xlu0 %2468
    %v2471 = vadd.f32 %v2461, %v2469
    %v2472 = vtanh.pop %v2471
    %2474 = vrot.lane.b32.xlu0 %v2472, 32
    %v2475 = vpop.permute.xlu0 %2474
    %v2477 = vmul.f32 %v2459, %v2475
    %v2478 = vld [vmem:[#allocation2 + $0x190] sm:$0xff]
    %2480 = vrot.lane.b32.xlu0 %v2477, 64
    %v2481 = vpop.permute.xlu0 %2480
    %v2482 = vsel %vm880, %v2481, 0
    %2484 = vmatpush.msra.mxu0 0.0
    %2485 = vmatpush.msra.mxu0 0.0
    %2486 = vmatpush.msra.mxu0 0.0
    %2487 = vmatpush.msra.mxu0 0.0
    %2488 = vmatpush.msra.mxu0 0.0
    %2489 = vmatpush.msra.mxu0 0.0
    %2490 = vmatpush.msra.mxu0 0.0
    %2491 = vmatpush.msra.mxu0 0.0
    %2492 = vmatpush.msra.mxu0 0.0
    %2493 = vmatpush.msra.mxu0 0.0
    %2494 = vmatpush.msra.mxu0 0.0
    %2495 = vmatpush.msra.mxu0 0.0
    %2496 = vmatpush.msra.mxu0 %v874
    %2497 = vmatpush.msra.mxu0 %v873
    %2498 = vmatpush.msra.mxu0 %v872
    %2499 = vmatpush.msra.mxu0 %v871
    %2500 = vmatmul.f32.gmra.mxu0 %v2482
    %v2501 = vpop.f32.mrf.mxu0
    %v2502 = vadd.f32 0.0, %v2501
    %2503 = vdwg.mxu0
    %v2504 = vadd.f32 %v2478, %v2502
    %v2505 = vxor.u32 %v2504, 2147483648
    %v2506 = vmul.f32 %v2505, 1.442695
    %v2507 = vpow.pop %v2506
    %v2508 = vadd.f32 %v2507, 1.0
    %v2509 = vrcp.pop %v2508
    %v2510 = vmul.f32 %v2508, %v2509
    %v2511 = vsub.f32 1.0, %v2510
    %v2512 = vmul.f32 %v2509, %v2511
    %v2513 = vadd.f32 %v2509, %v2512
    %vm2514 = vweird.f32 %v2508
    %vm2515 = vweird.f32 %v2509
    %vm2516 = vmor %vm2514, %vm2515
    %v2517 = vsel %vm2516, %v2509, %v2513
    %v2518 = vand.u32 2147483647, %v2508
    %vm2519 = vcmp.eq.f32.partialorder %v2518, 8.507059e+37
    %v2520 = vand.u32 %v2508, 2147483648
    %v2521 = vor.u32 1.1754944e-38, %v2520
    %v2522 = vsel %vm2519, %v2521, %v2517
    %v2523 = vmul.f32 1.0, %v2522
    %v2524 = vtanh.pop %v2504
    %v2525 = vmul.f32 %v2523, %v2471
    %2527 = vrot.lane.b32.xlu0 %v2524, 32
    %v2528 = vpop.permute.xlu0 %2527
    %v2530 = vmul.f32 %v2523, %v2528
    %2532 = vrot.lane.b32.xlu0 %v2530, 32
    %v2533 = vpop.permute.xlu0 %2532
    %v2535 = vadd.f32 %v2525, %v2533
    %v2536 = vtanh.pop %v2535
    %2538 = vrot.lane.b32.xlu0 %v2536, 32
    %v2539 = vpop.permute.xlu0 %2538
    %v2541 = vmul.f32 %v2523, %v2539
    %v2542 = vld [vmem:[#allocation2 + $0x1a0] sm:$0xff]
    %2544 = vrot.lane.b32.xlu0 %v2541, 64
    %v2545 = vpop.permute.xlu0 %2544
    %v2546 = vsel %vm880, %v2545, 0
    %2548 = vmatpush.msra.mxu0 0.0
    %2549 = vmatpush.msra.mxu0 0.0
    %2550 = vmatpush.msra.mxu0 0.0
    %2551 = vmatpush.msra.mxu0 0.0
    %2552 = vmatpush.msra.mxu0 0.0
    %2553 = vmatpush.msra.mxu0 0.0
    %2554 = vmatpush.msra.mxu0 0.0
    %2555 = vmatpush.msra.mxu0 0.0
    %2556 = vmatpush.msra.mxu0 0.0
    %2557 = vmatpush.msra.mxu0 0.0
    %2558 = vmatpush.msra.mxu0 0.0
    %2559 = vmatpush.msra.mxu0 0.0
    %2560 = vmatpush.msra.mxu0 %v874
    %2561 = vmatpush.msra.mxu0 %v873
    %2562 = vmatpush.msra.mxu0 %v872
    %2563 = vmatpush.msra.mxu0 %v871
    %2564 = vmatmul.f32.gmra.mxu0 %v2546
    %v2565 = vpop.f32.mrf.mxu0
    %v2566 = vadd.f32 0.0, %v2565
    %2567 = vdwg.mxu0
    %v2568 = vadd.f32 %v2542, %v2566
    %v2569 = vxor.u32 %v2568, 2147483648
    %v2570 = vmul.f32 %v2569, 1.442695
    %v2571 = vpow.pop %v2570
    %v2572 = vadd.f32 %v2571, 1.0
    %v2573 = vrcp.pop %v2572
    %v2574 = vmul.f32 %v2572, %v2573
    %v2575 = vsub.f32 1.0, %v2574
    %v2576 = vmul.f32 %v2573, %v2575
    %v2577 = vadd.f32 %v2573, %v2576
    %vm2578 = vweird.f32 %v2572
    %vm2579 = vweird.f32 %v2573
    %vm2580 = vmor %vm2578, %vm2579
    %v2581 = vsel %vm2580, %v2573, %v2577
    %v2582 = vand.u32 2147483647, %v2572
    %vm2583 = vcmp.eq.f32.partialorder %v2582, 8.507059e+37
    %v2584 = vand.u32 %v2572, 2147483648
    %v2585 = vor.u32 1.1754944e-38, %v2584
    %v2586 = vsel %vm2583, %v2585, %v2581
    %v2587 = vmul.f32 1.0, %v2586
    %v2588 = vtanh.pop %v2568
    %v2589 = vmul.f32 %v2587, %v2535
    %2591 = vrot.lane.b32.xlu0 %v2588, 32
    %v2592 = vpop.permute.xlu0 %2591
    %v2594 = vmul.f32 %v2587, %v2592
    %2596 = vrot.lane.b32.xlu0 %v2594, 32
    %v2597 = vpop.permute.xlu0 %2596
    %v2599 = vadd.f32 %v2589, %v2597
    %v2600 = vtanh.pop %v2599
    %2602 = vrot.lane.b32.xlu0 %v2600, 32
    %v2603 = vpop.permute.xlu0 %2602
    %v2605 = vmul.f32 %v2587, %v2603
    %v2606 = vld [vmem:[#allocation2 + $0x1b0] sm:$0xff]
    %2608 = vrot.lane.b32.xlu0 %v2605, 64
    %v2609 = vpop.permute.xlu0 %2608
    %v2610 = vsel %vm880, %v2609, 0
    %2612 = vmatpush.msra.mxu0 0.0
    %2613 = vmatpush.msra.mxu0 0.0
    %2614 = vmatpush.msra.mxu0 0.0
    %2615 = vmatpush.msra.mxu0 0.0
    %2616 = vmatpush.msra.mxu0 0.0
    %2617 = vmatpush.msra.mxu0 0.0
    %2618 = vmatpush.msra.mxu0 0.0
    %2619 = vmatpush.msra.mxu0 0.0
    %2620 = vmatpush.msra.mxu0 0.0
    %2621 = vmatpush.msra.mxu0 0.0
    %2622 = vmatpush.msra.mxu0 0.0
    %2623 = vmatpush.msra.mxu0 0.0
    %2624 = vmatpush.msra.mxu0 %v874
    %2625 = vmatpush.msra.mxu0 %v873
    %2626 = vmatpush.msra.mxu0 %v872
    %2627 = vmatpush.msra.mxu0 %v871
    %2628 = vmatmul.f32.gmra.mxu0 %v2610
    %v2629 = vpop.f32.mrf.mxu0
    %v2630 = vadd.f32 0.0, %v2629
    %2631 = vdwg.mxu0
    %v2632 = vadd.f32 %v2606, %v2630
    %v2633 = vxor.u32 %v2632, 2147483648
    %v2634 = vmul.f32 %v2633, 1.442695
    %v2635 = vpow.pop %v2634
    %v2636 = vadd.f32 %v2635, 1.0
    %v2637 = vrcp.pop %v2636
    %v2638 = vmul.f32 %v2636, %v2637
    %v2639 = vsub.f32 1.0, %v2638
    %v2640 = vmul.f32 %v2637, %v2639
    %v2641 = vadd.f32 %v2637, %v2640
    %vm2642 = vweird.f32 %v2636
    %vm2643 = vweird.f32 %v2637
    %vm2644 = vmor %vm2642, %vm2643
    %v2645 = vsel %vm2644, %v2637, %v2641
    %v2646 = vand.u32 2147483647, %v2636
    %vm2647 = vcmp.eq.f32.partialorder %v2646, 8.507059e+37
    %v2648 = vand.u32 %v2636, 2147483648
    %v2649 = vor.u32 1.1754944e-38, %v2648
    %v2650 = vsel %vm2647, %v2649, %v2645
    %v2651 = vmul.f32 1.0, %v2650
    %v2652 = vtanh.pop %v2632
    %v2653 = vmul.f32 %v2651, %v2599
    %2655 = vrot.lane.b32.xlu0 %v2652, 32
    %v2656 = vpop.permute.xlu0 %2655
    %v2658 = vmul.f32 %v2651, %v2656
    %2660 = vrot.lane.b32.xlu0 %v2658, 32
    %v2661 = vpop.permute.xlu0 %2660
    %v2663 = vadd.f32 %v2653, %v2661
    %v2664 = vtanh.pop %v2663
    %2666 = vrot.lane.b32.xlu0 %v2664, 32
    %v2667 = vpop.permute.xlu0 %2666
    %v2669 = vmul.f32 %v2651, %v2667
    %v2670 = vld [vmem:[#allocation2 + $0x1c0] sm:$0xff]
    %2672 = vrot.lane.b32.xlu0 %v2669, 64
    %v2673 = vpop.permute.xlu0 %2672
    %v2674 = vsel %vm880, %v2673, 0
    %2676 = vmatpush.msra.mxu0 0.0
    %2677 = vmatpush.msra.mxu0 0.0
    %2678 = vmatpush.msra.mxu0 0.0
    %2679 = vmatpush.msra.mxu0 0.0
    %2680 = vmatpush.msra.mxu0 0.0
    %2681 = vmatpush.msra.mxu0 0.0
    %2682 = vmatpush.msra.mxu0 0.0
    %2683 = vmatpush.msra.mxu0 0.0
    %2684 = vmatpush.msra.mxu0 0.0
    %2685 = vmatpush.msra.mxu0 0.0
    %2686 = vmatpush.msra.mxu0 0.0
    %2687 = vmatpush.msra.mxu0 0.0
    %2688 = vmatpush.msra.mxu0 %v874
    %2689 = vmatpush.msra.mxu0 %v873
    %2690 = vmatpush.msra.mxu0 %v872
    %2691 = vmatpush.msra.mxu0 %v871
    %2692 = vmatmul.f32.gmra.mxu0 %v2674
    %v2693 = vpop.f32.mrf.mxu0
    %v2694 = vadd.f32 0.0, %v2693
    %2695 = vdwg.mxu0
    %v2696 = vadd.f32 %v2670, %v2694
    %v2697 = vxor.u32 %v2696, 2147483648
    %v2698 = vmul.f32 %v2697, 1.442695
    %v2699 = vpow.pop %v2698
    %v2700 = vadd.f32 %v2699, 1.0
    %v2701 = vrcp.pop %v2700
    %v2702 = vmul.f32 %v2700, %v2701
    %v2703 = vsub.f32 1.0, %v2702
    %v2704 = vmul.f32 %v2701, %v2703
    %v2705 = vadd.f32 %v2701, %v2704
    %vm2706 = vweird.f32 %v2700
    %vm2707 = vweird.f32 %v2701
    %vm2708 = vmor %vm2706, %vm2707
    %v2709 = vsel %vm2708, %v2701, %v2705
    %v2710 = vand.u32 2147483647, %v2700
    %vm2711 = vcmp.eq.f32.partialorder %v2710, 8.507059e+37
    %v2712 = vand.u32 %v2700, 2147483648
    %v2713 = vor.u32 1.1754944e-38, %v2712
    %v2714 = vsel %vm2711, %v2713, %v2709
    %v2715 = vmul.f32 1.0, %v2714
    %v2716 = vtanh.pop %v2696
    %v2717 = vmul.f32 %v2715, %v2663
    %2719 = vrot.lane.b32.xlu0 %v2716, 32
    %v2720 = vpop.permute.xlu0 %2719
    %v2722 = vmul.f32 %v2715, %v2720
    %2724 = vrot.lane.b32.xlu0 %v2722, 32
    %v2725 = vpop.permute.xlu0 %2724
    %v2727 = vadd.f32 %v2717, %v2725
    %v2728 = vtanh.pop %v2727
    %2730 = vrot.lane.b32.xlu0 %v2728, 32
    %v2731 = vpop.permute.xlu0 %2730
    %v2733 = vmul.f32 %v2715, %v2731
    %v2734 = vld [vmem:[#allocation2 + $0x1d0] sm:$0xff]
    %2736 = vrot.lane.b32.xlu0 %v2733, 64
    %v2737 = vpop.permute.xlu0 %2736
    %v2738 = vsel %vm880, %v2737, 0
    %2740 = vmatpush.msra.mxu0 0.0
    %2741 = vmatpush.msra.mxu0 0.0
    %2742 = vmatpush.msra.mxu0 0.0
    %2743 = vmatpush.msra.mxu0 0.0
    %2744 = vmatpush.msra.mxu0 0.0
    %2745 = vmatpush.msra.mxu0 0.0
    %2746 = vmatpush.msra.mxu0 0.0
    %2747 = vmatpush.msra.mxu0 0.0
    %2748 = vmatpush.msra.mxu0 0.0
    %2749 = vmatpush.msra.mxu0 0.0
    %2750 = vmatpush.msra.mxu0 0.0
    %2751 = vmatpush.msra.mxu0 0.0
    %2752 = vmatpush.msra.mxu0 %v874
    %2753 = vmatpush.msra.mxu0 %v873
    %2754 = vmatpush.msra.mxu0 %v872
    %2755 = vmatpush.msra.mxu0 %v871
    %2756 = vmatmul.f32.gmra.mxu0 %v2738
    %v2757 = vpop.f32.mrf.mxu0
    %v2758 = vadd.f32 0.0, %v2757
    %2759 = vdwg.mxu0
    %v2760 = vadd.f32 %v2734, %v2758
    %v2761 = vxor.u32 %v2760, 2147483648
    %v2762 = vmul.f32 %v2761, 1.442695
    %v2763 = vpow.pop %v2762
    %v2764 = vadd.f32 %v2763, 1.0
    %v2765 = vrcp.pop %v2764
    %v2766 = vmul.f32 %v2764, %v2765
    %v2767 = vsub.f32 1.0, %v2766
    %v2768 = vmul.f32 %v2765, %v2767
    %v2769 = vadd.f32 %v2765, %v2768
    %vm2770 = vweird.f32 %v2764
    %vm2771 = vweird.f32 %v2765
    %vm2772 = vmor %vm2770, %vm2771
    %v2773 = vsel %vm2772, %v2765, %v2769
    %v2774 = vand.u32 2147483647, %v2764
    %vm2775 = vcmp.eq.f32.partialorder %v2774, 8.507059e+37
    %v2776 = vand.u32 %v2764, 2147483648
    %v2777 = vor.u32 1.1754944e-38, %v2776
    %v2778 = vsel %vm2775, %v2777, %v2773
    %v2779 = vmul.f32 1.0, %v2778
    %v2780 = vtanh.pop %v2760
    %v2781 = vmul.f32 %v2779, %v2727
    %2783 = vrot.lane.b32.xlu0 %v2780, 32
    %v2784 = vpop.permute.xlu0 %2783
    %v2786 = vmul.f32 %v2779, %v2784
    %2788 = vrot.lane.b32.xlu0 %v2786, 32
    %v2789 = vpop.permute.xlu0 %2788
    %v2791 = vadd.f32 %v2781, %v2789
    %v2792 = vtanh.pop %v2791
    %2794 = vrot.lane.b32.xlu0 %v2792, 32
    %v2795 = vpop.permute.xlu0 %2794
    %v2797 = vmul.f32 %v2779, %v2795
    %v2798 = vld [vmem:[#allocation2 + $0x1e0] sm:$0xff]
    %2800 = vrot.lane.b32.xlu0 %v2797, 64
    %v2801 = vpop.permute.xlu0 %2800
    %v2802 = vsel %vm880, %v2801, 0
    %2804 = vmatpush.msra.mxu0 0.0
    %2805 = vmatpush.msra.mxu0 0.0
    %2806 = vmatpush.msra.mxu0 0.0
    %2807 = vmatpush.msra.mxu0 0.0
    %2808 = vmatpush.msra.mxu0 0.0
    %2809 = vmatpush.msra.mxu0 0.0
    %2810 = vmatpush.msra.mxu0 0.0
    %2811 = vmatpush.msra.mxu0 0.0
    %2812 = vmatpush.msra.mxu0 0.0
    %2813 = vmatpush.msra.mxu0 0.0
    %2814 = vmatpush.msra.mxu0 0.0
    %2815 = vmatpush.msra.mxu0 0.0
    %2816 = vmatpush.msra.mxu0 %v874
    %2817 = vmatpush.msra.mxu0 %v873
    %2818 = vmatpush.msra.mxu0 %v872
    %2819 = vmatpush.msra.mxu0 %v871
    %2820 = vmatmul.f32.gmra.mxu0 %v2802
    %v2821 = vpop.f32.mrf.mxu0
    %v2822 = vadd.f32 0.0, %v2821
    %2823 = vdwg.mxu0
    %v2824 = vadd.f32 %v2798, %v2822
    %v2825 = vxor.u32 %v2824, 2147483648
    %v2826 = vmul.f32 %v2825, 1.442695
    %v2827 = vpow.pop %v2826
    %v2828 = vadd.f32 %v2827, 1.0
    %v2829 = vrcp.pop %v2828
    %v2830 = vmul.f32 %v2828, %v2829
    %v2831 = vsub.f32 1.0, %v2830
    %v2832 = vmul.f32 %v2829, %v2831
    %v2833 = vadd.f32 %v2829, %v2832
    %vm2834 = vweird.f32 %v2828
    %vm2835 = vweird.f32 %v2829
    %vm2836 = vmor %vm2834, %vm2835
    %v2837 = vsel %vm2836, %v2829, %v2833
    %v2838 = vand.u32 2147483647, %v2828
    %vm2839 = vcmp.eq.f32.partialorder %v2838, 8.507059e+37
    %v2840 = vand.u32 %v2828, 2147483648
    %v2841 = vor.u32 1.1754944e-38, %v2840
    %v2842 = vsel %vm2839, %v2841, %v2837
    %v2843 = vmul.f32 1.0, %v2842
    %v2844 = vtanh.pop %v2824
    %v2845 = vmul.f32 %v2843, %v2791
    %2847 = vrot.lane.b32.xlu0 %v2844, 32
    %v2848 = vpop.permute.xlu0 %2847
    %v2850 = vmul.f32 %v2843, %v2848
    %2852 = vrot.lane.b32.xlu0 %v2850, 32
    %v2853 = vpop.permute.xlu0 %2852
    %v2855 = vadd.f32 %v2845, %v2853
    %v2856 = vtanh.pop %v2855
    %2858 = vrot.lane.b32.xlu0 %v2856, 32
    %v2859 = vpop.permute.xlu0 %2858
    %v2861 = vmul.f32 %v2843, %v2859
    %v2862 = vld [vmem:[#allocation2 + $0x1f0] sm:$0xff]
    %2864 = vrot.lane.b32.xlu0 %v2861, 64
    %v2865 = vpop.permute.xlu0 %2864
    %v2866 = vsel %vm880, %v2865, 0
    %2868 = vmatpush.msra.mxu0 0.0
    %2869 = vmatpush.msra.mxu0 0.0
    %2870 = vmatpush.msra.mxu0 0.0
    %2871 = vmatpush.msra.mxu0 0.0
    %2872 = vmatpush.msra.mxu0 0.0
    %2873 = vmatpush.msra.mxu0 0.0
    %2874 = vmatpush.msra.mxu0 0.0
    %2875 = vmatpush.msra.mxu0 0.0
    %2876 = vmatpush.msra.mxu0 0.0
    %2877 = vmatpush.msra.mxu0 0.0
    %2878 = vmatpush.msra.mxu0 0.0
    %2879 = vmatpush.msra.mxu0 0.0
    %2880 = vmatpush.msra.mxu0 %v874
    %2881 = vmatpush.msra.mxu0 %v873
    %2882 = vmatpush.msra.mxu0 %v872
    %2883 = vmatpush.msra.mxu0 %v871
    %2884 = vmatmul.f32.gmra.mxu0 %v2866
    %v2885 = vpop.f32.mrf.mxu0
    %v2886 = vadd.f32 0.0, %v2885
    %2887 = vdwg.mxu0
    %v2888 = vadd.f32 %v2862, %v2886
    %v2889 = vxor.u32 %v2888, 2147483648
    %v2890 = vmul.f32 %v2889, 1.442695
    %v2891 = vpow.pop %v2890
    %v2892 = vadd.f32 %v2891, 1.0
    %v2893 = vrcp.pop %v2892
    %v2894 = vmul.f32 %v2892, %v2893
    %v2895 = vsub.f32 1.0, %v2894
    %v2896 = vmul.f32 %v2893, %v2895
    %v2897 = vadd.f32 %v2893, %v2896
    %vm2898 = vweird.f32 %v2892
    %vm2899 = vweird.f32 %v2893
    %vm2900 = vmor %vm2898, %vm2899
    %v2901 = vsel %vm2900, %v2893, %v2897
    %v2902 = vand.u32 2147483647, %v2892
    %vm2903 = vcmp.eq.f32.partialorder %v2902, 8.507059e+37
    %v2904 = vand.u32 %v2892, 2147483648
    %v2905 = vor.u32 1.1754944e-38, %v2904
    %v2906 = vsel %vm2903, %v2905, %v2901
    %v2907 = vmul.f32 1.0, %v2906
    %v2908 = vtanh.pop %v2888
    %v2909 = vmul.f32 %v2907, %v2855
    %2911 = vrot.lane.b32.xlu0 %v2908, 32
    %v2912 = vpop.permute.xlu0 %2911
    %v2914 = vmul.f32 %v2907, %v2912
    %2916 = vrot.lane.b32.xlu0 %v2914, 32
    %v2917 = vpop.permute.xlu0 %2916
    %v2919 = vadd.f32 %v2909, %v2917
    %v2920 = vtanh.pop %v2919
    %2922 = vrot.lane.b32.xlu0 %v2920, 32
    %v2923 = vpop.permute.xlu0 %2922
    %v2925 = vmul.f32 %v2907, %v2923
    %v2926 = vld [vmem:[#allocation2 + $0x200] sm:$0xff]
    %2928 = vrot.lane.b32.xlu0 %v2925, 64
    %v2929 = vpop.permute.xlu0 %2928
    %v2930 = vsel %vm880, %v2929, 0
    %2932 = vmatpush.msra.mxu0 0.0
    %2933 = vmatpush.msra.mxu0 0.0
    %2934 = vmatpush.msra.mxu0 0.0
    %2935 = vmatpush.msra.mxu0 0.0
    %2936 = vmatpush.msra.mxu0 0.0
    %2937 = vmatpush.msra.mxu0 0.0
    %2938 = vmatpush.msra.mxu0 0.0
    %2939 = vmatpush.msra.mxu0 0.0
    %2940 = vmatpush.msra.mxu0 0.0
    %2941 = vmatpush.msra.mxu0 0.0
    %2942 = vmatpush.msra.mxu0 0.0
    %2943 = vmatpush.msra.mxu0 0.0
    %2944 = vmatpush.msra.mxu0 %v874
    %2945 = vmatpush.msra.mxu0 %v873
    %2946 = vmatpush.msra.mxu0 %v872
    %2947 = vmatpush.msra.mxu0 %v871
    %2948 = vmatmul.f32.gmra.mxu0 %v2930
    %v2949 = vpop.f32.mrf.mxu0
    %v2950 = vadd.f32 0.0, %v2949
    %2951 = vdwg.mxu0
    %v2952 = vadd.f32 %v2926, %v2950
    %v2953 = vxor.u32 %v2952, 2147483648
    %v2954 = vmul.f32 %v2953, 1.442695
    %v2955 = vpow.pop %v2954
    %v2956 = vadd.f32 %v2955, 1.0
    %v2957 = vrcp.pop %v2956
    %v2958 = vmul.f32 %v2956, %v2957
    %v2959 = vsub.f32 1.0, %v2958
    %v2960 = vmul.f32 %v2957, %v2959
    %v2961 = vadd.f32 %v2957, %v2960
    %vm2962 = vweird.f32 %v2956
    %vm2963 = vweird.f32 %v2957
    %vm2964 = vmor %vm2962, %vm2963
    %v2965 = vsel %vm2964, %v2957, %v2961
    %v2966 = vand.u32 2147483647, %v2956
    %vm2967 = vcmp.eq.f32.partialorder %v2966, 8.507059e+37
    %v2968 = vand.u32 %v2956, 2147483648
    %v2969 = vor.u32 1.1754944e-38, %v2968
    %v2970 = vsel %vm2967, %v2969, %v2965
    %v2971 = vmul.f32 1.0, %v2970
    %v2972 = vtanh.pop %v2952
    %v2973 = vmul.f32 %v2971, %v2919
    %2975 = vrot.lane.b32.xlu0 %v2972, 32
    %v2976 = vpop.permute.xlu0 %2975
    %v2978 = vmul.f32 %v2971, %v2976
    %2980 = vrot.lane.b32.xlu0 %v2978, 32
    %v2981 = vpop.permute.xlu0 %2980
    %v2983 = vadd.f32 %v2973, %v2981
    %v2984 = vtanh.pop %v2983
    %2986 = vrot.lane.b32.xlu0 %v2984, 32
    %v2987 = vpop.permute.xlu0 %2986
    %v2989 = vmul.f32 %v2971, %v2987
    %v2990 = vld [vmem:[#allocation2 + $0x210] sm:$0xff]
    %2992 = vrot.lane.b32.xlu0 %v2989, 64
    %v2993 = vpop.permute.xlu0 %2992
    %v2994 = vsel %vm880, %v2993, 0
    %2996 = vmatpush.msra.mxu0 0.0
    %2997 = vmatpush.msra.mxu0 0.0
    %2998 = vmatpush.msra.mxu0 0.0
    %2999 = vmatpush.msra.mxu0 0.0
    %3000 = vmatpush.msra.mxu0 0.0
    %3001 = vmatpush.msra.mxu0 0.0
    %3002 = vmatpush.msra.mxu0 0.0
    %3003 = vmatpush.msra.mxu0 0.0
    %3004 = vmatpush.msra.mxu0 0.0
    %3005 = vmatpush.msra.mxu0 0.0
    %3006 = vmatpush.msra.mxu0 0.0
    %3007 = vmatpush.msra.mxu0 0.0
    %3008 = vmatpush.msra.mxu0 %v874
    %3009 = vmatpush.msra.mxu0 %v873
    %3010 = vmatpush.msra.mxu0 %v872
    %3011 = vmatpush.msra.mxu0 %v871
    %3012 = vmatmul.f32.gmra.mxu0 %v2994
    %v3013 = vpop.f32.mrf.mxu0
    %v3014 = vadd.f32 0.0, %v3013
    %3015 = vdwg.mxu0
    %v3016 = vadd.f32 %v2990, %v3014
    %v3017 = vxor.u32 %v3016, 2147483648
    %v3018 = vmul.f32 %v3017, 1.442695
    %v3019 = vpow.pop %v3018
    %v3020 = vadd.f32 %v3019, 1.0
    %v3021 = vrcp.pop %v3020
    %v3022 = vmul.f32 %v3020, %v3021
    %v3023 = vsub.f32 1.0, %v3022
    %v3024 = vmul.f32 %v3021, %v3023
    %v3025 = vadd.f32 %v3021, %v3024
    %vm3026 = vweird.f32 %v3020
    %vm3027 = vweird.f32 %v3021
    %vm3028 = vmor %vm3026, %vm3027
    %v3029 = vsel %vm3028, %v3021, %v3025
    %v3030 = vand.u32 2147483647, %v3020
    %vm3031 = vcmp.eq.f32.partialorder %v3030, 8.507059e+37
    %v3032 = vand.u32 %v3020, 2147483648
    %v3033 = vor.u32 1.1754944e-38, %v3032
    %v3034 = vsel %vm3031, %v3033, %v3029
    %v3035 = vmul.f32 1.0, %v3034
    %v3036 = vtanh.pop %v3016
    %v3037 = vmul.f32 %v3035, %v2983
    %3039 = vrot.lane.b32.xlu0 %v3036, 32
    %v3040 = vpop.permute.xlu0 %3039
    %v3042 = vmul.f32 %v3035, %v3040
    %3044 = vrot.lane.b32.xlu0 %v3042, 32
    %v3045 = vpop.permute.xlu0 %3044
    %v3047 = vadd.f32 %v3037, %v3045
    %v3048 = vtanh.pop %v3047
    %3050 = vrot.lane.b32.xlu0 %v3048, 32
    %v3051 = vpop.permute.xlu0 %3050
    %v3053 = vmul.f32 %v3035, %v3051
    %v3054 = vld [vmem:[#allocation2 + $0x220] sm:$0xff]
    %3056 = vrot.lane.b32.xlu0 %v3053, 64
    %v3057 = vpop.permute.xlu0 %3056
    %v3058 = vsel %vm880, %v3057, 0
    %3060 = vmatpush.msra.mxu0 0.0
    %3061 = vmatpush.msra.mxu0 0.0
    %3062 = vmatpush.msra.mxu0 0.0
    %3063 = vmatpush.msra.mxu0 0.0
    %3064 = vmatpush.msra.mxu0 0.0
    %3065 = vmatpush.msra.mxu0 0.0
    %3066 = vmatpush.msra.mxu0 0.0
    %3067 = vmatpush.msra.mxu0 0.0
    %3068 = vmatpush.msra.mxu0 0.0
    %3069 = vmatpush.msra.mxu0 0.0
    %3070 = vmatpush.msra.mxu0 0.0
    %3071 = vmatpush.msra.mxu0 0.0
    %3072 = vmatpush.msra.mxu0 %v874
    %3073 = vmatpush.msra.mxu0 %v873
    %3074 = vmatpush.msra.mxu0 %v872
    %3075 = vmatpush.msra.mxu0 %v871
    %3076 = vmatmul.f32.gmra.mxu0 %v3058
    %v3077 = vpop.f32.mrf.mxu0
    %v3078 = vadd.f32 0.0, %v3077
    %3079 = vdwg.mxu0
    %v3080 = vadd.f32 %v3054, %v3078
    %v3081 = vxor.u32 %v3080, 2147483648
    %v3082 = vmul.f32 %v3081, 1.442695
    %v3083 = vpow.pop %v3082
    %v3084 = vadd.f32 %v3083, 1.0
    %v3085 = vrcp.pop %v3084
    %v3086 = vmul.f32 %v3084, %v3085
    %v3087 = vsub.f32 1.0, %v3086
    %v3088 = vmul.f32 %v3085, %v3087
    %v3089 = vadd.f32 %v3085, %v3088
    %vm3090 = vweird.f32 %v3084
    %vm3091 = vweird.f32 %v3085
    %vm3092 = vmor %vm3090, %vm3091
    %v3093 = vsel %vm3092, %v3085, %v3089
    %v3094 = vand.u32 2147483647, %v3084
    %vm3095 = vcmp.eq.f32.partialorder %v3094, 8.507059e+37
    %v3096 = vand.u32 %v3084, 2147483648
    %v3097 = vor.u32 1.1754944e-38, %v3096
    %v3098 = vsel %vm3095, %v3097, %v3093
    %v3099 = vmul.f32 1.0, %v3098
    %v3100 = vtanh.pop %v3080
    %v3101 = vmul.f32 %v3099, %v3047
    %3103 = vrot.lane.b32.xlu0 %v3100, 32
    %v3104 = vpop.permute.xlu0 %3103
    %v3106 = vmul.f32 %v3099, %v3104
    %3108 = vrot.lane.b32.xlu0 %v3106, 32
    %v3109 = vpop.permute.xlu0 %3108
    %v3111 = vadd.f32 %v3101, %v3109
    %v3112 = vtanh.pop %v3111
    %3114 = vrot.lane.b32.xlu0 %v3112, 32
    %v3115 = vpop.permute.xlu0 %3114
    %v3117 = vmul.f32 %v3099, %v3115
    %v3118 = vld [vmem:[#allocation2 + $0x230] sm:$0xff]
    %3120 = vrot.lane.b32.xlu0 %v3117, 64
    %v3121 = vpop.permute.xlu0 %3120
    %v3122 = vsel %vm880, %v3121, 0
    %3124 = vmatpush.msra.mxu0 0.0
    %3125 = vmatpush.msra.mxu0 0.0
    %3126 = vmatpush.msra.mxu0 0.0
    %3127 = vmatpush.msra.mxu0 0.0
    %3128 = vmatpush.msra.mxu0 0.0
    %3129 = vmatpush.msra.mxu0 0.0
    %3130 = vmatpush.msra.mxu0 0.0
    %3131 = vmatpush.msra.mxu0 0.0
    %3132 = vmatpush.msra.mxu0 0.0
    %3133 = vmatpush.msra.mxu0 0.0
    %3134 = vmatpush.msra.mxu0 0.0
    %3135 = vmatpush.msra.mxu0 0.0
    %3136 = vmatpush.msra.mxu0 %v874
    %3137 = vmatpush.msra.mxu0 %v873
    %3138 = vmatpush.msra.mxu0 %v872
    %3139 = vmatpush.msra.mxu0 %v871
    %3140 = vmatmul.f32.gmra.mxu0 %v3122
    %v3141 = vpop.f32.mrf.mxu0
    %v3142 = vadd.f32 0.0, %v3141
    %3143 = vdwg.mxu0
    %v3144 = vadd.f32 %v3118, %v3142
    %v3145 = vxor.u32 %v3144, 2147483648
    %v3146 = vmul.f32 %v3145, 1.442695
    %v3147 = vpow.pop %v3146
    %v3148 = vadd.f32 %v3147, 1.0
    %v3149 = vrcp.pop %v3148
    %v3150 = vmul.f32 %v3148, %v3149
    %v3151 = vsub.f32 1.0, %v3150
    %v3152 = vmul.f32 %v3149, %v3151
    %v3153 = vadd.f32 %v3149, %v3152
    %vm3154 = vweird.f32 %v3148
    %vm3155 = vweird.f32 %v3149
    %vm3156 = vmor %vm3154, %vm3155
    %v3157 = vsel %vm3156, %v3149, %v3153
    %v3158 = vand.u32 2147483647, %v3148
    %vm3159 = vcmp.eq.f32.partialorder %v3158, 8.507059e+37
    %v3160 = vand.u32 %v3148, 2147483648
    %v3161 = vor.u32 1.1754944e-38, %v3160
    %v3162 = vsel %vm3159, %v3161, %v3157
    %v3163 = vmul.f32 1.0, %v3162
    %v3164 = vtanh.pop %v3144
    %v3165 = vmul.f32 %v3163, %v3111
    %3167 = vrot.lane.b32.xlu0 %v3164, 32
    %v3168 = vpop.permute.xlu0 %3167
    %v3170 = vmul.f32 %v3163, %v3168
    %3172 = vrot.lane.b32.xlu0 %v3170, 32
    %v3173 = vpop.permute.xlu0 %3172
    %v3175 = vadd.f32 %v3165, %v3173
    %v3176 = vtanh.pop %v3175
    %3178 = vrot.lane.b32.xlu0 %v3176, 32
    %v3179 = vpop.permute.xlu0 %3178
    %v3181 = vmul.f32 %v3163, %v3179
    %v3182 = vld [vmem:[#allocation2 + $0x240] sm:$0xff]
    %3184 = vrot.lane.b32.xlu0 %v3181, 64
    %v3185 = vpop.permute.xlu0 %3184
    %v3186 = vsel %vm880, %v3185, 0
    %3188 = vmatpush.msra.mxu0 0.0
    %3189 = vmatpush.msra.mxu0 0.0
    %3190 = vmatpush.msra.mxu0 0.0
    %3191 = vmatpush.msra.mxu0 0.0
    %3192 = vmatpush.msra.mxu0 0.0
    %3193 = vmatpush.msra.mxu0 0.0
    %3194 = vmatpush.msra.mxu0 0.0
    %3195 = vmatpush.msra.mxu0 0.0
    %3196 = vmatpush.msra.mxu0 0.0
    %3197 = vmatpush.msra.mxu0 0.0
    %3198 = vmatpush.msra.mxu0 0.0
    %3199 = vmatpush.msra.mxu0 0.0
    %3200 = vmatpush.msra.mxu0 %v874
    %3201 = vmatpush.msra.mxu0 %v873
    %3202 = vmatpush.msra.mxu0 %v872
    %3203 = vmatpush.msra.mxu0 %v871
    %3204 = vmatmul.f32.gmra.mxu0 %v3186
    %v3205 = vpop.f32.mrf.mxu0
    %v3206 = vadd.f32 0.0, %v3205
    %3207 = vdwg.mxu0
    %v3208 = vadd.f32 %v3182, %v3206
    %v3209 = vxor.u32 %v3208, 2147483648
    %v3210 = vmul.f32 %v3209, 1.442695
    %v3211 = vpow.pop %v3210
    %v3212 = vadd.f32 %v3211, 1.0
    %v3213 = vrcp.pop %v3212
    %v3214 = vmul.f32 %v3212, %v3213
    %v3215 = vsub.f32 1.0, %v3214
    %v3216 = vmul.f32 %v3213, %v3215
    %v3217 = vadd.f32 %v3213, %v3216
    %vm3218 = vweird.f32 %v3212
    %vm3219 = vweird.f32 %v3213
    %vm3220 = vmor %vm3218, %vm3219
    %v3221 = vsel %vm3220, %v3213, %v3217
    %v3222 = vand.u32 2147483647, %v3212
    %vm3223 = vcmp.eq.f32.partialorder %v3222, 8.507059e+37
    %v3224 = vand.u32 %v3212, 2147483648
    %v3225 = vor.u32 1.1754944e-38, %v3224
    %v3226 = vsel %vm3223, %v3225, %v3221
    %v3227 = vmul.f32 1.0, %v3226
    %v3228 = vtanh.pop %v3208
    %v3229 = vmul.f32 %v3227, %v3175
    %3231 = vrot.lane.b32.xlu0 %v3228, 32
    %v3232 = vpop.permute.xlu0 %3231
    %v3234 = vmul.f32 %v3227, %v3232
    %3236 = vrot.lane.b32.xlu0 %v3234, 32
    %v3237 = vpop.permute.xlu0 %3236
    %v3239 = vadd.f32 %v3229, %v3237
    %v3240 = vtanh.pop %v3239
    %3242 = vrot.lane.b32.xlu0 %v3240, 32
    %v3243 = vpop.permute.xlu0 %3242
    %v3245 = vmul.f32 %v3227, %v3243
    %v3246 = vld [vmem:[#allocation2 + $0x278] sm:$0xff]
    %3247 = vmatpush.msra.mxu0 0.0
    %3248 = vmatpush.msra.mxu0 0.0
    %3249 = vmatpush.msra.mxu0 0.0
    %3250 = vmatpush.msra.mxu0 0.0
    %3251 = vmatpush.msra.mxu0 0.0
    %3252 = vmatpush.msra.mxu0 0.0
    %3253 = vmatpush.msra.mxu0 0.0
    %3254 = vmatpush.msra.mxu0 0.0
    %3255 = vmatpush.msra.mxu0 0.0
    %3256 = vmatpush.msra.mxu0 0.0
    %3257 = vmatpush.msra.mxu0 0.0
    %3258 = vmatpush.msra.mxu0 0.0
    %3259 = vmatpush.msra.mxu0 %v878
    %3260 = vmatpush.msra.mxu0 %v877
    %3261 = vmatpush.msra.mxu0 %v876
    %3262 = vmatpush.msra.mxu0 %v875
    %3263 = vmatmul.f32.gmra.mxu0 %v882
    %v3264 = vpop.f32.mrf.mxu0
    %v3265 = vadd.f32 0.0, %v3264
    %3266 = vdwg.mxu0
    %v3267 = vadd.f32 %v3246, %v3265
    %v3268 = vxor.u32 %v3267, 2147483648
    %v3269 = vmul.f32 %v3268, 1.442695
    %v3270 = vpow.pop %v3269
    %v3271 = vadd.f32 %v3270, 1.0
    %v3272 = vrcp.pop %v3271
    %v3273 = vmul.f32 %v3271, %v3272
    %v3274 = vsub.f32 1.0, %v3273
    %v3275 = vmul.f32 %v3272, %v3274
    %v3276 = vadd.f32 %v3272, %v3275
    %vm3277 = vweird.f32 %v3271
    %vm3278 = vweird.f32 %v3272
    %vm3279 = vmor %vm3277, %vm3278
    %v3280 = vsel %vm3279, %v3272, %v3276
    %v3281 = vand.u32 2147483647, %v3271
    %vm3282 = vcmp.eq.f32.partialorder %v3281, 8.507059e+37
    %v3283 = vand.u32 %v3271, 2147483648
    %v3284 = vor.u32 1.1754944e-38, %v3283
    %v3285 = vsel %vm3282, %v3284, %v3280
    %v3286 = vmul.f32 1.0, %v3285
    %v3287 = vtanh.pop %v3267
    %v3288 = vmul.f32 %v3286, 0.0
    %3290 = vrot.lane.b32.xlu0 %v3287, 32
    %v3291 = vpop.permute.xlu0 %3290
    %v3293 = vmul.f32 %v3286, %v3291
    %3295 = vrot.lane.b32.xlu0 %v3293, 32
    %v3296 = vpop.permute.xlu0 %3295
    %v3298 = vadd.f32 %v3288, %v3296
    %v3299 = vtanh.pop %v3298
    %3301 = vrot.lane.b32.xlu0 %v3299, 32
    %v3302 = vpop.permute.xlu0 %3301
    %v3304 = vmul.f32 %v3286, %v3302
    %v3305 = vld [vmem:[#allocation2 + $0x268] sm:$0xff]
    %3307 = vrot.lane.b32.xlu0 %v3304, 64
    %v3308 = vpop.permute.xlu0 %3307
    %v3309 = vsel %vm880, %v3308, 0
    %3311 = vmatpush.msra.mxu0 0.0
    %3312 = vmatpush.msra.mxu0 0.0
    %3313 = vmatpush.msra.mxu0 0.0
    %3314 = vmatpush.msra.mxu0 0.0
    %3315 = vmatpush.msra.mxu0 0.0
    %3316 = vmatpush.msra.mxu0 0.0
    %3317 = vmatpush.msra.mxu0 0.0
    %3318 = vmatpush.msra.mxu0 0.0
    %3319 = vmatpush.msra.mxu0 0.0
    %3320 = vmatpush.msra.mxu0 0.0
    %3321 = vmatpush.msra.mxu0 0.0
    %3322 = vmatpush.msra.mxu0 0.0
    %3323 = vmatpush.msra.mxu0 %v878
    %3324 = vmatpush.msra.mxu0 %v877
    %3325 = vmatpush.msra.mxu0 %v876
    %3326 = vmatpush.msra.mxu0 %v875
    %3327 = vmatmul.f32.gmra.mxu0 %v3309
    %v3328 = vpop.f32.mrf.mxu0
    %v3329 = vadd.f32 0.0, %v3328
    %3330 = vdwg.mxu0
    %v3331 = vadd.f32 %v3305, %v3329
    %v3332 = vxor.u32 %v3331, 2147483648
    %v3333 = vmul.f32 %v3332, 1.442695
    %v3334 = vpow.pop %v3333
    %v3335 = vadd.f32 %v3334, 1.0
    %v3336 = vrcp.pop %v3335
    %v3337 = vmul.f32 %v3335, %v3336
    %v3338 = vsub.f32 1.0, %v3337
    %v3339 = vmul.f32 %v3336, %v3338
    %v3340 = vadd.f32 %v3336, %v3339
    %vm3341 = vweird.f32 %v3335
    %vm3342 = vweird.f32 %v3336
    %vm3343 = vmor %vm3341, %vm3342
    %v3344 = vsel %vm3343, %v3336, %v3340
    %v3345 = vand.u32 2147483647, %v3335
    %vm3346 = vcmp.eq.f32.partialorder %v3345, 8.507059e+37
    %v3347 = vand.u32 %v3335, 2147483648
    %v3348 = vor.u32 1.1754944e-38, %v3347
    %v3349 = vsel %vm3346, %v3348, %v3344
    %v3350 = vmul.f32 1.0, %v3349
    %v3351 = vtanh.pop %v3331
    %v3352 = vmul.f32 %v3350, %v3298
    %3354 = vrot.lane.b32.xlu0 %v3351, 32
    %v3355 = vpop.permute.xlu0 %3354
    %v3357 = vmul.f32 %v3350, %v3355
    %3359 = vrot.lane.b32.xlu0 %v3357, 32
    %v3360 = vpop.permute.xlu0 %3359
    %v3362 = vadd.f32 %v3352, %v3360
    %v3363 = vtanh.pop %v3362
    %3365 = vrot.lane.b32.xlu0 %v3363, 32
    %v3366 = vpop.permute.xlu0 %3365
    %v3368 = vmul.f32 %v3350, %v3366
    %v3369 = vld [vmem:[#allocation2 + $0x258] sm:$0xff]
    %3371 = vrot.lane.b32.xlu0 %v3368, 64
    %v3372 = vpop.permute.xlu0 %3371
    %v3373 = vsel %vm880, %v3372, 0
    %3375 = vmatpush.msra.mxu0 0.0
    %3376 = vmatpush.msra.mxu0 0.0
    %3377 = vmatpush.msra.mxu0 0.0
    %3378 = vmatpush.msra.mxu0 0.0
    %3379 = vmatpush.msra.mxu0 0.0
    %3380 = vmatpush.msra.mxu0 0.0
    %3381 = vmatpush.msra.mxu0 0.0
    %3382 = vmatpush.msra.mxu0 0.0
    %3383 = vmatpush.msra.mxu0 0.0
    %3384 = vmatpush.msra.mxu0 0.0
    %3385 = vmatpush.msra.mxu0 0.0
    %3386 = vmatpush.msra.mxu0 0.0
    %3387 = vmatpush.msra.mxu0 %v878
    %3388 = vmatpush.msra.mxu0 %v877
    %3389 = vmatpush.msra.mxu0 %v876
    %3390 = vmatpush.msra.mxu0 %v875
    %3391 = vmatmul.f32.gmra.mxu0 %v3373
    %v3392 = vpop.f32.mrf.mxu0
    %v3393 = vadd.f32 0.0, %v3392
    %3394 = vdwg.mxu0
    %v3395 = vadd.f32 %v3369, %v3393
    %v3396 = vxor.u32 %v3395, 2147483648
    %v3397 = vmul.f32 %v3396, 1.442695
    %v3398 = vpow.pop %v3397
    %v3399 = vadd.f32 %v3398, 1.0
    %v3400 = vrcp.pop %v3399
    %v3401 = vmul.f32 %v3399, %v3400
    %v3402 = vsub.f32 1.0, %v3401
    %v3403 = vmul.f32 %v3400, %v3402
    %v3404 = vadd.f32 %v3400, %v3403
    %vm3405 = vweird.f32 %v3399
    %vm3406 = vweird.f32 %v3400
    %vm3407 = vmor %vm3405, %vm3406
    %v3408 = vsel %vm3407, %v3400, %v3404
    %v3409 = vand.u32 2147483647, %v3399
    %vm3410 = vcmp.eq.f32.partialorder %v3409, 8.507059e+37
    %v3411 = vand.u32 %v3399, 2147483648
    %v3412 = vor.u32 1.1754944e-38, %v3411
    %v3413 = vsel %vm3410, %v3412, %v3408
    %v3414 = vmul.f32 1.0, %v3413
    %v3415 = vtanh.pop %v3395
    %v3416 = vmul.f32 %v3414, %v3362
    %3418 = vrot.lane.b32.xlu0 %v3415, 32
    %v3419 = vpop.permute.xlu0 %3418
    %v3421 = vmul.f32 %v3414, %v3419
    %3423 = vrot.lane.b32.xlu0 %v3421, 32
    %v3424 = vpop.permute.xlu0 %3423
    %v3426 = vadd.f32 %v3416, %v3424
    %v3427 = vtanh.pop %v3426
    %3429 = vrot.lane.b32.xlu0 %v3427, 32
    %v3430 = vpop.permute.xlu0 %3429
    %v3432 = vmul.f32 %v3414, %v3430
    %v3433 = vld [vmem:[#allocation2 + $0x248] sm:$0xff]
    %3435 = vrot.lane.b32.xlu0 %v3432, 64
    %v3436 = vpop.permute.xlu0 %3435
    %v3437 = vsel %vm880, %v3436, 0
    %3439 = vmatpush.msra.mxu0 0.0
    %3440 = vmatpush.msra.mxu0 0.0
    %3441 = vmatpush.msra.mxu0 0.0
    %3442 = vmatpush.msra.mxu0 0.0
    %3443 = vmatpush.msra.mxu0 0.0
    %3444 = vmatpush.msra.mxu0 0.0
    %3445 = vmatpush.msra.mxu0 0.0
    %3446 = vmatpush.msra.mxu0 0.0
    %3447 = vmatpush.msra.mxu0 0.0
    %3448 = vmatpush.msra.mxu0 0.0
    %3449 = vmatpush.msra.mxu0 0.0
    %3450 = vmatpush.msra.mxu0 0.0
    %3451 = vmatpush.msra.mxu0 %v878
    %3452 = vmatpush.msra.mxu0 %v877
    %3453 = vmatpush.msra.mxu0 %v876
    %3454 = vmatpush.msra.mxu0 %v875
    %3455 = vmatmul.f32.gmra.mxu0 %v3437
    %v3456 = vpop.f32.mrf.mxu0
    %v3457 = vadd.f32 0.0, %v3456
    %3458 = vdwg.mxu0
    %v3459 = vadd.f32 %v3433, %v3457
    %v3460 = vxor.u32 %v3459, 2147483648
    %v3461 = vmul.f32 %v3460, 1.442695
    %v3462 = vpow.pop %v3461
    %v3463 = vadd.f32 %v3462, 1.0
    %v3464 = vrcp.pop %v3463
    %v3465 = vmul.f32 %v3463, %v3464
    %v3466 = vsub.f32 1.0, %v3465
    %v3467 = vmul.f32 %v3464, %v3466
    %v3468 = vadd.f32 %v3464, %v3467
    %vm3469 = vweird.f32 %v3463
    %vm3470 = vweird.f32 %v3464
    %vm3471 = vmor %vm3469, %vm3470
    %v3472 = vsel %vm3471, %v3464, %v3468
    %v3473 = vand.u32 2147483647, %v3463
    %vm3474 = vcmp.eq.f32.partialorder %v3473, 8.507059e+37
    %v3475 = vand.u32 %v3463, 2147483648
    %v3476 = vor.u32 1.1754944e-38, %v3475
    %v3477 = vsel %vm3474, %v3476, %v3472
    %v3478 = vmul.f32 1.0, %v3477
    %v3479 = vtanh.pop %v3459
    %v3480 = vmul.f32 %v3478, %v3426
    %3482 = vrot.lane.b32.xlu0 %v3479, 32
    %v3483 = vpop.permute.xlu0 %3482
    %v3485 = vmul.f32 %v3478, %v3483
    %3487 = vrot.lane.b32.xlu0 %v3485, 32
    %v3488 = vpop.permute.xlu0 %3487
    %v3490 = vadd.f32 %v3480, %v3488
    %v3491 = vtanh.pop %v3490
    %3493 = vrot.lane.b32.xlu0 %v3491, 32
    %v3494 = vpop.permute.xlu0 %3493
    %v3496 = vmul.f32 %v3478, %v3494
    %3498 = vrot.lane.b32.xlu0 %v3245, 64
    %v3499 = vpop.permute.xlu0 %3498
    %3502 = vrot.lane.b32.xlu0 %v3496, 96
    %v3503 = vpop.permute.xlu0 %3502
    %v3505 = vsel %vm880, %v3499, %v3503
    %v3506 = vld [vmem:[%s7] sm:$0xff]
    %v3507 = vld [vmem:[%s7 + $0x8] sm:$0xff]
    %v3508 = vld [vmem:[%s7 + $0x10] sm:$0xff]
    %v3509 = vld [vmem:[%s7 + $0x18] sm:$0xff]
    %v3510 = vld [vmem:[%s7 + $0x20] sm:$0xff]
    %v3511 = vld [vmem:[%s7 + $0x28] sm:$0xff]
    %v3512 = vld [vmem:[%s7 + $0x30] sm:$0xff]
    %v3513 = vld [vmem:[%s7 + $0x38] sm:$0xff]
    %v3514 = vld [vmem:[%s8] sm:$0x1]
    %v3516 = vperm.slane %v3514, 0
    %vm3518 = vcmask 523264
    %v3520 = vsel %vm3518, %v3505, 0
    %3522 = vmatpush.msra.mxu0 0.0
    %3523 = vmatpush.msra.mxu0 0.0
    %3524 = vmatpush.msra.mxu0 0.0
    %3525 = vmatpush.msra.mxu0 0.0
    %3526 = vmatpush.msra.mxu0 0.0
    %3527 = vmatpush.msra.mxu0 0.0
    %3528 = vmatpush.msra.mxu0 0.0
    %3529 = vmatpush.msra.mxu0 0.0
    %3530 = vmatpush.msra.mxu0 %v3513
    %3531 = vmatpush.msra.mxu0 %v3512
    %3532 = vmatpush.msra.mxu0 %v3511
    %3533 = vmatpush.msra.mxu0 %v3510
    %3534 = vmatpush.msra.mxu0 %v3509
    %3535 = vmatpush.msra.mxu0 %v3508
    %3536 = vmatpush.msra.mxu0 %v3507
    %3537 = vmatpush.msra.mxu0 %v3506
    %3538 = vmatmul.f32.gmra.mxu0 %v3520
    %v3539 = vpop.f32.mrf.mxu0
    %v3540 = vadd.f32 %v3516, %v3539
    %3541 = vdwg.mxu0
    %v3542 = vand.u32 2147483647, %v3540
    %vm3543 = vcmp.le.f32.partialorder %v3542, 0.7853982
    %vm3544 = vcmp.lt.s32.totalorder %v3540, 0
    %v3545 = vand.u32 %v3540, 2139095040
    %v3546 = vshrl.u32 %v3545, 23
    %v3547 = vsub.s32 %v3546, 127
    %v3548 = vand.u32 2147483647, %v3540
    %v3549 = vand.u32 %v3548, 8388607
    %v3550 = vor.u32 %v3549, 8388608
    %v3551 = vsub.s32 0, %v3550
    %v3552 = vadd.s32 %v3547, 1
    %vm3553 = vcmp.gt.s32.totalorder %v3552, 0
    %v3554 = vsel %vm3553, %v3552, 0
    %v3555 = vshrl.u32 %v3554, 5
    %v3556 = vand.u32 %v3554, 31
    %v3557 = vsub.s32 32, %v3556
    %v3558 = vshrl.u32 683565275, %v3557
    %v3559 = vshll.u32 683565275, %v3556
    %v3560 = vshrl.u32 2475754826, %v3557
    %v3561 = vor.u32 %v3559, %v3560
    %v3562 = vshll.u32 2475754826, %v3556
    %v3563 = vshrl.u32 2131351028, %v3557
    %v3564 = vor.u32 %v3562, %v3563
    %v3565 = vshll.u32 2131351028, %v3556
    %v3566 = vshrl.u32 2102212464, %v3557
    %v3567 = vor.u32 %v3565, %v3566
    %v3568 = vshll.u32 2102212464, %v3556
    %v3569 = vshrl.u32 920167782, %v3557
    %v3570 = vor.u32 %v3568, %v3569
    %v3571 = vshll.u32 920167782, %v3556
    %v3572 = vshrl.u32 1326507024, %v3557
    %v3573 = vor.u32 %v3571, %v3572
    %vm3574 = vcmp.lt.s32.totalorder %v3555, 1
    %vm3575 = vcmp.lt.s32.totalorder %v3555, 2
    %vm3576 = vcmp.lt.s32.totalorder %v3555, 3
    %vm3577 = vcmp.lt.s32.totalorder %v3555, 4
    %v3578 = vsel %vm3574, %v3558, %v3561
    %v3579 = vsel %vm3577, %v3567, 2102212464
    %v3580 = vsel %vm3576, %v3564, %v3579
    %v3581 = vsel %vm3575, %v3578, %v3580
    %v3582 = vsel %vm3574, %v3561, %v3564
    %v3583 = vsel %vm3577, %v3570, 920167782
    %v3584 = vsel %vm3576, %v3567, %v3583
    %v3585 = vsel %vm3575, %v3582, %v3584
    %v3586 = vsel %vm3574, %v3564, %v3567
    %v3587 = vsel %vm3577, %v3573, 1326507024
    %v3588 = vsel %vm3576, %v3570, %v3587
    %v3589 = vsel %vm3575, %v3586, %v3588
    %v3590 = vshll.u32 %v3550, 8
    %v3591 = vand.u32 %v3590, 65535
    %v3592 = vshrl.u32 %v3590, 16
    %v3593 = vand.u32 %v3589, 65535
    %v3594 = vshrl.u32 %v3589, 16
    %v3595 = vmul.u32 %v3591, %v3593
    %v3596 = vmul.u32 %v3591, %v3594
    %v3597 = vmul.u32 %v3592, %v3593
    %v3598 = vmul.u32 %v3592, %v3594
    %v3599 = vshll.u32 %v3596, 16
    %v3600 = vshrl.u32 %v3596, 16
    %v3601 = vshll.u32 %v3597, 16
    %v3602 = vshrl.u32 %v3597, 16
    %vm3603 = vc.u32 %v3595, %v3599
    %v3604 = vsel %vm3603, 1, 0
    %v3605 = vadd.s32 %v3595, %v3599
    %v3606 = vadd.s32 %v3598, %v3604
    %vm3607 = vc.u32 %v3605, %v3601
    %v3608 = vsel %vm3607, 1, 0
    %v3609 = vadd.s32 %v3605, %v3601
    %v3610 = vadd.s32 %v3606, %v3608
    %v3611 = vadd.s32 %v3610, %v3600
    %v3612 = vadd.s32 %v3611, %v3602
    %v3613 = vand.u32 %v3590, 65535
    %v3614 = vshrl.u32 %v3590, 16
    %v3615 = vand.u32 %v3585, 65535
    %v3616 = vshrl.u32 %v3585, 16
    %v3617 = vmul.u32 %v3613, %v3615
    %v3618 = vmul.u32 %v3613, %v3616
    %v3619 = vmul.u32 %v3614, %v3615
    %v3620 = vmul.u32 %v3614, %v3616
    %v3621 = vshll.u32 %v3618, 16
    %v3622 = vshrl.u32 %v3618, 16
    %v3623 = vshll.u32 %v3619, 16
    %v3624 = vshrl.u32 %v3619, 16
    %vm3625 = vc.u32 %v3617, %v3621
    %v3626 = vsel %vm3625, 1, 0
    %v3627 = vadd.s32 %v3617, %v3621
    %v3628 = vadd.s32 %v3620, %v3626
    %vm3629 = vc.u32 %v3627, %v3623
    %v3630 = vsel %vm3629, 1, 0
    %v3631 = vadd.s32 %v3627, %v3623
    %v3632 = vadd.s32 %v3628, %v3630
    %v3633 = vadd.s32 %v3632, %v3622
    %v3634 = vadd.s32 %v3633, %v3624
    %v3635 = vmul.u32 %v3590, %v3581
    %v3636 = vadd.s32 %v3612, %v3631
    %vm3637 = vc.u32 %v3612, %v3631
    %v3638 = vadd.s32 %v3634, 1
    %v3639 = vsel %vm3637, %v3638, %v3634
    %v3640 = vadd.s32 %v3635, %v3639
    %v3641 = vadd.s32 %v3640, 536870912
    %v3642 = vshrl.u32 %v3641, 30
    %v3643 = vshll.u32 %v3642, 30
    %v3644 = vsub.s32 %v3640, %v3643
    %vm3645 = vcmp.lt.s32.totalorder %v3644, 0
    %v3646 = vsub.s32 0, %v3644
    %v3647 = vsel %vm3645, %v3646, %v3644
    %v3648 = vclz %v3647
    %v3649 = vsub.s32 %v3648, 2
    %vm3650 = vcmp.gt.s32.totalorder 0, %v3649
    %v3651 = vsel %vm3650, 0, %v3649
    %v3652 = vsub.s32 32, %v3651
    %v3653 = vshll.u32 %v3644, %v3651
    %v3654 = vshrl.u32 %v3636, %v3652
    %v3655 = vor.u32 %v3653, %v3654
    %v3656 = vsub.s32 4294967266, %v3651
    %v3657 = vadd.s32 %v3656, 127
    %v3658 = vshll.u32 %v3657, 23
    %v3659 = vor.u32 4788187, %v3658
    %v3660 = vand.u32 2147483647, %v3659
    %v3662 = vcvt.s32.f32 %v3655
    %v3663 = vmul.f32 %v3662, %v3660
    %v3664 = vxor.u32 %v3663, 2147483648
    %v3665 = vsel %vm3544, %v3664, %v3663
    %v3666 = vsub.s32 4, %v3642
    %v3667 = vsel %vm3544, %v3666, %v3642
    %v3668 = vsel %vm3543, %v3540, %v3665
    %v3669 = vsel %vm3543, 0, %v3667
    %v3670 = vmul.f32 %v3668, %v3668
    %v3671 = vmul.f32 %v3670, -0.001358992
    %v3672 = vadd.f32 %v3671, 0.041655596
    %v3673 = vmul.f32 %v3670, %v3672
    %v3674 = vadd.f32 %v3673, -0.4999988
    %v3675 = vmul.f32 %v3670, %v3674
    %v3676 = vadd.f32 1.0, %v3675
    %v3677 = vmul.f32 %v3668, %v3668
    %v3678 = vmul.f32 %v3677, -0.00019511016
    %v3679 = vadd.f32 %v3678, 0.008332121
    %v3680 = vmul.f32 %v3677, %v3679
    %v3681 = vadd.f32 %v3680, -0.16666654
    %v3682 = vmul.f32 %v3677, %v3681
    %v3683 = vadd.f32 %v3682, 1.0
    %v3684 = vmul.f32 %v3683, %v3668
    %vm3685 = vweird.f32 %v3540
    %v3686 = vand.u32 %v3669, 3
    %vm3687 = vcmp.lt.s32.totalorder %v3686, 2
    %vm3688 = vcmp.eq.s32.totalorder %v3686, 0
    %v3689 = vxor.u32 %v3684, 2147483648
    %v3690 = vsel %vm3688, %v3676, %v3689
    %vm3691 = vcmp.eq.s32.totalorder %v3686, 2
    %v3692 = vxor.u32 %v3676, 2147483648
    %v3693 = vsel %vm3691, %v3692, %v3684
    %v3694 = vsel %vm3687, %v3690, %v3693
    %v3695 = vsel %vm3685, nan, %v3694
    %v3696 = vand.u32 2147483647, %v3540
    %vm3697 = vcmp.le.f32.partialorder %v3696, 0.7853982
    %vm3698 = vcmp.lt.s32.totalorder %v3540, 0
    %v3699 = vand.u32 %v3540, 2139095040
    %v3700 = vshrl.u32 %v3699, 23
    %v3701 = vsub.s32 %v3700, 127
    %v3702 = vand.u32 2147483647, %v3540
    %v3703 = vand.u32 %v3702, 8388607
    %v3704 = vor.u32 %v3703, 8388608
    %v3705 = vsub.s32 0, %v3704
    %v3706 = vadd.s32 %v3701, 1
    %vm3707 = vcmp.gt.s32.totalorder %v3706, 0
    %v3708 = vsel %vm3707, %v3706, 0
    %v3709 = vshrl.u32 %v3708, 5
    %v3710 = vand.u32 %v3708, 31
    %v3711 = vsub.s32 32, %v3710
    %v3712 = vshrl.u32 683565275, %v3711
    %v3713 = vshll.u32 683565275, %v3710
    %v3714 = vshrl.u32 2475754826, %v3711
    %v3715 = vor.u32 %v3713, %v3714
    %v3716 = vshll.u32 2475754826, %v3710
    %v3717 = vshrl.u32 2131351028, %v3711
    %v3718 = vor.u32 %v3716, %v3717
    %v3719 = vshll.u32 2131351028, %v3710
    %v3720 = vshrl.u32 2102212464, %v3711
    %v3721 = vor.u32 %v3719, %v3720
    %v3722 = vshll.u32 2102212464, %v3710
    %v3723 = vshrl.u32 920167782, %v3711
    %v3724 = vor.u32 %v3722, %v3723
    %v3725 = vshll.u32 920167782, %v3710
    %v3726 = vshrl.u32 1326507024, %v3711
    %v3727 = vor.u32 %v3725, %v3726
    %vm3728 = vcmp.lt.s32.totalorder %v3709, 1
    %vm3729 = vcmp.lt.s32.totalorder %v3709, 2
    %vm3730 = vcmp.lt.s32.totalorder %v3709, 3
    %vm3731 = vcmp.lt.s32.totalorder %v3709, 4
    %v3732 = vsel %vm3728, %v3712, %v3715
    %v3733 = vsel %vm3731, %v3721, 2102212464
    %v3734 = vsel %vm3730, %v3718, %v3733
    %v3735 = vsel %vm3729, %v3732, %v3734
    %v3736 = vsel %vm3728, %v3715, %v3718
    %v3737 = vsel %vm3731, %v3724, 920167782
    %v3738 = vsel %vm3730, %v3721, %v3737
    %v3739 = vsel %vm3729, %v3736, %v3738
    %v3740 = vsel %vm3728, %v3718, %v3721
    %v3741 = vsel %vm3731, %v3727, 1326507024
    %v3742 = vsel %vm3730, %v3724, %v3741
    %v3743 = vsel %vm3729, %v3740, %v3742
    %v3744 = vshll.u32 %v3704, 8
    %v3745 = vand.u32 %v3744, 65535
    %v3746 = vshrl.u32 %v3744, 16
    %v3747 = vand.u32 %v3743, 65535
    %v3748 = vshrl.u32 %v3743, 16
    %v3749 = vmul.u32 %v3745, %v3747
    %v3750 = vmul.u32 %v3745, %v3748
    %v3751 = vmul.u32 %v3746, %v3747
    %v3752 = vmul.u32 %v3746, %v3748
    %v3753 = vshll.u32 %v3750, 16
    %v3754 = vshrl.u32 %v3750, 16
    %v3755 = vshll.u32 %v3751, 16
    %v3756 = vshrl.u32 %v3751, 16
    %vm3757 = vc.u32 %v3749, %v3753
    %v3758 = vsel %vm3757, 1, 0
    %v3759 = vadd.s32 %v3749, %v3753
    %v3760 = vadd.s32 %v3752, %v3758
    %vm3761 = vc.u32 %v3759, %v3755
    %v3762 = vsel %vm3761, 1, 0
    %v3763 = vadd.s32 %v3759, %v3755
    %v3764 = vadd.s32 %v3760, %v3762
    %v3765 = vadd.s32 %v3764, %v3754
    %v3766 = vadd.s32 %v3765, %v3756
    %v3767 = vand.u32 %v3744, 65535
    %v3768 = vshrl.u32 %v3744, 16
    %v3769 = vand.u32 %v3739, 65535
    %v3770 = vshrl.u32 %v3739, 16
    %v3771 = vmul.u32 %v3767, %v3769
    %v3772 = vmul.u32 %v3767, %v3770
    %v3773 = vmul.u32 %v3768, %v3769
    %v3774 = vmul.u32 %v3768, %v3770
    %v3775 = vshll.u32 %v3772, 16
    %v3776 = vshrl.u32 %v3772, 16
    %v3777 = vshll.u32 %v3773, 16
    %v3778 = vshrl.u32 %v3773, 16
    %vm3779 = vc.u32 %v3771, %v3775
    %v3780 = vsel %vm3779, 1, 0
    %v3781 = vadd.s32 %v3771, %v3775
    %v3782 = vadd.s32 %v3774, %v3780
    %vm3783 = vc.u32 %v3781, %v3777
    %v3784 = vsel %vm3783, 1, 0
    %v3785 = vadd.s32 %v3781, %v3777
    %v3786 = vadd.s32 %v3782, %v3784
    %v3787 = vadd.s32 %v3786, %v3776
    %v3788 = vadd.s32 %v3787, %v3778
    %v3789 = vmul.u32 %v3744, %v3735
    %v3790 = vadd.s32 %v3766, %v3785
    %vm3791 = vc.u32 %v3766, %v3785
    %v3792 = vadd.s32 %v3788, 1
    %v3793 = vsel %vm3791, %v3792, %v3788
    %v3794 = vadd.s32 %v3789, %v3793
    %v3795 = vadd.s32 %v3794, 536870912
    %v3796 = vshrl.u32 %v3795, 30
    %v3797 = vshll.u32 %v3796, 30
    %v3798 = vsub.s32 %v3794, %v3797
    %vm3799 = vcmp.lt.s32.totalorder %v3798, 0
    %v3800 = vsub.s32 0, %v3798
    %v3801 = vsel %vm3799, %v3800, %v3798
    %v3802 = vclz %v3801
    %v3803 = vsub.s32 %v3802, 2
    %vm3804 = vcmp.gt.s32.totalorder 0, %v3803
    %v3805 = vsel %vm3804, 0, %v3803
    %v3806 = vsub.s32 32, %v3805
    %v3807 = vshll.u32 %v3798, %v3805
    %v3808 = vshrl.u32 %v3790, %v3806
    %v3809 = vor.u32 %v3807, %v3808
    %v3810 = vsub.s32 4294967266, %v3805
    %v3811 = vadd.s32 %v3810, 127
    %v3812 = vshll.u32 %v3811, 23
    %v3813 = vor.u32 4788187, %v3812
    %v3814 = vand.u32 2147483647, %v3813
    %v3816 = vcvt.s32.f32 %v3809
    %v3817 = vmul.f32 %v3816, %v3814
    %v3818 = vxor.u32 %v3817, 2147483648
    %v3819 = vsel %vm3698, %v3818, %v3817
    %v3820 = vsub.s32 4, %v3796
    %v3821 = vsel %vm3698, %v3820, %v3796
    %v3822 = vsel %vm3697, %v3540, %v3819
    %v3823 = vsel %vm3697, 0, %v3821
    %v3824 = vmul.f32 %v3822, %v3822
    %v3825 = vmul.f32 %v3824, -0.001358992
    %v3826 = vadd.f32 %v3825, 0.041655596
    %v3827 = vmul.f32 %v3824, %v3826
    %v3828 = vadd.f32 %v3827, -0.4999988
    %v3829 = vmul.f32 %v3824, %v3828
    %v3830 = vadd.f32 1.0, %v3829
    %v3831 = vmul.f32 %v3822, %v3822
    %v3832 = vmul.f32 %v3831, -0.00019511016
    %v3833 = vadd.f32 %v3832, 0.008332121
    %v3834 = vmul.f32 %v3831, %v3833
    %v3835 = vadd.f32 %v3834, -0.16666654
    %v3836 = vmul.f32 %v3831, %v3835
    %v3837 = vadd.f32 %v3836, 1.0
    %v3838 = vmul.f32 %v3837, %v3822
    %vm3839 = vweird.f32 %v3540
    %v3840 = vadd.s32 %v3823, 3
    %v3841 = vand.u32 %v3840, 3
    %vm3842 = vcmp.lt.s32.totalorder %v3841, 2
    %vm3843 = vcmp.eq.s32.totalorder %v3841, 0
    %v3844 = vxor.u32 %v3838, 2147483648
    %v3845 = vsel %vm3843, %v3830, %v3844
    %vm3846 = vcmp.eq.s32.totalorder %v3841, 2
    %v3847 = vxor.u32 %v3830, 2147483648
    %v3848 = vsel %vm3846, %v3847, %v3838
    %v3849 = vsel %vm3842, %v3845, %v3848
    %v3850 = vsel %vm3839, nan, %v3849
    %3852 = vrot.lane.b32.xlu0 %v3540, 127
    %v3853 = vpop.permute.xlu0 %3852
    %3855 = vrot.lane.b32.xlu0 %v3540, 11
    %v3856 = vpop.permute.xlu0 %3855
    %vm3858 = vcmask 89088
    %v3859 = vsel %vm3858, %v3853, %v3856
    %3860 = vrot.lane.b32.xlu0 %v3540, 117
    %v3861 = vpop.permute.xlu0 %3860
    %3863 = vrot.lane.b32.xlu0 %v3540, 1
    %v3864 = vpop.permute.xlu0 %3863
    %vm3866 = vcmask 7168
    %v3867 = vsel %vm3866, %v3861, %v3864
    %3868 = vset.pattern.permute.xlu0 13
    %3869 = vperm.xlu0 %3868, %v3540
    %v3870 = vpop.permute.xlu0 %3869
    %v3872 = vsub.f32 %v3540, %v3870
    %3874 = vset.pattern.permute.xlu0 12
    %3875 = vperm.xlu0 %3874, %v3695
    %v3876 = vpop.permute.xlu0 %3875
    %v3878 = vmul.f32 %v3876, %v3872
    %v3879 = vadd.f32 %v3540, %v3878
    %3880 = vset.pattern.permute.xlu0 14
    %3881 = vperm.xlu0 %3880, %v3540
    %v3882 = vpop.permute.xlu0 %3881
    %v3884 = vsub.f32 %v3859, %v3882
    %3886 = vset.pattern.permute.xlu0 12
    %3887 = vperm.xlu0 %3886, %v3850
    %v3888 = vpop.permute.xlu0 %3887
    %v3890 = vmul.f32 %v3888, %v3884
    %v3891 = vsub.f32 %v3879, %v3890
    %v3892 = vsub.f32 %v3867, %v3870
    %v3893 = vmul.f32 %v3888, %v3892
    %v3894 = vadd.f32 %v3540, %v3893
    %v3895 = vsub.f32 %v3540, %v3882
    %v3896 = vmul.f32 %v3876, %v3895
    %v3897 = vadd.f32 %v3894, %v3896
    %v3898 = vlaneseq
    %v3899 = vand.u32 %v3898, 127
    %vm3900 = vcmp.lt.s32.totalorder %v3899, 0
    %v3901 = vsub.s32 0, %v3899
    %v3902 = vsel %vm3900, %v3901, %v3899
    %v3903 = vand.u32 %v3902, 65535
    %v3904 = vshrl.u32 %v3902, 16
    %v3906 = vmul.u32 %v3903, 43691
    %v3907 = vmul.u32 %v3903, 43690
    %v3908 = vmul.u32 %v3904, 43691
    %v3909 = vmul.u32 %v3904, 43690
    %v3910 = vshll.u32 %v3907, 16
    %v3911 = vshrl.u32 %v3907, 16
    %v3912 = vshll.u32 %v3908, 16
    %v3913 = vshrl.u32 %v3908, 16
    %vm3914 = vc.u32 %v3906, %v3910
    %v3915 = vsel %vm3914, 1, 0
    %v3916 = vadd.s32 %v3906, %v3910
    %v3917 = vadd.s32 %v3909, %v3915
    %vm3918 = vc.u32 %v3916, %v3912
    %v3919 = vsel %vm3918, 1, 0
    %v3920 = vadd.s32 %v3916, %v3912
    %v3921 = vadd.s32 %v3917, %v3919
    %v3922 = vadd.s32 %v3921, %v3911
    %v3923 = vadd.s32 %v3922, %v3913
    %v3924 = vshrl.u32 %v3923, 1
    %v3925 = vmul.u32 %v3924, 3
    %v3926 = vsub.s32 %v3902, %v3925
    %v3927 = vsub.s32 0, %v3926
    %v3928 = vsel %vm3900, %v3927, %v3926
    %vm3929 = vcmp.ne.s32.totalorder %v3928, 0
    %vm3930 = vcmp.lt.s32.totalorder %v3928, 0
    %vm3931 = vmand %vm3930, %vm3929
    %v3932 = vadd.s32 %v3928, 3
    %v3933 = vsel %vm3931, %v3932, %v3928
    %vm3934 = vcmp.eq.s32.totalorder %v3933, 0
    %vm3935 = vcmp.eq.s32.totalorder %v3933, 1
    %v3936 = vsel %vm3935, %v3897, %v3540
    %v3937 = vsel %vm3934, %v3891, %v3936
    %3938 = vst.msk [vmem:[#allocation3] sm:$0xff] %vm79, %v3937
    // Predicated region
    $region38: #{tpu_custom_call.1} parent=1 // pred_check
      _
    $region39: #{tpu_custom_call.1} parent=1 // pred_check_branch
      %3940 = sbr.rel (0) target = $region41
    $region40: #{tpu_custom_call.1} parent=1 // pred_region
      %3942 = vsyncadd [#allocation4], 0
      %s3944 = sshll.u32 [#allocation3], 4
      %s3945 = int_to_ptr.vmem [resolvable:$true] %s3944
      %s3946 = sshll.u32 %s9, 4
      %s3947 = int_to_ptr.hbm [resolvable:$true] %s3946
      %3949 = dma.vmem_to_hbm [thread:$0]  %s3945, 128, %s3947, [#allocation4]
    $region41: #{tpu_custom_call.1} parent=1 // pred_fallthru
      _
    // Predicated region
    $region42: #{tpu_custom_call.1} parent=1 // pred_check
      _
    $region43: #{tpu_custom_call.1} parent=1 // pred_check_branch
      %3951 = sbr.rel (0) target = $region45
    $region44: #{tpu_custom_call.1} parent=1 // pred_region
      %3953 = dma.done [#allocation4], 128
    $region45: #{tpu_custom_call.1} parent=1 // pred_fallthru
      _
    %3954 = vsyncpa [#allocation4], 1

</llo_original>
